<compile_context>
chip_gen: v7x
topology: tpu7x:2x2x1
jax: 0.10.0
libtpu: 0.0.40
codegen_flags: <defaults>
</compile_context>

<pallas_src>
import math
import functools

import jax
import jax.numpy as jnp
from jax.experimental import pallas as pl
from jax.experimental.pallas import tpu as pltpu


def _mha_sublayer_kernel(x_ref, gamma_ref, beta_ref,
                         wq_ref, bq_ref, wk_ref, bk_ref, wv_ref, bv_ref,
                         wo_ref, bo_ref,
                         out_ref,
                         k_cache, v_cache,
                         *, n_heads: int, eps: float, tq: int):
    qi = pl.program_id(1)
    S = x_ref.shape[1]
    D = x_ref.shape[2]
    dh = D // n_heads
    scale = 1.0 / math.sqrt(dh)

    def layer_norm(v):  # f32 in / f32 out (torch.nn.LayerNorm, eps=1e-5)
        mu = jnp.mean(v, axis=-1, keepdims=True)
        var = jnp.mean((v - mu) ** 2, axis=-1, keepdims=True)
        return (v - mu) * jax.lax.rsqrt(var + eps) * gamma_ref[...] + beta_ref[...]

    # ---- fill per-head K/V caches once per batch element (first query tile) ----
    @pl.when(qi == 0)
    def _():
        xn_all = layer_norm(x_ref[0].astype(jnp.float32)).astype(jnp.bfloat16)   # (S, D)

        def fill(h, carry):
            k_cache[h] = (jnp.dot(xn_all, wk_ref[h], preferred_element_type=jnp.float32)
                          + bk_ref[h]).astype(jnp.bfloat16)
            v_cache[h] = (jnp.dot(xn_all, wv_ref[h], preferred_element_type=jnp.float32)
                          + bv_ref[h]).astype(jnp.bfloat16)
            return carry

        jax.lax.fori_loop(0, n_heads, fill, 0, unroll=True)

    # ---- this step's query tile ----
    row0 = pl.multiple_of(qi * tq, tq)
    x_q = x_ref[0, pl.ds(row0, tq), :].astype(jnp.float32)        # (tq, D), also the residual
    xn_q = layer_norm(x_q).astype(jnp.bfloat16)

    # Causal decoder mask for this tile, generated in-kernel (VPU work, zero HBM traffic).
    q_pos = row0 + jax.lax.broadcasted_iota(jnp.int32, (tq, S), 0)
    k_pos = jax.lax.broadcasted_iota(jnp.int32, (tq, S), 1)
    mask_add = jnp.where(k_pos <= q_pos, 0.0, -1e9).astype(jnp.float32)   # (tq, S)

    def head_body(h, o_acc):
        q_h = (jnp.dot(xn_q, wq_ref[h], preferred_element_type=jnp.float32)
               + bq_ref[h]).astype(jnp.bfloat16)                          # (tq, dh)
        # q @ k^T without materializing a transpose (NT dot, flash-attention style).
        s = jax.lax.dot_general(q_h, k_cache[h],
                                dimension_numbers=(((1,), (1,)), ((), ())),
                                preferred_element_type=jnp.float32)       # (tq, S)
        s = s * scale + mask_add
        m = jnp.max(s, axis=-1, keepdims=True)
        e = jnp.exp(s - m)
        p = e * pl.reciprocal(jnp.sum(e, axis=-1, keepdims=True), approx=True)
        a = jnp.dot(p.astype(jnp.bfloat16), v_cache[h],
                    preferred_element_type=jnp.float32)                   # (tq, dh)
        # Fold the output projection per head straight into the f32 accumulator.
        return o_acc + jnp.dot(a.astype(jnp.bfloat16), wo_ref[h],
                               preferred_element_type=jnp.float32)        # (tq, D)

    o = jax.lax.fori_loop(0, n_heads, head_body,
                          jnp.zeros((tq, D), jnp.float32), unroll=True)
    o = o + bo_ref[...]

    # TODO(synk): dropout omitted (eval/inference semantics -> identity).
    out_ref[0] = (o + x_q).astype(out_ref.dtype)   # pre-LN residual (un-normalized input)


def decoder_self_attention_sublayer(x, params, *, n_heads: int, eps: float = 1e-5,
                                    tq: int | None = None):
    """Pre-LN causal multi-head self-attention sub-layer with residual (eval mode).

    x: (B, S, D) float32. params = (gamma, beta, wq, bq, wk, bk, wv, bv, wo, bo),
    weights laid out (in_features, out_features), biases (1, D).
    """
    B, S, D = x.shape
    assert D % n_heads == 0, "d_model must be divisible by n_heads"
    dh = D // n_heads
    if tq is None:
        tq = min(S, 128)
    assert S % tq == 0 and tq % 8 == 0, "query tile must divide S and be a multiple of 8"

    gamma, beta, wq, bq, wk, bk, wv, bv, wo, bo = params

    # Host-side (free) re-layouts: split projection weights per head along a LEADING dim
    # and cast to bf16, so the kernel never lane-slices the feature axis and the MXU sees
    # bf16 operands (halves weight HBM traffic / VMEM residency too).
    def split_in(w):                 # (D, D) -> (H, D, dh)
        return jnp.transpose(w.reshape(D, n_heads, dh), (1, 0, 2)).astype(jnp.bfloat16)

    def split_bias(b):               # (1, D) -> (H, 1, dh), stays f32
        return b.reshape(n_heads, 1, dh).astype(jnp.float32)

    wq_h, wk_h, wv_h = split_in(wq), split_in(wk), split_in(wv)
    bq_h, bk_h, bv_h = split_bias(bq), split_bias(bk), split_bias(bv)
    wo_h = wo.reshape(n_heads, dh, D).astype(jnp.bfloat16)       # (H, dh, D)

    grid = (B, S // tq)
    const2 = lambda shape: pl.BlockSpec(shape, lambda b, q: (0, 0))
    const3 = lambda shape: pl.BlockSpec(shape, lambda b, q: (0, 0, 0))
    # NOTE: weights/biases/gamma/beta are grid-invariant; on JAX versions where the main
    # pipeline honors pipeline_mode=pl.Buffered(1) they could be single-buffered to halve
    # constant VMEM residency (important on v7x's 64 MiB VMEM at large D).

    kernel = functools.partial(_mha_sublayer_kernel, n_heads=n_heads, eps=eps, tq=tq)

    flops = B * (8 * S * D * D + 4 * S * S * D)            # QKVO projections + QK^T + PV
    cost = pl.CostEstimate(flops=flops,
                           transcendentals=B * n_heads * S * S,
                           bytes_accessed=2 * B * S * D * 4 + 4 * D * D * 2)

    return pl.pallas_call(
        kernel,
        out_shape=jax.ShapeDtypeStruct((B, S, D), x.dtype),
        grid_spec=pltpu.PrefetchScalarGridSpec(
            num_scalar_prefetch=0,
            grid=grid,
            in_specs=[
                pl.BlockSpec((1, S, D), lambda b, q: (b, 0, 0)),        # x (full sequence)
                const2((1, D)), const2((1, D)),                         # gamma, beta
                const3((n_heads, D, dh)), const3((n_heads, 1, dh)),     # Wq, bq (head-split)
                const3((n_heads, D, dh)), const3((n_heads, 1, dh)),     # Wk, bk
                const3((n_heads, D, dh)), const3((n_heads, 1, dh)),     # Wv, bv
                const3((n_heads, dh, D)), const2((1, D)),               # Wo (head-split), bo
            ],
            out_specs=pl.BlockSpec((1, tq, D), lambda b, q: (b, q, 0)),
            scratch_shapes=[
                pltpu.VMEM((n_heads, S, dh), jnp.bfloat16),   # K cache (persists across qi)
                pltpu.VMEM((n_heads, S, dh), jnp.bfloat16),   # V cache
            ],
        ),
        compiler_params=pltpu.CompilerParams(
            # batch axis parallel (megacore); query-tile axis reuses the K/V scratch caches,
            # so it must stay "arbitrary".
            dimension_semantics=("parallel", "arbitrary"),
        ),
        cost_estimate=cost,
    )(x, gamma, beta, wq_h, bq_h, wk_h, bk_h, wv_h, bv_h, wo_h, bo)


def _reference(x, params, n_heads, eps=1e-5, mixed_precision=False):
    """Pure-JAX reference. mixed_precision=True mirrors the kernel's bf16 matmul operands
    (f32 accumulation) so it can be compared against with a tight tolerance."""
    gamma, beta, wq, bq, wk, bk, wv, bv, wo, bo = params
    B, S, D = x.shape
    dh = D // n_heads
    cast = (lambda a: a.astype(jnp.bfloat16)) if mixed_precision else (lambda a: a)

    mu = jnp.mean(x, axis=-1, keepdims=True)
    var = jnp.mean((x - mu) ** 2, axis=-1, keepdims=True)
    xn = (x - mu) / jnp.sqrt(var + eps) * gamma[0] + beta[0]

    def proj(z, w, b):
        return jnp.matmul(cast(z), cast(w), preferred_element_type=jnp.float32) + b[0]

    q = proj(xn, wq, bq)
    k = proj(xn, wk, bk)
    v = proj(xn, wv, bv)
    q = q.reshape(B, S, n_heads, dh).transpose(0, 2, 1, 3)
    k = k.reshape(B, S, n_heads, dh).transpose(0, 2, 1, 3)
    v = v.reshape(B, S, n_heads, dh).transpose(0, 2, 1, 3)

    s = jnp.einsum('bhqd,bhkd->bhqk', cast(q), cast(k),
                   preferred_element_type=jnp.float32) / math.sqrt(dh)
    causal = jnp.tril(jnp.ones((S, S), bool))
    s = s + jnp.where(causal, 0.0, -1e9)[None, None]
    p = jax.nn.softmax(s, axis=-1)
    a = jnp.einsum('bhqk,bhkd->bhqd', cast(p), cast(v),
                   preferred_element_type=jnp.float32)
    a = a.transpose(0, 2, 1, 3).reshape(B, S, D)
    return jnp.matmul(cast(a), cast(wo), preferred_element_type=jnp.float32) + bo[0] + x


if __name__ == "__main__":
    B, S, D, H = 2, 16, 128, 4      # batch=2, seq=16, d_model=128 (lane-dense), 4 heads
    TQ = 8                          # 2 query tiles per batch element -> exercises tiling

    key = jax.random.PRNGKey(0)
    ks = jax.random.split(key, 10)
    wscale = 1.0 / math.sqrt(D)

    x = jax.random.normal(ks[0], (B, S, D), dtype=jnp.float32)

    gamma = 1.0 + 0.1 * jax.random.normal(ks[1], (1, D), jnp.float32)
    beta = 0.1 * jax.random.normal(ks[2], (1, D), jnp.float32)
    wq = jax.random.normal(ks[3], (D, D), jnp.float32) * wscale
    wk = jax.random.normal(ks[4], (D, D), jnp.float32) * wscale
    wv = jax.random.normal(ks[5], (D, D), jnp.float32) * wscale
    wo = jax.random.normal(ks[6], (D, D), jnp.float32) * wscale
    bq = 0.02 * jax.random.normal(ks[7], (1, D), jnp.float32)
    bk = jnp.zeros((1, D), jnp.float32)
    bv = 0.02 * jax.random.normal(ks[8], (1, D), jnp.float32)
    bo = 0.02 * jax.random.normal(ks[9], (1, D), jnp.float32)
    params = (gamma, beta, wq, bq, wk, bk, wv, bv, wo, bo)

    out = decoder_self_attention_sublayer(x, params, n_heads=H, tq=TQ)
    out = jax.block_until_ready(out)
    assert out.shape == (B, S, D)

    # Tight check against a reference with identical bf16 cast points...
    ref_mixed = _reference(x, params, H, mixed_precision=True)
    assert jnp.allclose(out, ref_mixed, atol=2e-2, rtol=2e-2), "mismatch vs mixed-precision reference"
    # ...and a sanity check against the pure-f32 (PyTorch-fidelity) reference with bf16 slack.
    ref_f32 = _reference(x, params, H, mixed_precision=False)
    assert jnp.allclose(out, ref_f32, atol=2e-1, rtol=2e-1), "mismatch vs f32 reference"

    print("KERNEL_OK")
</pallas_src>

<mosaic_0001>
module attributes {stable_mosaic.version = 11 : i64} {
  func.func @_mha_sublayer_kernel(%arg0: i32, %arg1: i32, %arg2: memref<1x16x128xf32, #tpu.memory_space<vmem>>, %arg3: memref<1x128xf32, #tpu.memory_space<vmem>>, %arg4: memref<1x128xf32, #tpu.memory_space<vmem>>, %arg5: memref<4x128x32xbf16, #tpu.memory_space<vmem>>, %arg6: memref<4x1x32xf32, #tpu.memory_space<vmem>>, %arg7: memref<4x128x32xbf16, #tpu.memory_space<vmem>>, %arg8: memref<4x1x32xf32, #tpu.memory_space<vmem>>, %arg9: memref<4x128x32xbf16, #tpu.memory_space<vmem>>, %arg10: memref<4x1x32xf32, #tpu.memory_space<vmem>>, %arg11: memref<4x32x128xbf16, #tpu.memory_space<vmem>>, %arg12: memref<1x128xf32, #tpu.memory_space<vmem>>, %arg13: memref<1x8x128xf32, #tpu.memory_space<vmem>>, %arg14: memref<4x16x32xbf16, #tpu.memory_space<vmem>>, %arg15: memref<4x16x32xbf16, #tpu.memory_space<vmem>>) attributes {dimension_semantics = [#tpu.dimension_semantics<parallel>, #tpu.dimension_semantics<arbitrary>], iteration_bounds = array<i64: 2, 2>, scalar_prefetch = 0 : i64, scratch_operands = 2 : i64, tpu.core_type = #tpu.core_type<tc>, window_params = [{transform_indices = @transform_0, window_bounds = array<i64: 1, 16, 128>}, {pipeline_mode = #tpu.pipeline_mode<synchronous>, transform_indices = @transform_1, window_bounds = array<i64: 1, 128>}, {pipeline_mode = #tpu.pipeline_mode<synchronous>, transform_indices = @transform_2, window_bounds = array<i64: 1, 128>}, {pipeline_mode = #tpu.pipeline_mode<synchronous>, transform_indices = @transform_3, window_bounds = array<i64: 4, 128, 32>}, {pipeline_mode = #tpu.pipeline_mode<synchronous>, transform_indices = @transform_4, window_bounds = array<i64: 4, 1, 32>}, {pipeline_mode = #tpu.pipeline_mode<synchronous>, transform_indices = @transform_5, window_bounds = array<i64: 4, 128, 32>}, {pipeline_mode = #tpu.pipeline_mode<synchronous>, transform_indices = @transform_6, window_bounds = array<i64: 4, 1, 32>}, {pipeline_mode = #tpu.pipeline_mode<synchronous>, transform_indices = @transform_7, window_bounds = array<i64: 4, 128, 32>}, {pipeline_mode = #tpu.pipeline_mode<synchronous>, transform_indices = @transform_8, window_bounds = array<i64: 4, 1, 32>}, {pipeline_mode = #tpu.pipeline_mode<synchronous>, transform_indices = @transform_9, window_bounds = array<i64: 4, 32, 128>}, {pipeline_mode = #tpu.pipeline_mode<synchronous>, transform_indices = @transform_10, window_bounds = array<i64: 1, 128>}, {transform_indices = @transform_11, window_bounds = array<i64: 1, 8, 128>}]} {
    %c0_i32 = arith.constant 0 : i32
    %0 = arith.cmpi eq, %arg1, %c0_i32 : i32
    %1 = arith.extui %0 : i1 to i32
    %c0_i32_0 = arith.constant 0 : i32
    %2 = arith.cmpi ne, %1, %c0_i32_0 : i32
    scf.if %2 {
      %c0_87 = arith.constant 0 : index
      %c0_88 = arith.constant 0 : index
      %c0_89 = arith.constant 0 : index
      %201 = vector.load %arg2[%c0_87, %c0_88, %c0_89] : memref<1x16x128xf32, #tpu.memory_space<vmem>>, vector<1x16x128xf32>
      %202 = vector.shape_cast %201 : vector<1x16x128xf32> to vector<16x128xf32>
      %cst_90 = arith.constant dense<0.000000e+00> : vector<16xf32>
      %203 = vector.multi_reduction <add>, %202, %cst_90 [1] : vector<16x128xf32> to vector<16xf32>
      %204 = vector.shape_cast %203 : vector<16xf32> to vector<16x1xf32>
      %cst_91 = arith.constant 1.280000e+02 : f32
      %205 = vector.broadcast %cst_91 : f32 to vector<16x1xf32>
      %206 = arith.divf %204, %205 : vector<16x1xf32>
      %207 = vector.broadcast %206 : vector<16x1xf32> to vector<16x128xf32>
      %208 = arith.subf %202, %207 : vector<16x128xf32>
      %209 = arith.mulf %208, %208 : vector<16x128xf32>
      %cst_92 = arith.constant dense<0.000000e+00> : vector<16xf32>
      %210 = vector.multi_reduction <add>, %209, %cst_92 [1] : vector<16x128xf32> to vector<16xf32>
      %211 = vector.shape_cast %210 : vector<16xf32> to vector<16x1xf32>
      %cst_93 = arith.constant 1.280000e+02 : f32
      %212 = vector.broadcast %cst_93 : f32 to vector<16x1xf32>
      %213 = arith.divf %211, %212 : vector<16x1xf32>
      %214 = vector.broadcast %206 : vector<16x1xf32> to vector<16x128xf32>
      %215 = arith.subf %202, %214 : vector<16x128xf32>
      %cst_94 = arith.constant 9.99999974E-6 : f32
      %216 = vector.broadcast %cst_94 : f32 to vector<16x1xf32>
      %217 = arith.addf %213, %216 : vector<16x1xf32>
      %218 = math.rsqrt %217 : vector<16x1xf32>
      %219 = vector.broadcast %218 : vector<16x1xf32> to vector<16x128xf32>
      %220 = arith.mulf %215, %219 : vector<16x128xf32>
      %c0_95 = arith.constant 0 : index
      %c0_96 = arith.constant 0 : index
      %221 = vector.load %arg3[%c0_95, %c0_96] : memref<1x128xf32, #tpu.memory_space<vmem>>, vector<1x128xf32>
      %222 = vector.broadcast %221 : vector<1x128xf32> to vector<16x128xf32>
      %223 = arith.mulf %220, %222 : vector<16x128xf32>
      %c0_97 = arith.constant 0 : index
      %c0_98 = arith.constant 0 : index
      %224 = vector.load %arg4[%c0_97, %c0_98] : memref<1x128xf32, #tpu.memory_space<vmem>>, vector<1x128xf32>
      %225 = vector.broadcast %224 : vector<1x128xf32> to vector<16x128xf32>
      %226 = arith.addf %223, %225 : vector<16x128xf32>
      %227 = arith.truncf %226 : vector<16x128xf32> to vector<16x128xbf16>
      %c0_i32_99 = arith.constant 0 : i32
      %228 = arith.index_cast %c0_i32_99 : i32 to index
      %c0_100 = arith.constant 0 : index
      %c0_101 = arith.constant 0 : index
      %229 = vector.load %arg7[%228, %c0_100, %c0_101] : memref<4x128x32xbf16, #tpu.memory_space<vmem>>, vector<1x128x32xbf16>
      %230 = vector.shape_cast %229 : vector<1x128x32xbf16> to vector<128x32xbf16>
      %cst_102 = arith.constant dense<0.000000e+00> : vector<16x32xf32>
      %231 = tpu.matmul %227, %230, %cst_102 {dimension_numbers = #tpu.dot_dimension_numbers<[1], [0], [0], [1], [0, 0, 1, 1], [], []>} : vector<16x128xbf16>, vector<128x32xbf16>, vector<16x32xf32> -> vector<16x32xf32>
      %232 = arith.index_cast %c0_i32_99 : i32 to index
      %c0_103 = arith.constant 0 : index
      %c0_104 = arith.constant 0 : index
      %233 = vector.load %arg8[%232, %c0_103, %c0_104] : memref<4x1x32xf32, #tpu.memory_space<vmem>>, vector<1x1x32xf32>
      %234 = vector.shape_cast %233 : vector<1x1x32xf32> to vector<1x32xf32>
      %235 = vector.broadcast %234 : vector<1x32xf32> to vector<16x32xf32>
      %236 = arith.addf %231, %235 : vector<16x32xf32>
      %237 = arith.truncf %236 : vector<16x32xf32> to vector<16x32xbf16>
      %238 = arith.index_cast %c0_i32_99 : i32 to index
      %c0_105 = arith.constant 0 : index
      %c0_106 = arith.constant 0 : index
      %239 = vector.load %arg14[%238, %c0_105, %c0_106] : memref<4x16x32xbf16, #tpu.memory_space<vmem>>, vector<1x16x32xbf16>
      %240 = vector.shape_cast %239 : vector<1x16x32xbf16> to vector<16x32xbf16>
      %241 = vector.shape_cast %237 : vector<16x32xbf16> to vector<1x16x32xbf16>
      tpu.vector_store %arg14[%238, %c0_105, %c0_106], %241 {strides = array<i32>} : memref<4x16x32xbf16, #tpu.memory_space<vmem>>, vector<1x16x32xbf16>,
      %242 = arith.index_cast %c0_i32_99 : i32 to index
      %c0_107 = arith.constant 0 : index
      %c0_108 = arith.constant 0 : index
      %243 = vector.load %arg9[%242, %c0_107, %c0_108] : memref<4x128x32xbf16, #tpu.memory_space<vmem>>, vector<1x128x32xbf16>
      %244 = vector.shape_cast %243 : vector<1x128x32xbf16> to vector<128x32xbf16>
      %cst_109 = arith.constant dense<0.000000e+00> : vector<16x32xf32>
      %245 = tpu.matmul %227, %244, %cst_109 {dimension_numbers = #tpu.dot_dimension_numbers<[1], [0], [0], [1], [0, 0, 1, 1], [], []>} : vector<16x128xbf16>, vector<128x32xbf16>, vector<16x32xf32> -> vector<16x32xf32>
      %246 = arith.index_cast %c0_i32_99 : i32 to index
      %c0_110 = arith.constant 0 : index
      %c0_111 = arith.constant 0 : index
      %247 = vector.load %arg10[%246, %c0_110, %c0_111] : memref<4x1x32xf32, #tpu.memory_space<vmem>>, vector<1x1x32xf32>
      %248 = vector.shape_cast %247 : vector<1x1x32xf32> to vector<1x32xf32>
      %249 = vector.broadcast %248 : vector<1x32xf32> to vector<16x32xf32>
      %250 = arith.addf %245, %249 : vector<16x32xf32>
      %251 = arith.truncf %250 : vector<16x32xf32> to vector<16x32xbf16>
      %252 = arith.index_cast %c0_i32_99 : i32 to index
      %c0_112 = arith.constant 0 : index
      %c0_113 = arith.constant 0 : index
      %253 = vector.load %arg15[%252, %c0_112, %c0_113] : memref<4x16x32xbf16, #tpu.memory_space<vmem>>, vector<1x16x32xbf16>
      %254 = vector.shape_cast %253 : vector<1x16x32xbf16> to vector<16x32xbf16>
      %255 = vector.shape_cast %251 : vector<16x32xbf16> to vector<1x16x32xbf16>
      tpu.vector_store %arg15[%252, %c0_112, %c0_113], %255 {strides = array<i32>} : memref<4x16x32xbf16, #tpu.memory_space<vmem>>, vector<1x16x32xbf16>,
      %c1_i32_114 = arith.constant 1 : i32
      %256 = arith.index_cast %c1_i32_114 : i32 to index
      %c0_115 = arith.constant 0 : index
      %c0_116 = arith.constant 0 : index
      %257 = vector.load %arg7[%256, %c0_115, %c0_116] : memref<4x128x32xbf16, #tpu.memory_space<vmem>>, vector<1x128x32xbf16>
      %258 = vector.shape_cast %257 : vector<1x128x32xbf16> to vector<128x32xbf16>
      %cst_117 = arith.constant dense<0.000000e+00> : vector<16x32xf32>
      %259 = tpu.matmul %227, %258, %cst_117 {dimension_numbers = #tpu.dot_dimension_numbers<[1], [0], [0], [1], [0, 0, 1, 1], [], []>} : vector<16x128xbf16>, vector<128x32xbf16>, vector<16x32xf32> -> vector<16x32xf32>
      %260 = arith.index_cast %c1_i32_114 : i32 to index
      %c0_118 = arith.constant 0 : index
      %c0_119 = arith.constant 0 : index
      %261 = vector.load %arg8[%260, %c0_118, %c0_119] : memref<4x1x32xf32, #tpu.memory_space<vmem>>, vector<1x1x32xf32>
      %262 = vector.shape_cast %261 : vector<1x1x32xf32> to vector<1x32xf32>
      %263 = vector.broadcast %262 : vector<1x32xf32> to vector<16x32xf32>
      %264 = arith.addf %259, %263 : vector<16x32xf32>
      %265 = arith.truncf %264 : vector<16x32xf32> to vector<16x32xbf16>
      %266 = arith.index_cast %c1_i32_114 : i32 to index
      %c0_120 = arith.constant 0 : index
      %c0_121 = arith.constant 0 : index
      %267 = vector.load %arg14[%266, %c0_120, %c0_121] : memref<4x16x32xbf16, #tpu.memory_space<vmem>>, vector<1x16x32xbf16>
      %268 = vector.shape_cast %267 : vector<1x16x32xbf16> to vector<16x32xbf16>
      %269 = vector.shape_cast %265 : vector<16x32xbf16> to vector<1x16x32xbf16>
      tpu.vector_store %arg14[%266, %c0_120, %c0_121], %269 {strides = array<i32>} : memref<4x16x32xbf16, #tpu.memory_space<vmem>>, vector<1x16x32xbf16>,
      %270 = arith.index_cast %c1_i32_114 : i32 to index
      %c0_122 = arith.constant 0 : index
      %c0_123 = arith.constant 0 : index
      %271 = vector.load %arg9[%270, %c0_122, %c0_123] : memref<4x128x32xbf16, #tpu.memory_space<vmem>>, vector<1x128x32xbf16>
      %272 = vector.shape_cast %271 : vector<1x128x32xbf16> to vector<128x32xbf16>
      %cst_124 = arith.constant dense<0.000000e+00> : vector<16x32xf32>
      %273 = tpu.matmul %227, %272, %cst_124 {dimension_numbers = #tpu.dot_dimension_numbers<[1], [0], [0], [1], [0, 0, 1, 1], [], []>} : vector<16x128xbf16>, vector<128x32xbf16>, vector<16x32xf32> -> vector<16x32xf32>
      %274 = arith.index_cast %c1_i32_114 : i32 to index
      %c0_125 = arith.constant 0 : index
      %c0_126 = arith.constant 0 : index
      %275 = vector.load %arg10[%274, %c0_125, %c0_126] : memref<4x1x32xf32, #tpu.memory_space<vmem>>, vector<1x1x32xf32>
      %276 = vector.shape_cast %275 : vector<1x1x32xf32> to vector<1x32xf32>
      %277 = vector.broadcast %276 : vector<1x32xf32> to vector<16x32xf32>
      %278 = arith.addf %273, %277 : vector<16x32xf32>
      %279 = arith.truncf %278 : vector<16x32xf32> to vector<16x32xbf16>
      %280 = arith.index_cast %c1_i32_114 : i32 to index
      %c0_127 = arith.constant 0 : index
      %c0_128 = arith.constant 0 : index
      %281 = vector.load %arg15[%280, %c0_127, %c0_128] : memref<4x16x32xbf16, #tpu.memory_space<vmem>>, vector<1x16x32xbf16>
      %282 = vector.shape_cast %281 : vector<1x16x32xbf16> to vector<16x32xbf16>
      %283 = vector.shape_cast %279 : vector<16x32xbf16> to vector<1x16x32xbf16>
      tpu.vector_store %arg15[%280, %c0_127, %c0_128], %283 {strides = array<i32>} : memref<4x16x32xbf16, #tpu.memory_space<vmem>>, vector<1x16x32xbf16>,
      %c2_i32_129 = arith.constant 2 : i32
      %284 = arith.index_cast %c2_i32_129 : i32 to index
      %c0_130 = arith.constant 0 : index
      %c0_131 = arith.constant 0 : index
      %285 = vector.load %arg7[%284, %c0_130, %c0_131] : memref<4x128x32xbf16, #tpu.memory_space<vmem>>, vector<1x128x32xbf16>
      %286 = vector.shape_cast %285 : vector<1x128x32xbf16> to vector<128x32xbf16>
      %cst_132 = arith.constant dense<0.000000e+00> : vector<16x32xf32>
      %287 = tpu.matmul %227, %286, %cst_132 {dimension_numbers = #tpu.dot_dimension_numbers<[1], [0], [0], [1], [0, 0, 1, 1], [], []>} : vector<16x128xbf16>, vector<128x32xbf16>, vector<16x32xf32> -> vector<16x32xf32>
      %288 = arith.index_cast %c2_i32_129 : i32 to index
      %c0_133 = arith.constant 0 : index
      %c0_134 = arith.constant 0 : index
      %289 = vector.load %arg8[%288, %c0_133, %c0_134] : memref<4x1x32xf32, #tpu.memory_space<vmem>>, vector<1x1x32xf32>
      %290 = vector.shape_cast %289 : vector<1x1x32xf32> to vector<1x32xf32>
      %291 = vector.broadcast %290 : vector<1x32xf32> to vector<16x32xf32>
      %292 = arith.addf %287, %291 : vector<16x32xf32>
      %293 = arith.truncf %292 : vector<16x32xf32> to vector<16x32xbf16>
      %294 = arith.index_cast %c2_i32_129 : i32 to index
      %c0_135 = arith.constant 0 : index
      %c0_136 = arith.constant 0 : index
      %295 = vector.load %arg14[%294, %c0_135, %c0_136] : memref<4x16x32xbf16, #tpu.memory_space<vmem>>, vector<1x16x32xbf16>
      %296 = vector.shape_cast %295 : vector<1x16x32xbf16> to vector<16x32xbf16>
      %297 = vector.shape_cast %293 : vector<16x32xbf16> to vector<1x16x32xbf16>
      tpu.vector_store %arg14[%294, %c0_135, %c0_136], %297 {strides = array<i32>} : memref<4x16x32xbf16, #tpu.memory_space<vmem>>, vector<1x16x32xbf16>,
      %298 = arith.index_cast %c2_i32_129 : i32 to index
      %c0_137 = arith.constant 0 : index
      %c0_138 = arith.constant 0 : index
      %299 = vector.load %arg9[%298, %c0_137, %c0_138] : memref<4x128x32xbf16, #tpu.memory_space<vmem>>, vector<1x128x32xbf16>
      %300 = vector.shape_cast %299 : vector<1x128x32xbf16> to vector<128x32xbf16>
      %cst_139 = arith.constant dense<0.000000e+00> : vector<16x32xf32>
      %301 = tpu.matmul %227, %300, %cst_139 {dimension_numbers = #tpu.dot_dimension_numbers<[1], [0], [0], [1], [0, 0, 1, 1], [], []>} : vector<16x128xbf16>, vector<128x32xbf16>, vector<16x32xf32> -> vector<16x32xf32>
      %302 = arith.index_cast %c2_i32_129 : i32 to index
      %c0_140 = arith.constant 0 : index
      %c0_141 = arith.constant 0 : index
      %303 = vector.load %arg10[%302, %c0_140, %c0_141] : memref<4x1x32xf32, #tpu.memory_space<vmem>>, vector<1x1x32xf32>
      %304 = vector.shape_cast %303 : vector<1x1x32xf32> to vector<1x32xf32>
      %305 = vector.broadcast %304 : vector<1x32xf32> to vector<16x32xf32>
      %306 = arith.addf %301, %305 : vector<16x32xf32>
      %307 = arith.truncf %306 : vector<16x32xf32> to vector<16x32xbf16>
      %308 = arith.index_cast %c2_i32_129 : i32 to index
      %c0_142 = arith.constant 0 : index
      %c0_143 = arith.constant 0 : index
      %309 = vector.load %arg15[%308, %c0_142, %c0_143] : memref<4x16x32xbf16, #tpu.memory_space<vmem>>, vector<1x16x32xbf16>
      %310 = vector.shape_cast %309 : vector<1x16x32xbf16> to vector<16x32xbf16>
      %311 = vector.shape_cast %307 : vector<16x32xbf16> to vector<1x16x32xbf16>
      tpu.vector_store %arg15[%308, %c0_142, %c0_143], %311 {strides = array<i32>} : memref<4x16x32xbf16, #tpu.memory_space<vmem>>, vector<1x16x32xbf16>,
      %c3_i32_144 = arith.constant 3 : i32
      %312 = arith.index_cast %c3_i32_144 : i32 to index
      %c0_145 = arith.constant 0 : index
      %c0_146 = arith.constant 0 : index
      %313 = vector.load %arg7[%312, %c0_145, %c0_146] : memref<4x128x32xbf16, #tpu.memory_space<vmem>>, vector<1x128x32xbf16>
      %314 = vector.shape_cast %313 : vector<1x128x32xbf16> to vector<128x32xbf16>
      %cst_147 = arith.constant dense<0.000000e+00> : vector<16x32xf32>
      %315 = tpu.matmul %227, %314, %cst_147 {dimension_numbers = #tpu.dot_dimension_numbers<[1], [0], [0], [1], [0, 0, 1, 1], [], []>} : vector<16x128xbf16>, vector<128x32xbf16>, vector<16x32xf32> -> vector<16x32xf32>
      %316 = arith.index_cast %c3_i32_144 : i32 to index
      %c0_148 = arith.constant 0 : index
      %c0_149 = arith.constant 0 : index
      %317 = vector.load %arg8[%316, %c0_148, %c0_149] : memref<4x1x32xf32, #tpu.memory_space<vmem>>, vector<1x1x32xf32>
      %318 = vector.shape_cast %317 : vector<1x1x32xf32> to vector<1x32xf32>
      %319 = vector.broadcast %318 : vector<1x32xf32> to vector<16x32xf32>
      %320 = arith.addf %315, %319 : vector<16x32xf32>
      %321 = arith.truncf %320 : vector<16x32xf32> to vector<16x32xbf16>
      %322 = arith.index_cast %c3_i32_144 : i32 to index
      %c0_150 = arith.constant 0 : index
      %c0_151 = arith.constant 0 : index
      %323 = vector.load %arg14[%322, %c0_150, %c0_151] : memref<4x16x32xbf16, #tpu.memory_space<vmem>>, vector<1x16x32xbf16>
      %324 = vector.shape_cast %323 : vector<1x16x32xbf16> to vector<16x32xbf16>
      %325 = vector.shape_cast %321 : vector<16x32xbf16> to vector<1x16x32xbf16>
      tpu.vector_store %arg14[%322, %c0_150, %c0_151], %325 {strides = array<i32>} : memref<4x16x32xbf16, #tpu.memory_space<vmem>>, vector<1x16x32xbf16>,
      %326 = arith.index_cast %c3_i32_144 : i32 to index
      %c0_152 = arith.constant 0 : index
      %c0_153 = arith.constant 0 : index
      %327 = vector.load %arg9[%326, %c0_152, %c0_153] : memref<4x128x32xbf16, #tpu.memory_space<vmem>>, vector<1x128x32xbf16>
      %328 = vector.shape_cast %327 : vector<1x128x32xbf16> to vector<128x32xbf16>
      %cst_154 = arith.constant dense<0.000000e+00> : vector<16x32xf32>
      %329 = tpu.matmul %227, %328, %cst_154 {dimension_numbers = #tpu.dot_dimension_numbers<[1], [0], [0], [1], [0, 0, 1, 1], [], []>} : vector<16x128xbf16>, vector<128x32xbf16>, vector<16x32xf32> -> vector<16x32xf32>
      %330 = arith.index_cast %c3_i32_144 : i32 to index
      %c0_155 = arith.constant 0 : index
      %c0_156 = arith.constant 0 : index
      %331 = vector.load %arg10[%330, %c0_155, %c0_156] : memref<4x1x32xf32, #tpu.memory_space<vmem>>, vector<1x1x32xf32>
      %332 = vector.shape_cast %331 : vector<1x1x32xf32> to vector<1x32xf32>
      %333 = vector.broadcast %332 : vector<1x32xf32> to vector<16x32xf32>
      %334 = arith.addf %329, %333 : vector<16x32xf32>
      %335 = arith.truncf %334 : vector<16x32xf32> to vector<16x32xbf16>
      %336 = arith.index_cast %c3_i32_144 : i32 to index
      %c0_157 = arith.constant 0 : index
      %c0_158 = arith.constant 0 : index
      %337 = vector.load %arg15[%336, %c0_157, %c0_158] : memref<4x16x32xbf16, #tpu.memory_space<vmem>>, vector<1x16x32xbf16>
      %338 = vector.shape_cast %337 : vector<1x16x32xbf16> to vector<16x32xbf16>
      %339 = vector.shape_cast %335 : vector<16x32xbf16> to vector<1x16x32xbf16>
      tpu.vector_store %arg15[%336, %c0_157, %c0_158], %339 {strides = array<i32>} : memref<4x16x32xbf16, #tpu.memory_space<vmem>>, vector<1x16x32xbf16>,
      %c4_i32_159 = arith.constant 4 : i32
    } else {
    }
    %c8_i32 = arith.constant 8 : i32
    %3 = arith.muli %arg1, %c8_i32 : i32
    %4 = tpu.assume_multiple %3, 8 : i32
    %c0 = arith.constant 0 : index
    %5 = arith.index_cast %4 : i32 to index
    %c0_1 = arith.constant 0 : index
    %6 = vector.load %arg2[%c0, %5, %c0_1] : memref<1x16x128xf32, #tpu.memory_space<vmem>>, vector<1x8x128xf32>
    %7 = vector.shape_cast %6 : vector<1x8x128xf32> to vector<8x128xf32>
    %cst = arith.constant dense<0.000000e+00> : vector<8xf32>
    %8 = vector.multi_reduction <add>, %7, %cst [1] : vector<8x128xf32> to vector<8xf32>
    %9 = vector.shape_cast %8 : vector<8xf32> to vector<8x1xf32>
    %cst_2 = arith.constant 1.280000e+02 : f32
    %10 = vector.broadcast %cst_2 : f32 to vector<8x1xf32>
    %11 = arith.divf %9, %10 : vector<8x1xf32>
    %12 = vector.broadcast %11 : vector<8x1xf32> to vector<8x128xf32>
    %13 = arith.subf %7, %12 : vector<8x128xf32>
    %14 = arith.mulf %13, %13 : vector<8x128xf32>
    %cst_3 = arith.constant dense<0.000000e+00> : vector<8xf32>
    %15 = vector.multi_reduction <add>, %14, %cst_3 [1] : vector<8x128xf32> to vector<8xf32>
    %16 = vector.shape_cast %15 : vector<8xf32> to vector<8x1xf32>
    %cst_4 = arith.constant 1.280000e+02 : f32
    %17 = vector.broadcast %cst_4 : f32 to vector<8x1xf32>
    %18 = arith.divf %16, %17 : vector<8x1xf32>
    %19 = vector.broadcast %11 : vector<8x1xf32> to vector<8x128xf32>
    %20 = arith.subf %7, %19 : vector<8x128xf32>
    %cst_5 = arith.constant 9.99999974E-6 : f32
    %21 = vector.broadcast %cst_5 : f32 to vector<8x1xf32>
    %22 = arith.addf %18, %21 : vector<8x1xf32>
    %23 = math.rsqrt %22 : vector<8x1xf32>
    %24 = vector.broadcast %23 : vector<8x1xf32> to vector<8x128xf32>
    %25 = arith.mulf %20, %24 : vector<8x128xf32>
    %c0_6 = arith.constant 0 : index
    %c0_7 = arith.constant 0 : index
    %26 = vector.load %arg3[%c0_6, %c0_7] : memref<1x128xf32, #tpu.memory_space<vmem>>, vector<1x128xf32>
    %27 = vector.broadcast %26 : vector<1x128xf32> to vector<8x128xf32>
    %28 = arith.mulf %25, %27 : vector<8x128xf32>
    %c0_8 = arith.constant 0 : index
    %c0_9 = arith.constant 0 : index
    %29 = vector.load %arg4[%c0_8, %c0_9] : memref<1x128xf32, #tpu.memory_space<vmem>>, vector<1x128xf32>
    %30 = vector.broadcast %29 : vector<1x128xf32> to vector<8x128xf32>
    %31 = arith.addf %28, %30 : vector<8x128xf32>
    %32 = arith.truncf %31 : vector<8x128xf32> to vector<8x128xbf16>
    %33 = tpu.iota {dimensions = array<i32: 0>} : vector<8x16xi32>
    %34 = vector.broadcast %4 : i32 to vector<8x16xi32>
    %35 = arith.addi %34, %33 : vector<8x16xi32>
    %36 = tpu.iota {dimensions = array<i32: 1>} : vector<8x16xi32>
    %37 = arith.cmpi sle, %36, %35 : vector<8x16xi32>
    %cst_10 = arith.constant 0.000000e+00 : f32
    %cst_11 = arith.constant -1.000000e+09 : f32
    %38 = vector.broadcast %cst_10 : f32 to vector<8x16xf32>
    %39 = vector.broadcast %cst_11 : f32 to vector<8x16xf32>
    %40 = arith.select %37, %38, %39 : vector<8x16xi1>, vector<8x16xf32>
    %cst_12 = arith.constant 0.000000e+00 : f32
    %41 = vector.broadcast %cst_12 : f32 to vector<8x128xf32>
    %c0_i32_13 = arith.constant 0 : i32
    %42 = arith.index_cast %c0_i32_13 : i32 to index
    %c0_14 = arith.constant 0 : index
    %c0_15 = arith.constant 0 : index
    %43 = vector.load %arg5[%42, %c0_14, %c0_15] : memref<4x128x32xbf16, #tpu.memory_space<vmem>>, vector<1x128x32xbf16>
    %44 = vector.shape_cast %43 : vector<1x128x32xbf16> to vector<128x32xbf16>
    %cst_16 = arith.constant dense<0.000000e+00> : vector<8x32xf32>
    %45 = tpu.matmul %32, %44, %cst_16 {dimension_numbers = #tpu.dot_dimension_numbers<[1], [0], [0], [1], [0, 0, 1, 1], [], []>} : vector<8x128xbf16>, vector<128x32xbf16>, vector<8x32xf32> -> vector<8x32xf32>
    %46 = arith.index_cast %c0_i32_13 : i32 to index
    %c0_17 = arith.constant 0 : index
    %c0_18 = arith.constant 0 : index
    %47 = vector.load %arg6[%46, %c0_17, %c0_18] : memref<4x1x32xf32, #tpu.memory_space<vmem>>, vector<1x1x32xf32>
    %48 = vector.shape_cast %47 : vector<1x1x32xf32> to vector<1x32xf32>
    %49 = vector.broadcast %48 : vector<1x32xf32> to vector<8x32xf32>
    %50 = arith.addf %45, %49 : vector<8x32xf32>
    %51 = arith.truncf %50 : vector<8x32xf32> to vector<8x32xbf16>
    %52 = arith.index_cast %c0_i32_13 : i32 to index
    %c0_19 = arith.constant 0 : index
    %c0_20 = arith.constant 0 : index
    %53 = vector.load %arg14[%52, %c0_19, %c0_20] : memref<4x16x32xbf16, #tpu.memory_space<vmem>>, vector<1x16x32xbf16>
    %54 = vector.shape_cast %53 : vector<1x16x32xbf16> to vector<16x32xbf16>
    %cst_21 = arith.constant dense<0.000000e+00> : vector<8x16xf32>
    %55 = tpu.matmul %51, %54, %cst_21 {dimension_numbers = #tpu.dot_dimension_numbers<[1], [1], [0], [0], [0, 0, 1, 0], [], []>} : vector<8x32xbf16>, vector<16x32xbf16>, vector<8x16xf32> -> vector<8x16xf32>
    %cst_22 = arith.constant 0.176776692 : f32
    %56 = vector.broadcast %cst_22 : f32 to vector<8x16xf32>
    %57 = arith.mulf %55, %56 : vector<8x16xf32>
    %58 = arith.addf %57, %40 : vector<8x16xf32>
    %cst_23 = arith.constant dense<0xFF800000> : vector<8xf32>
    %59 = vector.multi_reduction <maximumf>, %58, %cst_23 [1] : vector<8x16xf32> to vector<8xf32>
    %60 = vector.shape_cast %59 : vector<8xf32> to vector<8x1xf32>
    %61 = vector.broadcast %60 : vector<8x1xf32> to vector<8x16xf32>
    %62 = arith.subf %58, %61 : vector<8x16xf32>
    %63 = math.exp %62 : vector<8x16xf32>
    %cst_24 = arith.constant dense<0.000000e+00> : vector<8xf32>
    %64 = vector.multi_reduction <add>, %63, %cst_24 [1] : vector<8x16xf32> to vector<8xf32>
    %65 = vector.shape_cast %64 : vector<8xf32> to vector<8x1xf32>
    %66 = tpu.reciprocal %65 {approx = true} : vector<8x1xf32> -> vector<8x1xf32>
    %67 = vector.broadcast %66 : vector<8x1xf32> to vector<8x16xf32>
    %68 = arith.mulf %63, %67 : vector<8x16xf32>
    %69 = arith.truncf %68 : vector<8x16xf32> to vector<8x16xbf16>
    %70 = arith.index_cast %c0_i32_13 : i32 to index
    %c0_25 = arith.constant 0 : index
    %c0_26 = arith.constant 0 : index
    %71 = vector.load %arg15[%70, %c0_25, %c0_26] : memref<4x16x32xbf16, #tpu.memory_space<vmem>>, vector<1x16x32xbf16>
    %72 = vector.shape_cast %71 : vector<1x16x32xbf16> to vector<16x32xbf16>
    %cst_27 = arith.constant dense<0.000000e+00> : vector<8x32xf32>
    %73 = tpu.matmul %69, %72, %cst_27 {dimension_numbers = #tpu.dot_dimension_numbers<[1], [0], [0], [1], [0, 0, 1, 1], [], []>} : vector<8x16xbf16>, vector<16x32xbf16>, vector<8x32xf32> -> vector<8x32xf32>
    %74 = arith.truncf %73 : vector<8x32xf32> to vector<8x32xbf16>
    %75 = arith.index_cast %c0_i32_13 : i32 to index
    %c0_28 = arith.constant 0 : index
    %c0_29 = arith.constant 0 : index
    %76 = vector.load %arg11[%75, %c0_28, %c0_29] : memref<4x32x128xbf16, #tpu.memory_space<vmem>>, vector<1x32x128xbf16>
    %77 = vector.shape_cast %76 : vector<1x32x128xbf16> to vector<32x128xbf16>
    %cst_30 = arith.constant dense<0.000000e+00> : vector<8x128xf32>
    %78 = tpu.matmul %74, %77, %cst_30 {dimension_numbers = #tpu.dot_dimension_numbers<[1], [0], [0], [1], [0, 0, 1, 1], [], []>} : vector<8x32xbf16>, vector<32x128xbf16>, vector<8x128xf32> -> vector<8x128xf32>
    %79 = arith.addf %41, %78 : vector<8x128xf32>
    %c1_i32 = arith.constant 1 : i32
    %80 = arith.index_cast %c1_i32 : i32 to index
    %c0_31 = arith.constant 0 : index
    %c0_32 = arith.constant 0 : index
    %81 = vector.load %arg5[%80, %c0_31, %c0_32] : memref<4x128x32xbf16, #tpu.memory_space<vmem>>, vector<1x128x32xbf16>
    %82 = vector.shape_cast %81 : vector<1x128x32xbf16> to vector<128x32xbf16>
    %cst_33 = arith.constant dense<0.000000e+00> : vector<8x32xf32>
    %83 = tpu.matmul %32, %82, %cst_33 {dimension_numbers = #tpu.dot_dimension_numbers<[1], [0], [0], [1], [0, 0, 1, 1], [], []>} : vector<8x128xbf16>, vector<128x32xbf16>, vector<8x32xf32> -> vector<8x32xf32>
    %84 = arith.index_cast %c1_i32 : i32 to index
    %c0_34 = arith.constant 0 : index
    %c0_35 = arith.constant 0 : index
    %85 = vector.load %arg6[%84, %c0_34, %c0_35] : memref<4x1x32xf32, #tpu.memory_space<vmem>>, vector<1x1x32xf32>
    %86 = vector.shape_cast %85 : vector<1x1x32xf32> to vector<1x32xf32>
    %87 = vector.broadcast %86 : vector<1x32xf32> to vector<8x32xf32>
    %88 = arith.addf %83, %87 : vector<8x32xf32>
    %89 = arith.truncf %88 : vector<8x32xf32> to vector<8x32xbf16>
    %90 = arith.index_cast %c1_i32 : i32 to index
    %c0_36 = arith.constant 0 : index
    %c0_37 = arith.constant 0 : index
    %91 = vector.load %arg14[%90, %c0_36, %c0_37] : memref<4x16x32xbf16, #tpu.memory_space<vmem>>, vector<1x16x32xbf16>
    %92 = vector.shape_cast %91 : vector<1x16x32xbf16> to vector<16x32xbf16>
    %cst_38 = arith.constant dense<0.000000e+00> : vector<8x16xf32>
    %93 = tpu.matmul %89, %92, %cst_38 {dimension_numbers = #tpu.dot_dimension_numbers<[1], [1], [0], [0], [0, 0, 1, 0], [], []>} : vector<8x32xbf16>, vector<16x32xbf16>, vector<8x16xf32> -> vector<8x16xf32>
    %cst_39 = arith.constant 0.176776692 : f32
    %94 = vector.broadcast %cst_39 : f32 to vector<8x16xf32>
    %95 = arith.mulf %93, %94 : vector<8x16xf32>
    %96 = arith.addf %95, %40 : vector<8x16xf32>
    %cst_40 = arith.constant dense<0xFF800000> : vector<8xf32>
    %97 = vector.multi_reduction <maximumf>, %96, %cst_40 [1] : vector<8x16xf32> to vector<8xf32>
    %98 = vector.shape_cast %97 : vector<8xf32> to vector<8x1xf32>
    %99 = vector.broadcast %98 : vector<8x1xf32> to vector<8x16xf32>
    %100 = arith.subf %96, %99 : vector<8x16xf32>
    %101 = math.exp %100 : vector<8x16xf32>
    %cst_41 = arith.constant dense<0.000000e+00> : vector<8xf32>
    %102 = vector.multi_reduction <add>, %101, %cst_41 [1] : vector<8x16xf32> to vector<8xf32>
    %103 = vector.shape_cast %102 : vector<8xf32> to vector<8x1xf32>
    %104 = tpu.reciprocal %103 {approx = true} : vector<8x1xf32> -> vector<8x1xf32>
    %105 = vector.broadcast %104 : vector<8x1xf32> to vector<8x16xf32>
    %106 = arith.mulf %101, %105 : vector<8x16xf32>
    %107 = arith.truncf %106 : vector<8x16xf32> to vector<8x16xbf16>
    %108 = arith.index_cast %c1_i32 : i32 to index
    %c0_42 = arith.constant 0 : index
    %c0_43 = arith.constant 0 : index
    %109 = vector.load %arg15[%108, %c0_42, %c0_43] : memref<4x16x32xbf16, #tpu.memory_space<vmem>>, vector<1x16x32xbf16>
    %110 = vector.shape_cast %109 : vector<1x16x32xbf16> to vector<16x32xbf16>
    %cst_44 = arith.constant dense<0.000000e+00> : vector<8x32xf32>
    %111 = tpu.matmul %107, %110, %cst_44 {dimension_numbers = #tpu.dot_dimension_numbers<[1], [0], [0], [1], [0, 0, 1, 1], [], []>} : vector<8x16xbf16>, vector<16x32xbf16>, vector<8x32xf32> -> vector<8x32xf32>
    %112 = arith.truncf %111 : vector<8x32xf32> to vector<8x32xbf16>
    %113 = arith.index_cast %c1_i32 : i32 to index
    %c0_45 = arith.constant 0 : index
    %c0_46 = arith.constant 0 : index
    %114 = vector.load %arg11[%113, %c0_45, %c0_46] : memref<4x32x128xbf16, #tpu.memory_space<vmem>>, vector<1x32x128xbf16>
    %115 = vector.shape_cast %114 : vector<1x32x128xbf16> to vector<32x128xbf16>
    %cst_47 = arith.constant dense<0.000000e+00> : vector<8x128xf32>
    %116 = tpu.matmul %112, %115, %cst_47 {dimension_numbers = #tpu.dot_dimension_numbers<[1], [0], [0], [1], [0, 0, 1, 1], [], []>} : vector<8x32xbf16>, vector<32x128xbf16>, vector<8x128xf32> -> vector<8x128xf32>
    %117 = arith.addf %79, %116 : vector<8x128xf32>
    %c2_i32 = arith.constant 2 : i32
    %118 = arith.index_cast %c2_i32 : i32 to index
    %c0_48 = arith.constant 0 : index
    %c0_49 = arith.constant 0 : index
    %119 = vector.load %arg5[%118, %c0_48, %c0_49] : memref<4x128x32xbf16, #tpu.memory_space<vmem>>, vector<1x128x32xbf16>
    %120 = vector.shape_cast %119 : vector<1x128x32xbf16> to vector<128x32xbf16>
    %cst_50 = arith.constant dense<0.000000e+00> : vector<8x32xf32>
    %121 = tpu.matmul %32, %120, %cst_50 {dimension_numbers = #tpu.dot_dimension_numbers<[1], [0], [0], [1], [0, 0, 1, 1], [], []>} : vector<8x128xbf16>, vector<128x32xbf16>, vector<8x32xf32> -> vector<8x32xf32>
    %122 = arith.index_cast %c2_i32 : i32 to index
    %c0_51 = arith.constant 0 : index
    %c0_52 = arith.constant 0 : index
    %123 = vector.load %arg6[%122, %c0_51, %c0_52] : memref<4x1x32xf32, #tpu.memory_space<vmem>>, vector<1x1x32xf32>
    %124 = vector.shape_cast %123 : vector<1x1x32xf32> to vector<1x32xf32>
    %125 = vector.broadcast %124 : vector<1x32xf32> to vector<8x32xf32>
    %126 = arith.addf %121, %125 : vector<8x32xf32>
    %127 = arith.truncf %126 : vector<8x32xf32> to vector<8x32xbf16>
    %128 = arith.index_cast %c2_i32 : i32 to index
    %c0_53 = arith.constant 0 : index
    %c0_54 = arith.constant 0 : index
    %129 = vector.load %arg14[%128, %c0_53, %c0_54] : memref<4x16x32xbf16, #tpu.memory_space<vmem>>, vector<1x16x32xbf16>
    %130 = vector.shape_cast %129 : vector<1x16x32xbf16> to vector<16x32xbf16>
    %cst_55 = arith.constant dense<0.000000e+00> : vector<8x16xf32>
    %131 = tpu.matmul %127, %130, %cst_55 {dimension_numbers = #tpu.dot_dimension_numbers<[1], [1], [0], [0], [0, 0, 1, 0], [], []>} : vector<8x32xbf16>, vector<16x32xbf16>, vector<8x16xf32> -> vector<8x16xf32>
    %cst_56 = arith.constant 0.176776692 : f32
    %132 = vector.broadcast %cst_56 : f32 to vector<8x16xf32>
    %133 = arith.mulf %131, %132 : vector<8x16xf32>
    %134 = arith.addf %133, %40 : vector<8x16xf32>
    %cst_57 = arith.constant dense<0xFF800000> : vector<8xf32>
    %135 = vector.multi_reduction <maximumf>, %134, %cst_57 [1] : vector<8x16xf32> to vector<8xf32>
    %136 = vector.shape_cast %135 : vector<8xf32> to vector<8x1xf32>
    %137 = vector.broadcast %136 : vector<8x1xf32> to vector<8x16xf32>
    %138 = arith.subf %134, %137 : vector<8x16xf32>
    %139 = math.exp %138 : vector<8x16xf32>
    %cst_58 = arith.constant dense<0.000000e+00> : vector<8xf32>
    %140 = vector.multi_reduction <add>, %139, %cst_58 [1] : vector<8x16xf32> to vector<8xf32>
    %141 = vector.shape_cast %140 : vector<8xf32> to vector<8x1xf32>
    %142 = tpu.reciprocal %141 {approx = true} : vector<8x1xf32> -> vector<8x1xf32>
    %143 = vector.broadcast %142 : vector<8x1xf32> to vector<8x16xf32>
    %144 = arith.mulf %139, %143 : vector<8x16xf32>
    %145 = arith.truncf %144 : vector<8x16xf32> to vector<8x16xbf16>
    %146 = arith.index_cast %c2_i32 : i32 to index
    %c0_59 = arith.constant 0 : index
    %c0_60 = arith.constant 0 : index
    %147 = vector.load %arg15[%146, %c0_59, %c0_60] : memref<4x16x32xbf16, #tpu.memory_space<vmem>>, vector<1x16x32xbf16>
    %148 = vector.shape_cast %147 : vector<1x16x32xbf16> to vector<16x32xbf16>
    %cst_61 = arith.constant dense<0.000000e+00> : vector<8x32xf32>
    %149 = tpu.matmul %145, %148, %cst_61 {dimension_numbers = #tpu.dot_dimension_numbers<[1], [0], [0], [1], [0, 0, 1, 1], [], []>} : vector<8x16xbf16>, vector<16x32xbf16>, vector<8x32xf32> -> vector<8x32xf32>
    %150 = arith.truncf %149 : vector<8x32xf32> to vector<8x32xbf16>
    %151 = arith.index_cast %c2_i32 : i32 to index
    %c0_62 = arith.constant 0 : index
    %c0_63 = arith.constant 0 : index
    %152 = vector.load %arg11[%151, %c0_62, %c0_63] : memref<4x32x128xbf16, #tpu.memory_space<vmem>>, vector<1x32x128xbf16>
    %153 = vector.shape_cast %152 : vector<1x32x128xbf16> to vector<32x128xbf16>
    %cst_64 = arith.constant dense<0.000000e+00> : vector<8x128xf32>
    %154 = tpu.matmul %150, %153, %cst_64 {dimension_numbers = #tpu.dot_dimension_numbers<[1], [0], [0], [1], [0, 0, 1, 1], [], []>} : vector<8x32xbf16>, vector<32x128xbf16>, vector<8x128xf32> -> vector<8x128xf32>
    %155 = arith.addf %117, %154 : vector<8x128xf32>
    %c3_i32 = arith.constant 3 : i32
    %156 = arith.index_cast %c3_i32 : i32 to index
    %c0_65 = arith.constant 0 : index
    %c0_66 = arith.constant 0 : index
    %157 = vector.load %arg5[%156, %c0_65, %c0_66] : memref<4x128x32xbf16, #tpu.memory_space<vmem>>, vector<1x128x32xbf16>
    %158 = vector.shape_cast %157 : vector<1x128x32xbf16> to vector<128x32xbf16>
    %cst_67 = arith.constant dense<0.000000e+00> : vector<8x32xf32>
    %159 = tpu.matmul %32, %158, %cst_67 {dimension_numbers = #tpu.dot_dimension_numbers<[1], [0], [0], [1], [0, 0, 1, 1], [], []>} : vector<8x128xbf16>, vector<128x32xbf16>, vector<8x32xf32> -> vector<8x32xf32>
    %160 = arith.index_cast %c3_i32 : i32 to index
    %c0_68 = arith.constant 0 : index
    %c0_69 = arith.constant 0 : index
    %161 = vector.load %arg6[%160, %c0_68, %c0_69] : memref<4x1x32xf32, #tpu.memory_space<vmem>>, vector<1x1x32xf32>
    %162 = vector.shape_cast %161 : vector<1x1x32xf32> to vector<1x32xf32>
    %163 = vector.broadcast %162 : vector<1x32xf32> to vector<8x32xf32>
    %164 = arith.addf %159, %163 : vector<8x32xf32>
    %165 = arith.truncf %164 : vector<8x32xf32> to vector<8x32xbf16>
    %166 = arith.index_cast %c3_i32 : i32 to index
    %c0_70 = arith.constant 0 : index
    %c0_71 = arith.constant 0 : index
    %167 = vector.load %arg14[%166, %c0_70, %c0_71] : memref<4x16x32xbf16, #tpu.memory_space<vmem>>, vector<1x16x32xbf16>
    %168 = vector.shape_cast %167 : vector<1x16x32xbf16> to vector<16x32xbf16>
    %cst_72 = arith.constant dense<0.000000e+00> : vector<8x16xf32>
    %169 = tpu.matmul %165, %168, %cst_72 {dimension_numbers = #tpu.dot_dimension_numbers<[1], [1], [0], [0], [0, 0, 1, 0], [], []>} : vector<8x32xbf16>, vector<16x32xbf16>, vector<8x16xf32> -> vector<8x16xf32>
    %cst_73 = arith.constant 0.176776692 : f32
    %170 = vector.broadcast %cst_73 : f32 to vector<8x16xf32>
    %171 = arith.mulf %169, %170 : vector<8x16xf32>
    %172 = arith.addf %171, %40 : vector<8x16xf32>
    %cst_74 = arith.constant dense<0xFF800000> : vector<8xf32>
    %173 = vector.multi_reduction <maximumf>, %172, %cst_74 [1] : vector<8x16xf32> to vector<8xf32>
    %174 = vector.shape_cast %173 : vector<8xf32> to vector<8x1xf32>
    %175 = vector.broadcast %174 : vector<8x1xf32> to vector<8x16xf32>
    %176 = arith.subf %172, %175 : vector<8x16xf32>
    %177 = math.exp %176 : vector<8x16xf32>
    %cst_75 = arith.constant dense<0.000000e+00> : vector<8xf32>
    %178 = vector.multi_reduction <add>, %177, %cst_75 [1] : vector<8x16xf32> to vector<8xf32>
    %179 = vector.shape_cast %178 : vector<8xf32> to vector<8x1xf32>
    %180 = tpu.reciprocal %179 {approx = true} : vector<8x1xf32> -> vector<8x1xf32>
    %181 = vector.broadcast %180 : vector<8x1xf32> to vector<8x16xf32>
    %182 = arith.mulf %177, %181 : vector<8x16xf32>
    %183 = arith.truncf %182 : vector<8x16xf32> to vector<8x16xbf16>
    %184 = arith.index_cast %c3_i32 : i32 to index
    %c0_76 = arith.constant 0 : index
    %c0_77 = arith.constant 0 : index
    %185 = vector.load %arg15[%184, %c0_76, %c0_77] : memref<4x16x32xbf16, #tpu.memory_space<vmem>>, vector<1x16x32xbf16>
    %186 = vector.shape_cast %185 : vector<1x16x32xbf16> to vector<16x32xbf16>
    %cst_78 = arith.constant dense<0.000000e+00> : vector<8x32xf32>
    %187 = tpu.matmul %183, %186, %cst_78 {dimension_numbers = #tpu.dot_dimension_numbers<[1], [0], [0], [1], [0, 0, 1, 1], [], []>} : vector<8x16xbf16>, vector<16x32xbf16>, vector<8x32xf32> -> vector<8x32xf32>
    %188 = arith.truncf %187 : vector<8x32xf32> to vector<8x32xbf16>
    %189 = arith.index_cast %c3_i32 : i32 to index
    %c0_79 = arith.constant 0 : index
    %c0_80 = arith.constant 0 : index
    %190 = vector.load %arg11[%189, %c0_79, %c0_80] : memref<4x32x128xbf16, #tpu.memory_space<vmem>>, vector<1x32x128xbf16>
    %191 = vector.shape_cast %190 : vector<1x32x128xbf16> to vector<32x128xbf16>
    %cst_81 = arith.constant dense<0.000000e+00> : vector<8x128xf32>
    %192 = tpu.matmul %188, %191, %cst_81 {dimension_numbers = #tpu.dot_dimension_numbers<[1], [0], [0], [1], [0, 0, 1, 1], [], []>} : vector<8x32xbf16>, vector<32x128xbf16>, vector<8x128xf32> -> vector<8x128xf32>
    %193 = arith.addf %155, %192 : vector<8x128xf32>
    %c4_i32 = arith.constant 4 : i32
    %c0_82 = arith.constant 0 : index
    %c0_83 = arith.constant 0 : index
    %194 = vector.load %arg12[%c0_82, %c0_83] : memref<1x128xf32, #tpu.memory_space<vmem>>, vector<1x128xf32>
    %195 = vector.broadcast %194 : vector<1x128xf32> to vector<8x128xf32>
    %196 = arith.addf %193, %195 : vector<8x128xf32>
    %197 = arith.addf %196, %7 : vector<8x128xf32>
    %c0_84 = arith.constant 0 : index
    %c0_85 = arith.constant 0 : index
    %c0_86 = arith.constant 0 : index
    %198 = vector.load %arg13[%c0_84, %c0_85, %c0_86] : memref<1x8x128xf32, #tpu.memory_space<vmem>>, vector<1x8x128xf32>
    %199 = vector.shape_cast %198 : vector<1x8x128xf32> to vector<8x128xf32>
    %200 = vector.shape_cast %197 : vector<8x128xf32> to vector<1x8x128xf32>
    tpu.vector_store %arg13[%c0_84, %c0_85, %c0_86], %200 {strides = array<i32>} : memref<1x8x128xf32, #tpu.memory_space<vmem>>, vector<1x8x128xf32>,
    return
  }
  func.func @transform_0(%arg0: i32, %arg1: i32) -> (i32, i32, i32) {
    %c0_i32 = arith.constant 0 : i32
    %c0_i32_0 = arith.constant 0 : i32
    %c0_i32_1 = arith.constant 0 : i32
    return %arg0, %c0_i32, %c0_i32_0 : i32, i32, i32
  }
  func.func @transform_1(%arg0: i32, %arg1: i32) -> (i32, i32) {
    %c0_i32 = arith.constant 0 : i32
    %c0_i32_0 = arith.constant 0 : i32
    %c0_i32_1 = arith.constant 0 : i32
    return %c0_i32, %c0_i32_0 : i32, i32
  }
  func.func @transform_2(%arg0: i32, %arg1: i32) -> (i32, i32) {
    %c0_i32 = arith.constant 0 : i32
    %c0_i32_0 = arith.constant 0 : i32
    %c0_i32_1 = arith.constant 0 : i32
    return %c0_i32, %c0_i32_0 : i32, i32
  }
  func.func @transform_3(%arg0: i32, %arg1: i32) -> (i32, i32, i32) {
    %c0_i32 = arith.constant 0 : i32
    %c0_i32_0 = arith.constant 0 : i32
    %c0_i32_1 = arith.constant 0 : i32
    %c0_i32_2 = arith.constant 0 : i32
    return %c0_i32, %c0_i32_0, %c0_i32_1 : i32, i32, i32
  }
  func.func @transform_4(%arg0: i32, %arg1: i32) -> (i32, i32, i32) {
    %c0_i32 = arith.constant 0 : i32
    %c0_i32_0 = arith.constant 0 : i32
    %c0_i32_1 = arith.constant 0 : i32
    %c0_i32_2 = arith.constant 0 : i32
    return %c0_i32, %c0_i32_0, %c0_i32_1 : i32, i32, i32
  }
  func.func @transform_5(%arg0: i32, %arg1: i32) -> (i32, i32, i32) {
    %c0_i32 = arith.constant 0 : i32
    %c0_i32_0 = arith.constant 0 : i32
    %c0_i32_1 = arith.constant 0 : i32
    %c0_i32_2 = arith.constant 0 : i32
    return %c0_i32, %c0_i32_0, %c0_i32_1 : i32, i32, i32
  }
  func.func @transform_6(%arg0: i32, %arg1: i32) -> (i32, i32, i32) {
    %c0_i32 = arith.constant 0 : i32
    %c0_i32_0 = arith.constant 0 : i32
    %c0_i32_1 = arith.constant 0 : i32
    %c0_i32_2 = arith.constant 0 : i32
    return %c0_i32, %c0_i32_0, %c0_i32_1 : i32, i32, i32
  }
  func.func @transform_7(%arg0: i32, %arg1: i32) -> (i32, i32, i32) {
    %c0_i32 = arith.constant 0 : i32
    %c0_i32_0 = arith.constant 0 : i32
    %c0_i32_1 = arith.constant 0 : i32
    %c0_i32_2 = arith.constant 0 : i32
    return %c0_i32, %c0_i32_0, %c0_i32_1 : i32, i32, i32
  }
  func.func @transform_8(%arg0: i32, %arg1: i32) -> (i32, i32, i32) {
    %c0_i32 = arith.constant 0 : i32
    %c0_i32_0 = arith.constant 0 : i32
    %c0_i32_1 = arith.constant 0 : i32
    %c0_i32_2 = arith.constant 0 : i32
    return %c0_i32, %c0_i32_0, %c0_i32_1 : i32, i32, i32
  }
  func.func @transform_9(%arg0: i32, %arg1: i32) -> (i32, i32, i32) {
    %c0_i32 = arith.constant 0 : i32
    %c0_i32_0 = arith.constant 0 : i32
    %c0_i32_1 = arith.constant 0 : i32
    %c0_i32_2 = arith.constant 0 : i32
    return %c0_i32, %c0_i32_0, %c0_i32_1 : i32, i32, i32
  }
  func.func @transform_10(%arg0: i32, %arg1: i32) -> (i32, i32) {
    %c0_i32 = arith.constant 0 : i32
    %c0_i32_0 = arith.constant 0 : i32
    %c0_i32_1 = arith.constant 0 : i32
    return %c0_i32, %c0_i32_0 : i32, i32
  }
  func.func @transform_11(%arg0: i32, %arg1: i32) -> (i32, i32, i32) {
    %c0_i32 = arith.constant 0 : i32
    %c0_i32_0 = arith.constant 0 : i32
    return %arg0, %arg1, %c0_i32 : i32, i32, i32
  }
}

</mosaic_0001>

<llo_original>
// kernel: tpu_custom_call.1
$region0: #{tpu_custom_call.1}
  #allocation0 [shape = 'u32[]', space=smem, size = 0x4, offset = 0x4, fixed_abs, tag = 'smem constant byte address 0x4 - core index']
  #allocation1 [shape = 'u32[144,128]{1,0:T(1,128)}', space=vmem, size = 0x12000, scoped, tag = 'internal scratch']
  #allocation2 [shape = 'bf16[4,16,32]{2,1,0:T(16,128)(2,1)}', space=vmem, size = 0x4000, scoped, tag = 'scratch operand']
  #allocation3 [shape = 'bf16[4,16,32]{2,1,0:T(16,128)(2,1)}', space=vmem, size = 0x4000, scoped, tag = 'scratch operand']
  %s0 = inlined_call_operand.vmem [shape: f32[2,16,128], index: 0, kind: input, shape index: {}]
  %s1 = inlined_call_operand.vmem [shape: f32[1,128], index: 1, kind: input, shape index: {}]
  %s2 = inlined_call_operand.vmem [shape: f32[1,128], index: 2, kind: input, shape index: {}]
  %s3 = inlined_call_operand.vmem [shape: bf16[4,128,32], index: 3, kind: input, shape index: {}]
  %s4 = inlined_call_operand.vmem [shape: f32[4,1,32], index: 4, kind: input, shape index: {}]
  %s5 = inlined_call_operand.vmem [shape: bf16[4,128,32], index: 5, kind: input, shape index: {}]
  %s6 = inlined_call_operand.vmem [shape: f32[4,1,32], index: 6, kind: input, shape index: {}]
  %s7 = inlined_call_operand.vmem [shape: bf16[4,128,32], index: 7, kind: input, shape index: {}]
  %s8 = inlined_call_operand.vmem [shape: f32[4,1,32], index: 8, kind: input, shape index: {}]
  %s9 = inlined_call_operand.vmem [shape: bf16[4,32,128], index: 9, kind: input, shape index: {}]
  %s10 = inlined_call_operand.vmem [shape: f32[1,128], index: 10, kind: input, shape index: {}]
  %s11 = inlined_call_operand.hbm [shape: f32[2,16,128], index: 11, kind: output, shape index: {}]
  %s12 = sld [smem:[#allocation0]]
  $region81: #{tpu_custom_call.1} parent=0
    _
  %s14 = ssub.s32 1, %s12
  %s15 = scalar_select 0, %s14, %s12
  $region1: #{tpu_custom_call.1} parent=0
    #allocation4 [shape = 'u8[8192]{0}', space=vmem, size = 0x2000, scoped, tag = 'output window, operand 0']
    #allocation5 [shape = 's32[2]{0}', space=sflag, size = 0x8, scoped, tag = 'scoped memory for tpu_custom_call.1']
    %16 = vsyncpa [#allocation5], 0
    %s17 = scalar_lea.sflag [#allocation5], 1
    %18 = vsyncpa %s17, 0
    loop: start=0, step=1, limit=6
    $region2: #{tpu_custom_call.1} parent=1 // loop_pre_header
      _
    $region3: #{tpu_custom_call.1} parent=1 // loop_header
      %s20 = sphi 0, %s24
      %p21 = scmp.ge.s32.totalorder %s20, 6
      %s27 = sphi 0, %s39
      %s28 = sphi 0, %s35
      %s29 = sphi 0, %s27
      %s30 = sphi 0, %s28
      %s31 = sphi 0, %s29
      %s32 = sphi 0, %s30
      %s42 = sphi 0, %s44
      %s45 = sphi 0, %s42
      %s46 = sphi 0, %s45
      %s62 = sphi 0, %s46
      %s66 = sphi 0, %s66
      %s68 = sphi 0, %s66
      %s69 = sphi 0, %s68
      %s83 = sphi 0, %s69
      %s87 = sphi 0, %s87
      %s89 = sphi 0, %s87
      %s90 = sphi 0, %s89
      %s104 = sphi 0, %s90
      %s108 = sphi 0, %s108
      %s110 = sphi 0, %s108
      %s111 = sphi 0, %s110
      %s125 = sphi 0, %s111
      %s129 = sphi 0, %s129
      %s131 = sphi 0, %s129
      %s132 = sphi 0, %s131
      %s146 = sphi 0, %s132
      %s150 = sphi 0, %s150
      %s152 = sphi 0, %s150
      %s153 = sphi 0, %s152
      %s167 = sphi 0, %s153
      %s171 = sphi 0, %s171
      %s173 = sphi 0, %s171
      %s174 = sphi 0, %s173
      %s188 = sphi 0, %s174
      %s192 = sphi 0, %s192
      %s194 = sphi 0, %s192
      %s195 = sphi 0, %s194
      %s209 = sphi 0, %s195
      %s213 = sphi 0, %s213
      %s215 = sphi 0, %s213
      %s216 = sphi 0, %s215
      %s230 = sphi 0, %s216
      %s234 = sphi 0, %s234
      %s236 = sphi 0, %s234
      %s237 = sphi 0, %s236
      %s251 = sphi 0, %s237
      %s255 = sphi 0, %s255
      %s257 = sphi 0, %s255
      %s258 = sphi 0, %s257
      %s272 = sphi 0, %s258
      %s280 = sphi 0, %s282
      %s283 = sphi 0, %s280
      %s284 = sphi 0, %s283
      %s300 = sphi 0, %s284
    $region4: #{tpu_custom_call.1} parent=1 // loop_header_branch
      %23 = sbr.rel (%p21) target = $region8
    $region5: #{tpu_custom_call.1} parent=1 // loop_body
      %s25 = ssub.s32 %s20, 1
      %s26 = ssub.s32 %s20, 2
      %s33 = sadd.s32 1, %s28
      %p34 = scmp.ge.s32.totalorder %s33, 2
      %s35 = scalar_select %p34, 0, %s33
      %s36 = sadd.s32 1, %s27
      %s37 = scalar_select %p34, %s36, %s27
      %p38 = scmp.ge.s32.totalorder %s37, 2
      %s39 = scalar_select %p38, 0, %s37
      %s40 = ssub.s32 %s27, %s39
      %p41 = scmp.eq.s32.totalorder %s40, 0
      %s43 = sadd.s32 %s42, 1
      %s44 = scalar_select %p41, %s42, %s43
      %p47 = pneg %p41
      %p48 = scmp.eq.s32.totalorder %s20, 3
      %p49 = por %p47, %p48
      %p50 = scmp.ne.s32.totalorder %s42, %s45
      %p51 = scmp.eq.s32.totalorder %s20, 0
      %p52 = por %p50, %p51
      %p53 = scmp.ne.s32.totalorder %s42, %s45
      %p54 = scmp.eq.s32.totalorder %s25, 3
      %p55 = por %p53, %p54
      %p56 = scmp.ne.s32.totalorder %s45, %s46
      %p57 = scmp.eq.s32.totalorder %s25, 0
      %p58 = por %p56, %p57
      %p59 = scmp.ne.s32.totalorder %s45, %s46
      %p60 = scmp.eq.s32.totalorder %s26, 3
      %p61 = por %p59, %p60
      %p63 = scmp.ne.s32.totalorder %s46, %s62
      %p64 = scmp.eq.s32.totalorder %s26, 0
      %p65 = por %p63, %p64
      %s67 = sadd.s32 %s66, 1
      %p70 = scmp.eq.s32.totalorder %s20, 3
      %p71 = scmp.ne.s32.totalorder %s66, %s68
      %p72 = scmp.eq.s32.totalorder %s20, 0
      %p73 = por %p71, %p72
      %p74 = scmp.ne.s32.totalorder %s66, %s68
      %p75 = scmp.eq.s32.totalorder %s25, 3
      %p76 = por %p74, %p75
      %p77 = scmp.ne.s32.totalorder %s68, %s69
      %p78 = scmp.eq.s32.totalorder %s25, 0
      %p79 = por %p77, %p78
      %p80 = scmp.ne.s32.totalorder %s68, %s69
      %p81 = scmp.eq.s32.totalorder %s26, 3
      %p82 = por %p80, %p81
      %p84 = scmp.ne.s32.totalorder %s69, %s83
      %p85 = scmp.eq.s32.totalorder %s26, 0
      %p86 = por %p84, %p85
      %s88 = sadd.s32 %s87, 1
      %p91 = scmp.eq.s32.totalorder %s20, 3
      %p92 = scmp.ne.s32.totalorder %s87, %s89
      %p93 = scmp.eq.s32.totalorder %s20, 0
      %p94 = por %p92, %p93
      %p95 = scmp.ne.s32.totalorder %s87, %s89
      %p96 = scmp.eq.s32.totalorder %s25, 3
      %p97 = por %p95, %p96
      %p98 = scmp.ne.s32.totalorder %s89, %s90
      %p99 = scmp.eq.s32.totalorder %s25, 0
      %p100 = por %p98, %p99
      %p101 = scmp.ne.s32.totalorder %s89, %s90
      %p102 = scmp.eq.s32.totalorder %s26, 3
      %p103 = por %p101, %p102
      %p105 = scmp.ne.s32.totalorder %s90, %s104
      %p106 = scmp.eq.s32.totalorder %s26, 0
      %p107 = por %p105, %p106
      %s109 = sadd.s32 %s108, 1
      %p112 = scmp.eq.s32.totalorder %s20, 3
      %p113 = scmp.ne.s32.totalorder %s108, %s110
      %p114 = scmp.eq.s32.totalorder %s20, 0
      %p115 = por %p113, %p114
      %p116 = scmp.ne.s32.totalorder %s108, %s110
      %p117 = scmp.eq.s32.totalorder %s25, 3
      %p118 = por %p116, %p117
      %p119 = scmp.ne.s32.totalorder %s110, %s111
      %p120 = scmp.eq.s32.totalorder %s25, 0
      %p121 = por %p119, %p120
      %p122 = scmp.ne.s32.totalorder %s110, %s111
      %p123 = scmp.eq.s32.totalorder %s26, 3
      %p124 = por %p122, %p123
      %p126 = scmp.ne.s32.totalorder %s111, %s125
      %p127 = scmp.eq.s32.totalorder %s26, 0
      %p128 = por %p126, %p127
      %s130 = sadd.s32 %s129, 1
      %p133 = scmp.eq.s32.totalorder %s20, 3
      %p134 = scmp.ne.s32.totalorder %s129, %s131
      %p135 = scmp.eq.s32.totalorder %s20, 0
      %p136 = por %p134, %p135
      %p137 = scmp.ne.s32.totalorder %s129, %s131
      %p138 = scmp.eq.s32.totalorder %s25, 3
      %p139 = por %p137, %p138
      %p140 = scmp.ne.s32.totalorder %s131, %s132
      %p141 = scmp.eq.s32.totalorder %s25, 0
      %p142 = por %p140, %p141
      %p143 = scmp.ne.s32.totalorder %s131, %s132
      %p144 = scmp.eq.s32.totalorder %s26, 3
      %p145 = por %p143, %p144
      %p147 = scmp.ne.s32.totalorder %s132, %s146
      %p148 = scmp.eq.s32.totalorder %s26, 0
      %p149 = por %p147, %p148
      %s151 = sadd.s32 %s150, 1
      %p154 = scmp.eq.s32.totalorder %s20, 3
      %p155 = scmp.ne.s32.totalorder %s150, %s152
      %p156 = scmp.eq.s32.totalorder %s20, 0
      %p157 = por %p155, %p156
      %p158 = scmp.ne.s32.totalorder %s150, %s152
      %p159 = scmp.eq.s32.totalorder %s25, 3
      %p160 = por %p158, %p159
      %p161 = scmp.ne.s32.totalorder %s152, %s153
      %p162 = scmp.eq.s32.totalorder %s25, 0
      %p163 = por %p161, %p162
      %p164 = scmp.ne.s32.totalorder %s152, %s153
      %p165 = scmp.eq.s32.totalorder %s26, 3
      %p166 = por %p164, %p165
      %p168 = scmp.ne.s32.totalorder %s153, %s167
      %p169 = scmp.eq.s32.totalorder %s26, 0
      %p170 = por %p168, %p169
      %s172 = sadd.s32 %s171, 1
      %p175 = scmp.eq.s32.totalorder %s20, 3
      %p176 = scmp.ne.s32.totalorder %s171, %s173
      %p177 = scmp.eq.s32.totalorder %s20, 0
      %p178 = por %p176, %p177
      %p179 = scmp.ne.s32.totalorder %s171, %s173
      %p180 = scmp.eq.s32.totalorder %s25, 3
      %p181 = por %p179, %p180
      %p182 = scmp.ne.s32.totalorder %s173, %s174
      %p183 = scmp.eq.s32.totalorder %s25, 0
      %p184 = por %p182, %p183
      %p185 = scmp.ne.s32.totalorder %s173, %s174
      %p186 = scmp.eq.s32.totalorder %s26, 3
      %p187 = por %p185, %p186
      %p189 = scmp.ne.s32.totalorder %s174, %s188
      %p190 = scmp.eq.s32.totalorder %s26, 0
      %p191 = por %p189, %p190
      %s193 = sadd.s32 %s192, 1
      %p196 = scmp.eq.s32.totalorder %s20, 3
      %p197 = scmp.ne.s32.totalorder %s192, %s194
      %p198 = scmp.eq.s32.totalorder %s20, 0
      %p199 = por %p197, %p198
      %p200 = scmp.ne.s32.totalorder %s192, %s194
      %p201 = scmp.eq.s32.totalorder %s25, 3
      %p202 = por %p200, %p201
      %p203 = scmp.ne.s32.totalorder %s194, %s195
      %p204 = scmp.eq.s32.totalorder %s25, 0
      %p205 = por %p203, %p204
      %p206 = scmp.ne.s32.totalorder %s194, %s195
      %p207 = scmp.eq.s32.totalorder %s26, 3
      %p208 = por %p206, %p207
      %p210 = scmp.ne.s32.totalorder %s195, %s209
      %p211 = scmp.eq.s32.totalorder %s26, 0
      %p212 = por %p210, %p211
      %s214 = sadd.s32 %s213, 1
      %p217 = scmp.eq.s32.totalorder %s20, 3
      %p218 = scmp.ne.s32.totalorder %s213, %s215
      %p219 = scmp.eq.s32.totalorder %s20, 0
      %p220 = por %p218, %p219
      %p221 = scmp.ne.s32.totalorder %s213, %s215
      %p222 = scmp.eq.s32.totalorder %s25, 3
      %p223 = por %p221, %p222
      %p224 = scmp.ne.s32.totalorder %s215, %s216
      %p225 = scmp.eq.s32.totalorder %s25, 0
      %p226 = por %p224, %p225
      %p227 = scmp.ne.s32.totalorder %s215, %s216
      %p228 = scmp.eq.s32.totalorder %s26, 3
      %p229 = por %p227, %p228
      %p231 = scmp.ne.s32.totalorder %s216, %s230
      %p232 = scmp.eq.s32.totalorder %s26, 0
      %p233 = por %p231, %p232
      %s235 = sadd.s32 %s234, 1
      %p238 = scmp.eq.s32.totalorder %s20, 3
      %p239 = scmp.ne.s32.totalorder %s234, %s236
      %p240 = scmp.eq.s32.totalorder %s20, 0
      %p241 = por %p239, %p240
      %p242 = scmp.ne.s32.totalorder %s234, %s236
      %p243 = scmp.eq.s32.totalorder %s25, 3
      %p244 = por %p242, %p243
      %p245 = scmp.ne.s32.totalorder %s236, %s237
      %p246 = scmp.eq.s32.totalorder %s25, 0
      %p247 = por %p245, %p246
      %p248 = scmp.ne.s32.totalorder %s236, %s237
      %p249 = scmp.eq.s32.totalorder %s26, 3
      %p250 = por %p248, %p249
      %p252 = scmp.ne.s32.totalorder %s237, %s251
      %p253 = scmp.eq.s32.totalorder %s26, 0
      %p254 = por %p252, %p253
      %s256 = sadd.s32 %s255, 1
      %p259 = scmp.eq.s32.totalorder %s20, 3
      %p260 = scmp.ne.s32.totalorder %s255, %s257
      %p261 = scmp.eq.s32.totalorder %s20, 0
      %p262 = por %p260, %p261
      %p263 = scmp.ne.s32.totalorder %s255, %s257
      %p264 = scmp.eq.s32.totalorder %s25, 3
      %p265 = por %p263, %p264
      %p266 = scmp.ne.s32.totalorder %s257, %s258
      %p267 = scmp.eq.s32.totalorder %s25, 0
      %p268 = por %p266, %p267
      %p269 = scmp.ne.s32.totalorder %s257, %s258
      %p270 = scmp.eq.s32.totalorder %s26, 3
      %p271 = por %p269, %p270
      %p273 = scmp.ne.s32.totalorder %s258, %s272
      %p274 = scmp.eq.s32.totalorder %s26, 0
      %p275 = por %p273, %p274
      %s276 = ssub.s32 %s27, %s39
      %s277 = ssub.s32 %s28, %s35
      %s278 = sor.u32 %s276, %s277
      %p279 = scmp.eq.s32.totalorder %s278, 0
      %s281 = sadd.s32 %s280, 1
      %s282 = scalar_select %p279, %s280, %s281
      %p285 = pneg %p279
      %p286 = scmp.eq.s32.totalorder %s20, 3
      %p287 = por %p285, %p286
      %p288 = scmp.ne.s32.totalorder %s280, %s283
      %p289 = scmp.eq.s32.totalorder %s20, 0
      %p290 = por %p288, %p289
      %p291 = scmp.ne.s32.totalorder %s280, %s283
      %p292 = scmp.eq.s32.totalorder %s25, 3
      %p293 = por %p291, %p292
      %p294 = scmp.ne.s32.totalorder %s283, %s284
      %p295 = scmp.eq.s32.totalorder %s25, 0
      %p296 = por %p294, %p295
      %p297 = scmp.ne.s32.totalorder %s283, %s284
      %p298 = scmp.eq.s32.totalorder %s26, 3
      %p299 = por %p297, %p298
      %p301 = scmp.ne.s32.totalorder %s284, %s300
      %p302 = scmp.eq.s32.totalorder %s26, 0
      %p303 = por %p301, %p302
      %p304 = scmp.le.s32.totalorder 1, %s20
      %p305 = scmp.lt.s32.totalorder %s20, 5
      %p306 = pnand %p304, %p305
      %p307 = pneg %p306
      // Predicated region
      $region9: #{tpu_custom_call.1} parent=5 // pred_check
        _
      $region10: #{tpu_custom_call.1} parent=5 // pred_check_branch
        %309 = sbr.rel (%p306) target = $region12
      $region11: #{tpu_custom_call.1} parent=5 // pred_region
        %s310 = ssub.s32 %s20, 1
        // Predicated region
        $region13: #{tpu_custom_call.1} parent=11 // pred_check
          %p311 = pneg %p79
        $region14: #{tpu_custom_call.1} parent=11 // pred_check_branch
          %313 = sbr.rel (%p311) target = $region16
        $region15: #{tpu_custom_call.1} parent=11 // pred_region
          _
        $region16: #{tpu_custom_call.1} parent=11 // pred_fallthru
          _
        // Predicated region
        $region17: #{tpu_custom_call.1} parent=11 // pred_check
          %p314 = pneg %p100
        $region18: #{tpu_custom_call.1} parent=11 // pred_check_branch
          %316 = sbr.rel (%p314) target = $region20
        $region19: #{tpu_custom_call.1} parent=11 // pred_region
          _
        $region20: #{tpu_custom_call.1} parent=11 // pred_fallthru
          _
        // Predicated region
        $region21: #{tpu_custom_call.1} parent=11 // pred_check
          %p317 = pneg %p121
        $region22: #{tpu_custom_call.1} parent=11 // pred_check_branch
          %319 = sbr.rel (%p317) target = $region24
        $region23: #{tpu_custom_call.1} parent=11 // pred_region
          _
        $region24: #{tpu_custom_call.1} parent=11 // pred_fallthru
          _
        // Predicated region
        $region25: #{tpu_custom_call.1} parent=11 // pred_check
          %p320 = pneg %p142
        $region26: #{tpu_custom_call.1} parent=11 // pred_check_branch
          %322 = sbr.rel (%p320) target = $region28
        $region27: #{tpu_custom_call.1} parent=11 // pred_region
          _
        $region28: #{tpu_custom_call.1} parent=11 // pred_fallthru
          _
        // Predicated region
        $region29: #{tpu_custom_call.1} parent=11 // pred_check
          %p323 = pneg %p163
        $region30: #{tpu_custom_call.1} parent=11 // pred_check_branch
          %325 = sbr.rel (%p323) target = $region32
        $region31: #{tpu_custom_call.1} parent=11 // pred_region
          _
        $region32: #{tpu_custom_call.1} parent=11 // pred_fallthru
          _
        // Predicated region
        $region33: #{tpu_custom_call.1} parent=11 // pred_check
          %p326 = pneg %p184
        $region34: #{tpu_custom_call.1} parent=11 // pred_check_branch
          %328 = sbr.rel (%p326) target = $region36
        $region35: #{tpu_custom_call.1} parent=11 // pred_region
          _
        $region36: #{tpu_custom_call.1} parent=11 // pred_fallthru
          _
        // Predicated region
        $region37: #{tpu_custom_call.1} parent=11 // pred_check
          %p329 = pneg %p205
        $region38: #{tpu_custom_call.1} parent=11 // pred_check_branch
          %331 = sbr.rel (%p329) target = $region40
        $region39: #{tpu_custom_call.1} parent=11 // pred_region
          _
        $region40: #{tpu_custom_call.1} parent=11 // pred_fallthru
          _
        // Predicated region
        $region41: #{tpu_custom_call.1} parent=11 // pred_check
          %p332 = pneg %p226
        $region42: #{tpu_custom_call.1} parent=11 // pred_check_branch
          %334 = sbr.rel (%p332) target = $region44
        $region43: #{tpu_custom_call.1} parent=11 // pred_region
          _
        $region44: #{tpu_custom_call.1} parent=11 // pred_fallthru
          _
        // Predicated region
        $region45: #{tpu_custom_call.1} parent=11 // pred_check
          %p335 = pneg %p247
        $region46: #{tpu_custom_call.1} parent=11 // pred_check_branch
          %337 = sbr.rel (%p335) target = $region48
        $region47: #{tpu_custom_call.1} parent=11 // pred_region
          _
        $region48: #{tpu_custom_call.1} parent=11 // pred_fallthru
          _
        // Predicated region
        $region49: #{tpu_custom_call.1} parent=11 // pred_check
          %p338 = pneg %p268
        $region50: #{tpu_custom_call.1} parent=11 // pred_check_branch
          %340 = sbr.rel (%p338) target = $region52
        $region51: #{tpu_custom_call.1} parent=11 // pred_region
          _
        $region52: #{tpu_custom_call.1} parent=11 // pred_fallthru
          _
      $region12: #{tpu_custom_call.1} parent=5 // pred_fallthru
        _
      %p341 = scmp.lt.s32.totalorder %s20, 4
      // Predicated region
      $region53: #{tpu_custom_call.1} parent=5 // pred_check
        %p342 = pneg %p341
      $region54: #{tpu_custom_call.1} parent=5 // pred_check_branch
        %344 = sbr.rel (%p342) target = $region56
      $region55: #{tpu_custom_call.1} parent=5 // pred_region
        // Predicated region
        $region57: #{tpu_custom_call.1} parent=55 // pred_check
          %p345 = pneg %p52
        $region58: #{tpu_custom_call.1} parent=55 // pred_check_branch
          %347 = sbr.rel (%p345) target = $region60
        $region59: #{tpu_custom_call.1} parent=55 // pred_region
          %p348 = scmp.lt.s32.totalorder %s27, 1
          %s349 = scalar_select %p348, %s27, 1
          %s350 = smul.addr %s349, 2
          %s351 = smul.addr %s350, 8
          %s352 = scalar_lea.vmem %s0, %s351
        $region60: #{tpu_custom_call.1} parent=55 // pred_fallthru
          _
      $region56: #{tpu_custom_call.1} parent=5 // pred_fallthru
        _
      %p353 = scmp.le.s32.totalorder 1, %s20
      %p354 = scmp.lt.s32.totalorder %s20, 5
      %p355 = pnand %p353, %p354
      %p356 = pneg %p355
      // Predicated region
      $region61: #{tpu_custom_call.1} parent=5 // pred_check
        _
      $region62: #{tpu_custom_call.1} parent=5 // pred_check_branch
        %358 = sbr.rel (%p355) target = $region64
      $region63: #{tpu_custom_call.1} parent=5 // pred_region
        %s359 = ssub.s32 %s20, 1
        %p360 = scmp.lt.s32.totalorder %s29, 1
        %s361 = scalar_select %p360, %s29, 1
        %s362 = smul.addr %s361, 2
        %s363 = smul.addr %s362, 8
        %s364 = scalar_lea.vmem %s0, %s363
        %p365 = pneg %p58
        %p366 = pneg %p55
        %p367 = pneg %p79
        %p368 = pneg %p76
        %p369 = pneg %p100
        %p370 = pneg %p97
        %p371 = pneg %p121
        %p372 = pneg %p118
        %p373 = pneg %p142
        %p374 = pneg %p139
        %p375 = pneg %p163
        %p376 = pneg %p160
        %p377 = pneg %p184
        %p378 = pneg %p181
        %p379 = pneg %p205
        %p380 = pneg %p202
        %p381 = pneg %p226
        %p382 = pneg %p223
        %p383 = pneg %p247
        %p384 = pneg %p244
        %p385 = pneg %p268
        %p386 = pneg %p265
        %p387 = pneg %p296
        %p388 = pneg %p293
        %s389 = sand.u32 %s283, 1
        %s390 = scalar_lea.sflag [#allocation5], %s389
        %s391 = sand.u32 %s283, 1
        %s392 = smul.addr %s391, 8
        %s393 = scalar_lea.vmem [#allocation4], %s392
        %p394 = scmp.lt.s32.totalorder %s29, 1
        %s395 = scalar_select %p394, %s29, 1
        %s396 = smul.addr %s395, 2
        %s397 = smul.addr %s396, 8
        %s398 = scalar_lea.vmem %s0, %s397
        %p400 = scmp.eq.s32.totalorder %s30, 0
        // Predicated region
        $region65: #{tpu_custom_call.1} parent=63 // pred_check
          %p401 = pneg %p400
        $region66: #{tpu_custom_call.1} parent=63 // pred_check_branch
          %403 = sbr.rel (%p401) target = $region68
        $region67: #{tpu_custom_call.1} parent=63 // pred_region
          %v404 = vld [vmem:[%s398] sm:$0xff]
          %v405 = vld [vmem:[%s398 + $0x8] sm:$0xff]
          %406 = vadd.xlane.f32.xlu0 %v404
          %v407 = vpop.xlane.xlu0 %406
          %408 = vadd.xlane.f32.xlu0 %v405
          %v409 = vpop.xlane.xlu0 %408
          %v410 = vrcp.pop 128.0
          %v411 = vmul.f32 %v407, %v410
          %v412 = vmul.f32 %v409, %v410
          %v413 = vsub.f32 %v404, %v411
          %v414 = vsub.f32 %v405, %v412
          %v415 = vmul.f32 %v413, %v413
          %v416 = vmul.f32 %v414, %v414
          %417 = vadd.xlane.f32.xlu0 %v415
          %v418 = vpop.xlane.xlu0 %417
          %419 = vadd.xlane.f32.xlu0 %v416
          %v420 = vpop.xlane.xlu0 %419
          %v421 = vmul.f32 %v418, %v410
          %v422 = vmul.f32 %v420, %v410
          %v423 = vadd.f32 %v421, 1e-05
          %v424 = vadd.f32 %v422, 1e-05
          %v425 = vrsqrt.pop %v423
          %v426 = vrsqrt.pop %v424
          %v427 = vmul.f32 %v413, %v425
          %v428 = vmul.f32 %v414, %v426
          %v429 = vld [vmem:[%s1] sm:$0x1]
          %v431 = vlaneseq
          %v432 = vshrl.u32 %v431, 7
          %v433 = vsub.s32 0, %v432
          %v434 = vrot.slane %v429, %v433
          %v436 = vmul.f32 %v427, %v434
          %v437 = vmul.f32 %v428, %v434
          %v438 = vld [vmem:[%s2] sm:$0x1]
          %v440 = vlaneseq
          %v441 = vshrl.u32 %v440, 7
          %v442 = vsub.s32 0, %v441
          %v443 = vrot.slane %v438, %v442
          %v445 = vadd.f32 %v436, %v443
          %v446 = vadd.f32 %v437, %v443
          %v447 = vpack.c.bf16 %v446, %v445
          %v448 = vld [vmem:[%s5] sm:$0xf]
          %v449 = vld [vmem:[%s5 + $0x4] sm:$0xf]
          %v450 = vld [vmem:[%s5 + $0x8] sm:$0xf]
          %v451 = vld [vmem:[%s5 + $0xc] sm:$0xf]
          %v452 = vld [vmem:[%s5 + $0x10] sm:$0xf]
          %v453 = vld [vmem:[%s5 + $0x14] sm:$0xf]
          %v454 = vld [vmem:[%s5 + $0x18] sm:$0xf]
          %v455 = vld [vmem:[%s5 + $0x1c] sm:$0xf]
          %v456 = vld [vmem:[%s5 + $0x20] sm:$0xf]
          %v457 = vld [vmem:[%s5 + $0x24] sm:$0xf]
          %v458 = vld [vmem:[%s5 + $0x28] sm:$0xf]
          %v459 = vld [vmem:[%s5 + $0x2c] sm:$0xf]
          %v460 = vld [vmem:[%s5 + $0x30] sm:$0xf]
          %v461 = vld [vmem:[%s5 + $0x34] sm:$0xf]
          %v462 = vld [vmem:[%s5 + $0x38] sm:$0xf]
          %v463 = vld [vmem:[%s5 + $0x3c] sm:$0xf]
          %v464 = vld [vmem:[%s6] sm:$0x1]
          %v466 = vlaneseq
          %v467 = vshrl.u32 %v466, 7
          %v468 = vsub.s32 0, %v467
          %v469 = vrot.slane %v464, %v468
          %v487 = vunpack.c.l.b16 %v448
          %v488 = vunpack.c.l.b16 %v449
          %v489 = vunpack.c.l.b16 %v450
          %v490 = vunpack.c.l.b16 %v451
          %v491 = vunpack.c.l.b16 %v452
          %v492 = vunpack.c.l.b16 %v453
          %v493 = vunpack.c.l.b16 %v454
          %v494 = vunpack.c.l.b16 %v455
          %v495 = vunpack.c.l.b16 %v456
          %v496 = vunpack.c.l.b16 %v457
          %v497 = vunpack.c.l.b16 %v458
          %v498 = vunpack.c.l.b16 %v459
          %v499 = vunpack.c.l.b16 %v460
          %v500 = vunpack.c.l.b16 %v461
          %v501 = vunpack.c.l.b16 %v462
          %v502 = vunpack.c.l.b16 %v463
          %v503 = vpack.c.b16 %v488, %v487
          %v504 = vpack.c.b16 %v490, %v489
          %v505 = vpack.c.b16 %v492, %v491
          %v506 = vpack.c.b16 %v494, %v493
          %v507 = vpack.c.b16 %v496, %v495
          %v508 = vpack.c.b16 %v498, %v497
          %v509 = vpack.c.b16 %v500, %v499
          %v510 = vpack.c.b16 %v502, %v501
          %519 = vmatprep.subr.bf16.mxu0 0
          %520 = vmatpush1.bf16.msra.mxu0 %v503
          %521 = vmatprep.subr.bf16.mxu0 0
          %522 = vmatpush1.bf16.msra.mxu0 %v504
          %523 = vmatprep.subr.bf16.mxu0 0
          %524 = vmatpush1.bf16.msra.mxu0 %v505
          %525 = vmatprep.subr.bf16.mxu0 0
          %526 = vmatpush1.bf16.msra.mxu0 %v506
          %527 = vmatprep.subr.bf16.mxu0 0
          %528 = vmatpush1.bf16.msra.mxu0 %v507
          %529 = vmatprep.subr.bf16.mxu0 0
          %530 = vmatpush1.bf16.msra.mxu0 %v508
          %531 = vmatprep.subr.bf16.mxu0 0
          %532 = vmatpush1.bf16.msra.mxu0 %v509
          %533 = vmatprep.subr.bf16.mxu0 0
          %534 = vmatpush1.bf16.msra.mxu0 %v510
          %535 = vmatprep.subr.bf16.mxu0 0
          %536 = vmatpush1.bf16.msra.mxu0 0
          %537 = vmatprep.subr.bf16.mxu0 0
          %538 = vmatpush1.bf16.msra.mxu0 0
          %539 = vmatprep.subr.bf16.mxu0 0
          %540 = vmatpush1.bf16.msra.mxu0 0
          %541 = vmatprep.subr.bf16.mxu0 0
          %542 = vmatpush1.bf16.msra.mxu0 0
          %543 = vmatprep.subr.bf16.mxu0 0
          %544 = vmatpush1.bf16.msra.mxu0 0
          %545 = vmatprep.subr.bf16.mxu0 0
          %546 = vmatpush1.bf16.msra.mxu0 0
          %547 = vmatprep.subr.bf16.mxu0 0
          %548 = vmatpush1.bf16.msra.mxu0 0
          %549 = vmatprep.subr.bf16.mxu0 0
          %550 = vmatpush1.bf16.msra.mxu0 0
          %551 = vmatprep.mubr.bf16.mxu0 0
          %552 = vmatmul.mubr.bf16.gmra.mrb[0].mxu0 %v447
          %v553 = vpop.f32.mrb[0].mxu0
          %v554 = vadd.f32 %v469, %v553
          %v555 = vpop.f32.mrb[0].mxu0
          %v556 = vpop.f32.mrb[0].mxu0
          %v557 = vadd.f32 %v469, %v556
          %v558 = vpop.f32.mrb[0].mxu0
          %559 = vdwg.mxu0
          %v560 = vpack.c.bf16 %v557, %v554
          %vm561 = vcmask 261120
          %562 = vst.msk [vmem:[#allocation2] sm:$0xff] %vm561, %v560
          %v563 = vld [vmem:[%s7] sm:$0xf]
          %v564 = vld [vmem:[%s7 + $0x4] sm:$0xf]
          %v565 = vld [vmem:[%s7 + $0x8] sm:$0xf]
          %v566 = vld [vmem:[%s7 + $0xc] sm:$0xf]
          %v567 = vld [vmem:[%s7 + $0x10] sm:$0xf]
          %v568 = vld [vmem:[%s7 + $0x14] sm:$0xf]
          %v569 = vld [vmem:[%s7 + $0x18] sm:$0xf]
          %v570 = vld [vmem:[%s7 + $0x1c] sm:$0xf]
          %v571 = vld [vmem:[%s7 + $0x20] sm:$0xf]
          %v572 = vld [vmem:[%s7 + $0x24] sm:$0xf]
          %v573 = vld [vmem:[%s7 + $0x28] sm:$0xf]
          %v574 = vld [vmem:[%s7 + $0x2c] sm:$0xf]
          %v575 = vld [vmem:[%s7 + $0x30] sm:$0xf]
          %v576 = vld [vmem:[%s7 + $0x34] sm:$0xf]
          %v577 = vld [vmem:[%s7 + $0x38] sm:$0xf]
          %v578 = vld [vmem:[%s7 + $0x3c] sm:$0xf]
          %v579 = vld [vmem:[%s8] sm:$0x1]
          %v581 = vlaneseq
          %v582 = vshrl.u32 %v581, 7
          %v583 = vsub.s32 0, %v582
          %v584 = vrot.slane %v579, %v583
          %v602 = vunpack.c.l.b16 %v563
          %v603 = vunpack.c.l.b16 %v564
          %v604 = vunpack.c.l.b16 %v565
          %v605 = vunpack.c.l.b16 %v566
          %v606 = vunpack.c.l.b16 %v567
          %v607 = vunpack.c.l.b16 %v568
          %v608 = vunpack.c.l.b16 %v569
          %v609 = vunpack.c.l.b16 %v570
          %v610 = vunpack.c.l.b16 %v571
          %v611 = vunpack.c.l.b16 %v572
          %v612 = vunpack.c.l.b16 %v573
          %v613 = vunpack.c.l.b16 %v574
          %v614 = vunpack.c.l.b16 %v575
          %v615 = vunpack.c.l.b16 %v576
          %v616 = vunpack.c.l.b16 %v577
          %v617 = vunpack.c.l.b16 %v578
          %v618 = vpack.c.b16 %v603, %v602
          %v619 = vpack.c.b16 %v605, %v604
          %v620 = vpack.c.b16 %v607, %v606
          %v621 = vpack.c.b16 %v609, %v608
          %v622 = vpack.c.b16 %v611, %v610
          %v623 = vpack.c.b16 %v613, %v612
          %v624 = vpack.c.b16 %v615, %v614
          %v625 = vpack.c.b16 %v617, %v616
          %634 = vmatprep.subr.bf16.mxu0 0
          %635 = vmatpush1.bf16.msra.mxu0 %v618
          %636 = vmatprep.subr.bf16.mxu0 0
          %637 = vmatpush1.bf16.msra.mxu0 %v619
          %638 = vmatprep.subr.bf16.mxu0 0
          %639 = vmatpush1.bf16.msra.mxu0 %v620
          %640 = vmatprep.subr.bf16.mxu0 0
          %641 = vmatpush1.bf16.msra.mxu0 %v621
          %642 = vmatprep.subr.bf16.mxu0 0
          %643 = vmatpush1.bf16.msra.mxu0 %v622
          %644 = vmatprep.subr.bf16.mxu0 0
          %645 = vmatpush1.bf16.msra.mxu0 %v623
          %646 = vmatprep.subr.bf16.mxu0 0
          %647 = vmatpush1.bf16.msra.mxu0 %v624
          %648 = vmatprep.subr.bf16.mxu0 0
          %649 = vmatpush1.bf16.msra.mxu0 %v625
          %650 = vmatprep.subr.bf16.mxu0 0
          %651 = vmatpush1.bf16.msra.mxu0 0
          %652 = vmatprep.subr.bf16.mxu0 0
          %653 = vmatpush1.bf16.msra.mxu0 0
          %654 = vmatprep.subr.bf16.mxu0 0
          %655 = vmatpush1.bf16.msra.mxu0 0
          %656 = vmatprep.subr.bf16.mxu0 0
          %657 = vmatpush1.bf16.msra.mxu0 0
          %658 = vmatprep.subr.bf16.mxu0 0
          %659 = vmatpush1.bf16.msra.mxu0 0
          %660 = vmatprep.subr.bf16.mxu0 0
          %661 = vmatpush1.bf16.msra.mxu0 0
          %662 = vmatprep.subr.bf16.mxu0 0
          %663 = vmatpush1.bf16.msra.mxu0 0
          %664 = vmatprep.subr.bf16.mxu0 0
          %665 = vmatpush1.bf16.msra.mxu0 0
          %666 = vmatprep.mubr.bf16.mxu0 0
          %667 = vmatmul.mubr.bf16.gmra.mrb[0].mxu0 %v447
          %v668 = vpop.f32.mrb[0].mxu0
          %v669 = vadd.f32 %v584, %v668
          %v670 = vpop.f32.mrb[0].mxu0
          %v671 = vpop.f32.mrb[0].mxu0
          %v672 = vadd.f32 %v584, %v671
          %v673 = vpop.f32.mrb[0].mxu0
          %674 = vdwg.mxu0
          %v675 = vpack.c.bf16 %v672, %v669
          %676 = vst.msk [vmem:[#allocation3] sm:$0xff] %vm561, %v675
          %s677 = scalar_lea.vmem %s5, 64
          %v678 = vld [vmem:[%s677] sm:$0xf]
          %v679 = vld [vmem:[%s677 + $0x4] sm:$0xf]
          %v680 = vld [vmem:[%s677 + $0x8] sm:$0xf]
          %v681 = vld [vmem:[%s677 + $0xc] sm:$0xf]
          %v682 = vld [vmem:[%s677 + $0x10] sm:$0xf]
          %v683 = vld [vmem:[%s677 + $0x14] sm:$0xf]
          %v684 = vld [vmem:[%s677 + $0x18] sm:$0xf]
          %v685 = vld [vmem:[%s677 + $0x1c] sm:$0xf]
          %v686 = vld [vmem:[%s677 + $0x20] sm:$0xf]
          %v687 = vld [vmem:[%s677 + $0x24] sm:$0xf]
          %v688 = vld [vmem:[%s677 + $0x28] sm:$0xf]
          %v689 = vld [vmem:[%s677 + $0x2c] sm:$0xf]
          %v690 = vld [vmem:[%s677 + $0x30] sm:$0xf]
          %v691 = vld [vmem:[%s677 + $0x34] sm:$0xf]
          %v692 = vld [vmem:[%s677 + $0x38] sm:$0xf]
          %v693 = vld [vmem:[%s677 + $0x3c] sm:$0xf]
          %s694 = scalar_lea.vmem %s6, 1
          %v695 = vld [vmem:[%s694] sm:$0x1]
          %v697 = vlaneseq
          %v698 = vshrl.u32 %v697, 7
          %v699 = vsub.s32 0, %v698
          %v700 = vrot.slane %v695, %v699
          %v718 = vunpack.c.l.b16 %v678
          %v719 = vunpack.c.l.b16 %v679
          %v720 = vunpack.c.l.b16 %v680
          %v721 = vunpack.c.l.b16 %v681
          %v722 = vunpack.c.l.b16 %v682
          %v723 = vunpack.c.l.b16 %v683
          %v724 = vunpack.c.l.b16 %v684
          %v725 = vunpack.c.l.b16 %v685
          %v726 = vunpack.c.l.b16 %v686
          %v727 = vunpack.c.l.b16 %v687
          %v728 = vunpack.c.l.b16 %v688
          %v729 = vunpack.c.l.b16 %v689
          %v730 = vunpack.c.l.b16 %v690
          %v731 = vunpack.c.l.b16 %v691
          %v732 = vunpack.c.l.b16 %v692
          %v733 = vunpack.c.l.b16 %v693
          %v734 = vpack.c.b16 %v719, %v718
          %v735 = vpack.c.b16 %v721, %v720
          %v736 = vpack.c.b16 %v723, %v722
          %v737 = vpack.c.b16 %v725, %v724
          %v738 = vpack.c.b16 %v727, %v726
          %v739 = vpack.c.b16 %v729, %v728
          %v740 = vpack.c.b16 %v731, %v730
          %v741 = vpack.c.b16 %v733, %v732
          %750 = vmatprep.subr.bf16.mxu0 0
          %751 = vmatpush1.bf16.msra.mxu0 %v734
          %752 = vmatprep.subr.bf16.mxu0 0
          %753 = vmatpush1.bf16.msra.mxu0 %v735
          %754 = vmatprep.subr.bf16.mxu0 0
          %755 = vmatpush1.bf16.msra.mxu0 %v736
          %756 = vmatprep.subr.bf16.mxu0 0
          %757 = vmatpush1.bf16.msra.mxu0 %v737
          %758 = vmatprep.subr.bf16.mxu0 0
          %759 = vmatpush1.bf16.msra.mxu0 %v738
          %760 = vmatprep.subr.bf16.mxu0 0
          %761 = vmatpush1.bf16.msra.mxu0 %v739
          %762 = vmatprep.subr.bf16.mxu0 0
          %763 = vmatpush1.bf16.msra.mxu0 %v740
          %764 = vmatprep.subr.bf16.mxu0 0
          %765 = vmatpush1.bf16.msra.mxu0 %v741
          %766 = vmatprep.subr.bf16.mxu0 0
          %767 = vmatpush1.bf16.msra.mxu0 0
          %768 = vmatprep.subr.bf16.mxu0 0
          %769 = vmatpush1.bf16.msra.mxu0 0
          %770 = vmatprep.subr.bf16.mxu0 0
          %771 = vmatpush1.bf16.msra.mxu0 0
          %772 = vmatprep.subr.bf16.mxu0 0
          %773 = vmatpush1.bf16.msra.mxu0 0
          %774 = vmatprep.subr.bf16.mxu0 0
          %775 = vmatpush1.bf16.msra.mxu0 0
          %776 = vmatprep.subr.bf16.mxu0 0
          %777 = vmatpush1.bf16.msra.mxu0 0
          %778 = vmatprep.subr.bf16.mxu0 0
          %779 = vmatpush1.bf16.msra.mxu0 0
          %780 = vmatprep.subr.bf16.mxu0 0
          %781 = vmatpush1.bf16.msra.mxu0 0
          %782 = vmatprep.mubr.bf16.mxu0 0
          %783 = vmatmul.mubr.bf16.gmra.mrb[0].mxu0 %v447
          %v784 = vpop.f32.mrb[0].mxu0
          %v785 = vadd.f32 %v700, %v784
          %v786 = vpop.f32.mrb[0].mxu0
          %v787 = vpop.f32.mrb[0].mxu0
          %v788 = vadd.f32 %v700, %v787
          %v789 = vpop.f32.mrb[0].mxu0
          %790 = vdwg.mxu0
          %v791 = vpack.c.bf16 %v788, %v785
          %s792 = scalar_lea.vmem [#allocation2], 8
          %793 = vst.msk [vmem:[%s792] sm:$0xff] %vm561, %v791
          %s794 = scalar_lea.vmem %s7, 64
          %v795 = vld [vmem:[%s794] sm:$0xf]
          %v796 = vld [vmem:[%s794 + $0x4] sm:$0xf]
          %v797 = vld [vmem:[%s794 + $0x8] sm:$0xf]
          %v798 = vld [vmem:[%s794 + $0xc] sm:$0xf]
          %v799 = vld [vmem:[%s794 + $0x10] sm:$0xf]
          %v800 = vld [vmem:[%s794 + $0x14] sm:$0xf]
          %v801 = vld [vmem:[%s794 + $0x18] sm:$0xf]
          %v802 = vld [vmem:[%s794 + $0x1c] sm:$0xf]
          %v803 = vld [vmem:[%s794 + $0x20] sm:$0xf]
          %v804 = vld [vmem:[%s794 + $0x24] sm:$0xf]
          %v805 = vld [vmem:[%s794 + $0x28] sm:$0xf]
          %v806 = vld [vmem:[%s794 + $0x2c] sm:$0xf]
          %v807 = vld [vmem:[%s794 + $0x30] sm:$0xf]
          %v808 = vld [vmem:[%s794 + $0x34] sm:$0xf]
          %v809 = vld [vmem:[%s794 + $0x38] sm:$0xf]
          %v810 = vld [vmem:[%s794 + $0x3c] sm:$0xf]
          %s811 = scalar_lea.vmem %s8, 1
          %v812 = vld [vmem:[%s811] sm:$0x1]
          %v814 = vlaneseq
          %v815 = vshrl.u32 %v814, 7
          %v816 = vsub.s32 0, %v815
          %v817 = vrot.slane %v812, %v816
          %v835 = vunpack.c.l.b16 %v795
          %v836 = vunpack.c.l.b16 %v796
          %v837 = vunpack.c.l.b16 %v797
          %v838 = vunpack.c.l.b16 %v798
          %v839 = vunpack.c.l.b16 %v799
          %v840 = vunpack.c.l.b16 %v800
          %v841 = vunpack.c.l.b16 %v801
          %v842 = vunpack.c.l.b16 %v802
          %v843 = vunpack.c.l.b16 %v803
          %v844 = vunpack.c.l.b16 %v804
          %v845 = vunpack.c.l.b16 %v805
          %v846 = vunpack.c.l.b16 %v806
          %v847 = vunpack.c.l.b16 %v807
          %v848 = vunpack.c.l.b16 %v808
          %v849 = vunpack.c.l.b16 %v809
          %v850 = vunpack.c.l.b16 %v810
          %v851 = vpack.c.b16 %v836, %v835
          %v852 = vpack.c.b16 %v838, %v837
          %v853 = vpack.c.b16 %v840, %v839
          %v854 = vpack.c.b16 %v842, %v841
          %v855 = vpack.c.b16 %v844, %v843
          %v856 = vpack.c.b16 %v846, %v845
          %v857 = vpack.c.b16 %v848, %v847
          %v858 = vpack.c.b16 %v850, %v849
          %867 = vmatprep.subr.bf16.mxu0 0
          %868 = vmatpush1.bf16.msra.mxu0 %v851
          %869 = vmatprep.subr.bf16.mxu0 0
          %870 = vmatpush1.bf16.msra.mxu0 %v852
          %871 = vmatprep.subr.bf16.mxu0 0
          %872 = vmatpush1.bf16.msra.mxu0 %v853
          %873 = vmatprep.subr.bf16.mxu0 0
          %874 = vmatpush1.bf16.msra.mxu0 %v854
          %875 = vmatprep.subr.bf16.mxu0 0
          %876 = vmatpush1.bf16.msra.mxu0 %v855
          %877 = vmatprep.subr.bf16.mxu0 0
          %878 = vmatpush1.bf16.msra.mxu0 %v856
          %879 = vmatprep.subr.bf16.mxu0 0
          %880 = vmatpush1.bf16.msra.mxu0 %v857
          %881 = vmatprep.subr.bf16.mxu0 0
          %882 = vmatpush1.bf16.msra.mxu0 %v858
          %883 = vmatprep.subr.bf16.mxu0 0
          %884 = vmatpush1.bf16.msra.mxu0 0
          %885 = vmatprep.subr.bf16.mxu0 0
          %886 = vmatpush1.bf16.msra.mxu0 0
          %887 = vmatprep.subr.bf16.mxu0 0
          %888 = vmatpush1.bf16.msra.mxu0 0
          %889 = vmatprep.subr.bf16.mxu0 0
          %890 = vmatpush1.bf16.msra.mxu0 0
          %891 = vmatprep.subr.bf16.mxu0 0
          %892 = vmatpush1.bf16.msra.mxu0 0
          %893 = vmatprep.subr.bf16.mxu0 0
          %894 = vmatpush1.bf16.msra.mxu0 0
          %895 = vmatprep.subr.bf16.mxu0 0
          %896 = vmatpush1.bf16.msra.mxu0 0
          %897 = vmatprep.subr.bf16.mxu0 0
          %898 = vmatpush1.bf16.msra.mxu0 0
          %899 = vmatprep.mubr.bf16.mxu0 0
          %900 = vmatmul.mubr.bf16.gmra.mrb[0].mxu0 %v447
          %v901 = vpop.f32.mrb[0].mxu0
          %v902 = vadd.f32 %v817, %v901
          %v903 = vpop.f32.mrb[0].mxu0
          %v904 = vpop.f32.mrb[0].mxu0
          %v905 = vadd.f32 %v817, %v904
          %v906 = vpop.f32.mrb[0].mxu0
          %907 = vdwg.mxu0
          %v908 = vpack.c.bf16 %v905, %v902
          %s909 = scalar_lea.vmem [#allocation3], 8
          %910 = vst.msk [vmem:[%s909] sm:$0xff] %vm561, %v908
          %s911 = scalar_lea.vmem %s5, 128
          %v912 = vld [vmem:[%s911] sm:$0xf]
          %v913 = vld [vmem:[%s911 + $0x4] sm:$0xf]
          %v914 = vld [vmem:[%s911 + $0x8] sm:$0xf]
          %v915 = vld [vmem:[%s911 + $0xc] sm:$0xf]
          %v916 = vld [vmem:[%s911 + $0x10] sm:$0xf]
          %v917 = vld [vmem:[%s911 + $0x14] sm:$0xf]
          %v918 = vld [vmem:[%s911 + $0x18] sm:$0xf]
          %v919 = vld [vmem:[%s911 + $0x1c] sm:$0xf]
          %v920 = vld [vmem:[%s911 + $0x20] sm:$0xf]
          %v921 = vld [vmem:[%s911 + $0x24] sm:$0xf]
          %v922 = vld [vmem:[%s911 + $0x28] sm:$0xf]
          %v923 = vld [vmem:[%s911 + $0x2c] sm:$0xf]
          %v924 = vld [vmem:[%s911 + $0x30] sm:$0xf]
          %v925 = vld [vmem:[%s911 + $0x34] sm:$0xf]
          %v926 = vld [vmem:[%s911 + $0x38] sm:$0xf]
          %v927 = vld [vmem:[%s911 + $0x3c] sm:$0xf]
          %s928 = scalar_lea.vmem %s6, 2
          %v929 = vld [vmem:[%s928] sm:$0x1]
          %v931 = vlaneseq
          %v932 = vshrl.u32 %v931, 7
          %v933 = vsub.s32 0, %v932
          %v934 = vrot.slane %v929, %v933
          %v952 = vunpack.c.l.b16 %v912
          %v953 = vunpack.c.l.b16 %v913
          %v954 = vunpack.c.l.b16 %v914
          %v955 = vunpack.c.l.b16 %v915
          %v956 = vunpack.c.l.b16 %v916
          %v957 = vunpack.c.l.b16 %v917
          %v958 = vunpack.c.l.b16 %v918
          %v959 = vunpack.c.l.b16 %v919
          %v960 = vunpack.c.l.b16 %v920
          %v961 = vunpack.c.l.b16 %v921
          %v962 = vunpack.c.l.b16 %v922
          %v963 = vunpack.c.l.b16 %v923
          %v964 = vunpack.c.l.b16 %v924
          %v965 = vunpack.c.l.b16 %v925
          %v966 = vunpack.c.l.b16 %v926
          %v967 = vunpack.c.l.b16 %v927
          %v968 = vpack.c.b16 %v953, %v952
          %v969 = vpack.c.b16 %v955, %v954
          %v970 = vpack.c.b16 %v957, %v956
          %v971 = vpack.c.b16 %v959, %v958
          %v972 = vpack.c.b16 %v961, %v960
          %v973 = vpack.c.b16 %v963, %v962
          %v974 = vpack.c.b16 %v965, %v964
          %v975 = vpack.c.b16 %v967, %v966
          %984 = vmatprep.subr.bf16.mxu0 0
          %985 = vmatpush1.bf16.msra.mxu0 %v968
          %986 = vmatprep.subr.bf16.mxu0 0
          %987 = vmatpush1.bf16.msra.mxu0 %v969
          %988 = vmatprep.subr.bf16.mxu0 0
          %989 = vmatpush1.bf16.msra.mxu0 %v970
          %990 = vmatprep.subr.bf16.mxu0 0
          %991 = vmatpush1.bf16.msra.mxu0 %v971
          %992 = vmatprep.subr.bf16.mxu0 0
          %993 = vmatpush1.bf16.msra.mxu0 %v972
          %994 = vmatprep.subr.bf16.mxu0 0
          %995 = vmatpush1.bf16.msra.mxu0 %v973
          %996 = vmatprep.subr.bf16.mxu0 0
          %997 = vmatpush1.bf16.msra.mxu0 %v974
          %998 = vmatprep.subr.bf16.mxu0 0
          %999 = vmatpush1.bf16.msra.mxu0 %v975
          %1000 = vmatprep.subr.bf16.mxu0 0
          %1001 = vmatpush1.bf16.msra.mxu0 0
          %1002 = vmatprep.subr.bf16.mxu0 0
          %1003 = vmatpush1.bf16.msra.mxu0 0
          %1004 = vmatprep.subr.bf16.mxu0 0
          %1005 = vmatpush1.bf16.msra.mxu0 0
          %1006 = vmatprep.subr.bf16.mxu0 0
          %1007 = vmatpush1.bf16.msra.mxu0 0
          %1008 = vmatprep.subr.bf16.mxu0 0
          %1009 = vmatpush1.bf16.msra.mxu0 0
          %1010 = vmatprep.subr.bf16.mxu0 0
          %1011 = vmatpush1.bf16.msra.mxu0 0
          %1012 = vmatprep.subr.bf16.mxu0 0
          %1013 = vmatpush1.bf16.msra.mxu0 0
          %1014 = vmatprep.subr.bf16.mxu0 0
          %1015 = vmatpush1.bf16.msra.mxu0 0
          %1016 = vmatprep.mubr.bf16.mxu0 0
          %1017 = vmatmul.mubr.bf16.gmra.mrb[0].mxu0 %v447
          %v1018 = vpop.f32.mrb[0].mxu0
          %v1019 = vadd.f32 %v934, %v1018
          %v1020 = vpop.f32.mrb[0].mxu0
          %v1021 = vpop.f32.mrb[0].mxu0
          %v1022 = vadd.f32 %v934, %v1021
          %v1023 = vpop.f32.mrb[0].mxu0
          %1024 = vdwg.mxu0
          %v1025 = vpack.c.bf16 %v1022, %v1019
          %s1026 = scalar_lea.vmem [#allocation2], 16
          %1027 = vst.msk [vmem:[%s1026] sm:$0xff] %vm561, %v1025
          %s1028 = scalar_lea.vmem %s7, 128
          %v1029 = vld [vmem:[%s1028] sm:$0xf]
          %v1030 = vld [vmem:[%s1028 + $0x4] sm:$0xf]
          %v1031 = vld [vmem:[%s1028 + $0x8] sm:$0xf]
          %v1032 = vld [vmem:[%s1028 + $0xc] sm:$0xf]
          %v1033 = vld [vmem:[%s1028 + $0x10] sm:$0xf]
          %v1034 = vld [vmem:[%s1028 + $0x14] sm:$0xf]
          %v1035 = vld [vmem:[%s1028 + $0x18] sm:$0xf]
          %v1036 = vld [vmem:[%s1028 + $0x1c] sm:$0xf]
          %v1037 = vld [vmem:[%s1028 + $0x20] sm:$0xf]
          %v1038 = vld [vmem:[%s1028 + $0x24] sm:$0xf]
          %v1039 = vld [vmem:[%s1028 + $0x28] sm:$0xf]
          %v1040 = vld [vmem:[%s1028 + $0x2c] sm:$0xf]
          %v1041 = vld [vmem:[%s1028 + $0x30] sm:$0xf]
          %v1042 = vld [vmem:[%s1028 + $0x34] sm:$0xf]
          %v1043 = vld [vmem:[%s1028 + $0x38] sm:$0xf]
          %v1044 = vld [vmem:[%s1028 + $0x3c] sm:$0xf]
          %s1045 = scalar_lea.vmem %s8, 2
          %v1046 = vld [vmem:[%s1045] sm:$0x1]
          %v1048 = vlaneseq
          %v1049 = vshrl.u32 %v1048, 7
          %v1050 = vsub.s32 0, %v1049
          %v1051 = vrot.slane %v1046, %v1050
          %v1069 = vunpack.c.l.b16 %v1029
          %v1070 = vunpack.c.l.b16 %v1030
          %v1071 = vunpack.c.l.b16 %v1031
          %v1072 = vunpack.c.l.b16 %v1032
          %v1073 = vunpack.c.l.b16 %v1033
          %v1074 = vunpack.c.l.b16 %v1034
          %v1075 = vunpack.c.l.b16 %v1035
          %v1076 = vunpack.c.l.b16 %v1036
          %v1077 = vunpack.c.l.b16 %v1037
          %v1078 = vunpack.c.l.b16 %v1038
          %v1079 = vunpack.c.l.b16 %v1039
          %v1080 = vunpack.c.l.b16 %v1040
          %v1081 = vunpack.c.l.b16 %v1041
          %v1082 = vunpack.c.l.b16 %v1042
          %v1083 = vunpack.c.l.b16 %v1043
          %v1084 = vunpack.c.l.b16 %v1044
          %v1085 = vpack.c.b16 %v1070, %v1069
          %v1086 = vpack.c.b16 %v1072, %v1071
          %v1087 = vpack.c.b16 %v1074, %v1073
          %v1088 = vpack.c.b16 %v1076, %v1075
          %v1089 = vpack.c.b16 %v1078, %v1077
          %v1090 = vpack.c.b16 %v1080, %v1079
          %v1091 = vpack.c.b16 %v1082, %v1081
          %v1092 = vpack.c.b16 %v1084, %v1083
          %1101 = vmatprep.subr.bf16.mxu0 0
          %1102 = vmatpush1.bf16.msra.mxu0 %v1085
          %1103 = vmatprep.subr.bf16.mxu0 0
          %1104 = vmatpush1.bf16.msra.mxu0 %v1086
          %1105 = vmatprep.subr.bf16.mxu0 0
          %1106 = vmatpush1.bf16.msra.mxu0 %v1087
          %1107 = vmatprep.subr.bf16.mxu0 0
          %1108 = vmatpush1.bf16.msra.mxu0 %v1088
          %1109 = vmatprep.subr.bf16.mxu0 0
          %1110 = vmatpush1.bf16.msra.mxu0 %v1089
          %1111 = vmatprep.subr.bf16.mxu0 0
          %1112 = vmatpush1.bf16.msra.mxu0 %v1090
          %1113 = vmatprep.subr.bf16.mxu0 0
          %1114 = vmatpush1.bf16.msra.mxu0 %v1091
          %1115 = vmatprep.subr.bf16.mxu0 0
          %1116 = vmatpush1.bf16.msra.mxu0 %v1092
          %1117 = vmatprep.subr.bf16.mxu0 0
          %1118 = vmatpush1.bf16.msra.mxu0 0
          %1119 = vmatprep.subr.bf16.mxu0 0
          %1120 = vmatpush1.bf16.msra.mxu0 0
          %1121 = vmatprep.subr.bf16.mxu0 0
          %1122 = vmatpush1.bf16.msra.mxu0 0
          %1123 = vmatprep.subr.bf16.mxu0 0
          %1124 = vmatpush1.bf16.msra.mxu0 0
          %1125 = vmatprep.subr.bf16.mxu0 0
          %1126 = vmatpush1.bf16.msra.mxu0 0
          %1127 = vmatprep.subr.bf16.mxu0 0
          %1128 = vmatpush1.bf16.msra.mxu0 0
          %1129 = vmatprep.subr.bf16.mxu0 0
          %1130 = vmatpush1.bf16.msra.mxu0 0
          %1131 = vmatprep.subr.bf16.mxu0 0
          %1132 = vmatpush1.bf16.msra.mxu0 0
          %1133 = vmatprep.mubr.bf16.mxu0 0
          %1134 = vmatmul.mubr.bf16.gmra.mrb[0].mxu0 %v447
          %v1135 = vpop.f32.mrb[0].mxu0
          %v1136 = vadd.f32 %v1051, %v1135
          %v1137 = vpop.f32.mrb[0].mxu0
          %v1138 = vpop.f32.mrb[0].mxu0
          %v1139 = vadd.f32 %v1051, %v1138
          %v1140 = vpop.f32.mrb[0].mxu0
          %1141 = vdwg.mxu0
          %v1142 = vpack.c.bf16 %v1139, %v1136
          %s1143 = scalar_lea.vmem [#allocation3], 16
          %1144 = vst.msk [vmem:[%s1143] sm:$0xff] %vm561, %v1142
          %s1145 = scalar_lea.vmem %s5, 192
          %v1146 = vld [vmem:[%s1145] sm:$0xf]
          %v1147 = vld [vmem:[%s1145 + $0x4] sm:$0xf]
          %v1148 = vld [vmem:[%s1145 + $0x8] sm:$0xf]
          %v1149 = vld [vmem:[%s1145 + $0xc] sm:$0xf]
          %v1150 = vld [vmem:[%s1145 + $0x10] sm:$0xf]
          %v1151 = vld [vmem:[%s1145 + $0x14] sm:$0xf]
          %v1152 = vld [vmem:[%s1145 + $0x18] sm:$0xf]
          %v1153 = vld [vmem:[%s1145 + $0x1c] sm:$0xf]
          %v1154 = vld [vmem:[%s1145 + $0x20] sm:$0xf]
          %v1155 = vld [vmem:[%s1145 + $0x24] sm:$0xf]
          %v1156 = vld [vmem:[%s1145 + $0x28] sm:$0xf]
          %v1157 = vld [vmem:[%s1145 + $0x2c] sm:$0xf]
          %v1158 = vld [vmem:[%s1145 + $0x30] sm:$0xf]
          %v1159 = vld [vmem:[%s1145 + $0x34] sm:$0xf]
          %v1160 = vld [vmem:[%s1145 + $0x38] sm:$0xf]
          %v1161 = vld [vmem:[%s1145 + $0x3c] sm:$0xf]
          %s1162 = scalar_lea.vmem %s6, 3
          %v1163 = vld [vmem:[%s1162] sm:$0x1]
          %v1165 = vlaneseq
          %v1166 = vshrl.u32 %v1165, 7
          %v1167 = vsub.s32 0, %v1166
          %v1168 = vrot.slane %v1163, %v1167
          %v1186 = vunpack.c.l.b16 %v1146
          %v1187 = vunpack.c.l.b16 %v1147
          %v1188 = vunpack.c.l.b16 %v1148
          %v1189 = vunpack.c.l.b16 %v1149
          %v1190 = vunpack.c.l.b16 %v1150
          %v1191 = vunpack.c.l.b16 %v1151
          %v1192 = vunpack.c.l.b16 %v1152
          %v1193 = vunpack.c.l.b16 %v1153
          %v1194 = vunpack.c.l.b16 %v1154
          %v1195 = vunpack.c.l.b16 %v1155
          %v1196 = vunpack.c.l.b16 %v1156
          %v1197 = vunpack.c.l.b16 %v1157
          %v1198 = vunpack.c.l.b16 %v1158
          %v1199 = vunpack.c.l.b16 %v1159
          %v1200 = vunpack.c.l.b16 %v1160
          %v1201 = vunpack.c.l.b16 %v1161
          %v1202 = vpack.c.b16 %v1187, %v1186
          %v1203 = vpack.c.b16 %v1189, %v1188
          %v1204 = vpack.c.b16 %v1191, %v1190
          %v1205 = vpack.c.b16 %v1193, %v1192
          %v1206 = vpack.c.b16 %v1195, %v1194
          %v1207 = vpack.c.b16 %v1197, %v1196
          %v1208 = vpack.c.b16 %v1199, %v1198
          %v1209 = vpack.c.b16 %v1201, %v1200
          %1218 = vmatprep.subr.bf16.mxu0 0
          %1219 = vmatpush1.bf16.msra.mxu0 %v1202
          %1220 = vmatprep.subr.bf16.mxu0 0
          %1221 = vmatpush1.bf16.msra.mxu0 %v1203
          %1222 = vmatprep.subr.bf16.mxu0 0
          %1223 = vmatpush1.bf16.msra.mxu0 %v1204
          %1224 = vmatprep.subr.bf16.mxu0 0
          %1225 = vmatpush1.bf16.msra.mxu0 %v1205
          %1226 = vmatprep.subr.bf16.mxu0 0
          %1227 = vmatpush1.bf16.msra.mxu0 %v1206
          %1228 = vmatprep.subr.bf16.mxu0 0
          %1229 = vmatpush1.bf16.msra.mxu0 %v1207
          %1230 = vmatprep.subr.bf16.mxu0 0
          %1231 = vmatpush1.bf16.msra.mxu0 %v1208
          %1232 = vmatprep.subr.bf16.mxu0 0
          %1233 = vmatpush1.bf16.msra.mxu0 %v1209
          %1234 = vmatprep.subr.bf16.mxu0 0
          %1235 = vmatpush1.bf16.msra.mxu0 0
          %1236 = vmatprep.subr.bf16.mxu0 0
          %1237 = vmatpush1.bf16.msra.mxu0 0
          %1238 = vmatprep.subr.bf16.mxu0 0
          %1239 = vmatpush1.bf16.msra.mxu0 0
          %1240 = vmatprep.subr.bf16.mxu0 0
          %1241 = vmatpush1.bf16.msra.mxu0 0
          %1242 = vmatprep.subr.bf16.mxu0 0
          %1243 = vmatpush1.bf16.msra.mxu0 0
          %1244 = vmatprep.subr.bf16.mxu0 0
          %1245 = vmatpush1.bf16.msra.mxu0 0
          %1246 = vmatprep.subr.bf16.mxu0 0
          %1247 = vmatpush1.bf16.msra.mxu0 0
          %1248 = vmatprep.subr.bf16.mxu0 0
          %1249 = vmatpush1.bf16.msra.mxu0 0
          %1250 = vmatprep.mubr.bf16.mxu0 0
          %1251 = vmatmul.mubr.bf16.gmra.mrb[0].mxu0 %v447
          %v1252 = vpop.f32.mrb[0].mxu0
          %v1253 = vadd.f32 %v1168, %v1252
          %v1254 = vpop.f32.mrb[0].mxu0
          %v1255 = vpop.f32.mrb[0].mxu0
          %v1256 = vadd.f32 %v1168, %v1255
          %v1257 = vpop.f32.mrb[0].mxu0
          %1258 = vdwg.mxu0
          %v1259 = vpack.c.bf16 %v1256, %v1253
          %s1260 = scalar_lea.vmem [#allocation2], 24
          %1261 = vst.msk [vmem:[%s1260] sm:$0xff] %vm561, %v1259
          %s1262 = scalar_lea.vmem %s7, 192
          %v1263 = vld [vmem:[%s1262] sm:$0xf]
          %v1264 = vld [vmem:[%s1262 + $0x4] sm:$0xf]
          %v1265 = vld [vmem:[%s1262 + $0x8] sm:$0xf]
          %v1266 = vld [vmem:[%s1262 + $0xc] sm:$0xf]
          %v1267 = vld [vmem:[%s1262 + $0x10] sm:$0xf]
          %v1268 = vld [vmem:[%s1262 + $0x14] sm:$0xf]
          %v1269 = vld [vmem:[%s1262 + $0x18] sm:$0xf]
          %v1270 = vld [vmem:[%s1262 + $0x1c] sm:$0xf]
          %v1271 = vld [vmem:[%s1262 + $0x20] sm:$0xf]
          %v1272 = vld [vmem:[%s1262 + $0x24] sm:$0xf]
          %v1273 = vld [vmem:[%s1262 + $0x28] sm:$0xf]
          %v1274 = vld [vmem:[%s1262 + $0x2c] sm:$0xf]
          %v1275 = vld [vmem:[%s1262 + $0x30] sm:$0xf]
          %v1276 = vld [vmem:[%s1262 + $0x34] sm:$0xf]
          %v1277 = vld [vmem:[%s1262 + $0x38] sm:$0xf]
          %v1278 = vld [vmem:[%s1262 + $0x3c] sm:$0xf]
          %s1279 = scalar_lea.vmem %s8, 3
          %v1280 = vld [vmem:[%s1279] sm:$0x1]
          %v1282 = vlaneseq
          %v1283 = vshrl.u32 %v1282, 7
          %v1284 = vsub.s32 0, %v1283
          %v1285 = vrot.slane %v1280, %v1284
          %v1303 = vunpack.c.l.b16 %v1263
          %v1304 = vunpack.c.l.b16 %v1264
          %v1305 = vunpack.c.l.b16 %v1265
          %v1306 = vunpack.c.l.b16 %v1266
          %v1307 = vunpack.c.l.b16 %v1267
          %v1308 = vunpack.c.l.b16 %v1268
          %v1309 = vunpack.c.l.b16 %v1269
          %v1310 = vunpack.c.l.b16 %v1270
          %v1311 = vunpack.c.l.b16 %v1271
          %v1312 = vunpack.c.l.b16 %v1272
          %v1313 = vunpack.c.l.b16 %v1273
          %v1314 = vunpack.c.l.b16 %v1274
          %v1315 = vunpack.c.l.b16 %v1275
          %v1316 = vunpack.c.l.b16 %v1276
          %v1317 = vunpack.c.l.b16 %v1277
          %v1318 = vunpack.c.l.b16 %v1278
          %v1319 = vpack.c.b16 %v1304, %v1303
          %v1320 = vpack.c.b16 %v1306, %v1305
          %v1321 = vpack.c.b16 %v1308, %v1307
          %v1322 = vpack.c.b16 %v1310, %v1309
          %v1323 = vpack.c.b16 %v1312, %v1311
          %v1324 = vpack.c.b16 %v1314, %v1313
          %v1325 = vpack.c.b16 %v1316, %v1315
          %v1326 = vpack.c.b16 %v1318, %v1317
          %1335 = vmatprep.subr.bf16.mxu0 0
          %1336 = vmatpush1.bf16.msra.mxu0 %v1319
          %1337 = vmatprep.subr.bf16.mxu0 0
          %1338 = vmatpush1.bf16.msra.mxu0 %v1320
          %1339 = vmatprep.subr.bf16.mxu0 0
          %1340 = vmatpush1.bf16.msra.mxu0 %v1321
          %1341 = vmatprep.subr.bf16.mxu0 0
          %1342 = vmatpush1.bf16.msra.mxu0 %v1322
          %1343 = vmatprep.subr.bf16.mxu0 0
          %1344 = vmatpush1.bf16.msra.mxu0 %v1323
          %1345 = vmatprep.subr.bf16.mxu0 0
          %1346 = vmatpush1.bf16.msra.mxu0 %v1324
          %1347 = vmatprep.subr.bf16.mxu0 0
          %1348 = vmatpush1.bf16.msra.mxu0 %v1325
          %1349 = vmatprep.subr.bf16.mxu0 0
          %1350 = vmatpush1.bf16.msra.mxu0 %v1326
          %1351 = vmatprep.subr.bf16.mxu0 0
          %1352 = vmatpush1.bf16.msra.mxu0 0
          %1353 = vmatprep.subr.bf16.mxu0 0
          %1354 = vmatpush1.bf16.msra.mxu0 0
          %1355 = vmatprep.subr.bf16.mxu0 0
          %1356 = vmatpush1.bf16.msra.mxu0 0
          %1357 = vmatprep.subr.bf16.mxu0 0
          %1358 = vmatpush1.bf16.msra.mxu0 0
          %1359 = vmatprep.subr.bf16.mxu0 0
          %1360 = vmatpush1.bf16.msra.mxu0 0
          %1361 = vmatprep.subr.bf16.mxu0 0
          %1362 = vmatpush1.bf16.msra.mxu0 0
          %1363 = vmatprep.subr.bf16.mxu0 0
          %1364 = vmatpush1.bf16.msra.mxu0 0
          %1365 = vmatprep.subr.bf16.mxu0 0
          %1366 = vmatpush1.bf16.msra.mxu0 0
          %1367 = vmatprep.mubr.bf16.mxu0 0
          %1368 = vmatmul.mubr.bf16.gmra.mrb[0].mxu0 %v447
          %v1369 = vpop.f32.mrb[0].mxu0
          %v1370 = vadd.f32 %v1285, %v1369
          %v1371 = vpop.f32.mrb[0].mxu0
          %v1372 = vpop.f32.mrb[0].mxu0
          %v1373 = vadd.f32 %v1285, %v1372
          %v1374 = vpop.f32.mrb[0].mxu0
          %1375 = vdwg.mxu0
          %v1376 = vpack.c.bf16 %v1373, %v1370
          %s1377 = scalar_lea.vmem [#allocation3], 24
          %1378 = vst.msk [vmem:[%s1377] sm:$0xff] %vm561, %v1376
        $region68: #{tpu_custom_call.1} parent=63 // pred_fallthru
          _
        %s1379 = smul.u32 %s30, 8
        %s1380 = scalar_lea.vmem %s398, %s1379
        %v1381 = vld [vmem:[%s1380] sm:$0xff]
        %1382 = vadd.xlane.f32.xlu0 %v1381
        %v1383 = vpop.xlane.xlu0 %1382
        %v1384 = vrcp.pop 128.0
        %v1385 = vmul.f32 %v1383, %v1384
        %v1386 = vsub.f32 %v1381, %v1385
        %v1387 = vmul.f32 %v1386, %v1386
        %1388 = vadd.xlane.f32.xlu0 %v1387
        %v1389 = vpop.xlane.xlu0 %1388
        %v1390 = vmul.f32 %v1389, %v1384
        %v1391 = vadd.f32 %v1390, 1e-05
        %v1392 = vrsqrt.pop %v1391
        %v1393 = vmul.f32 %v1386, %v1392
        %v1394 = vld [vmem:[%s1] sm:$0x1]
        %v1396 = vlaneseq
        %v1397 = vshrl.u32 %v1396, 7
        %v1398 = vsub.s32 0, %v1397
        %v1399 = vrot.slane %v1394, %v1398
        %v1401 = vmul.f32 %v1393, %v1399
        %v1402 = vld [vmem:[%s2] sm:$0x1]
        %v1404 = vlaneseq
        %v1405 = vshrl.u32 %v1404, 7
        %v1406 = vsub.s32 0, %v1405
        %v1407 = vrot.slane %v1402, %v1406
        %v1409 = vadd.f32 %v1401, %v1407
        %v1410 = vpack.c.bf16 %v1409, %v1409
        %v1411 = vlaneseq
        %v1412 = vshrl.u32 %v1411, 7
        %v1413 = vstv %s1379
        %v1414 = vadd.s32 %v1413, %v1412
        %v1415 = vlaneseq
        %v1416 = vand.u32 %v1415, 127
        %vm1417 = vcmp.le.s32.totalorder %v1416, %v1414
        %v1418 = vsel %vm1417, 0.0, -1e+09
        %v1419 = vld [vmem:[%s3] sm:$0xf]
        %v1420 = vld [vmem:[%s3 + $0x4] sm:$0xf]
        %v1421 = vld [vmem:[%s3 + $0x8] sm:$0xf]
        %v1422 = vld [vmem:[%s3 + $0xc] sm:$0xf]
        %v1423 = vld [vmem:[%s3 + $0x10] sm:$0xf]
        %v1424 = vld [vmem:[%s3 + $0x14] sm:$0xf]
        %v1425 = vld [vmem:[%s3 + $0x18] sm:$0xf]
        %v1426 = vld [vmem:[%s3 + $0x1c] sm:$0xf]
        %v1427 = vld [vmem:[%s3 + $0x20] sm:$0xf]
        %v1428 = vld [vmem:[%s3 + $0x24] sm:$0xf]
        %v1429 = vld [vmem:[%s3 + $0x28] sm:$0xf]
        %v1430 = vld [vmem:[%s3 + $0x2c] sm:$0xf]
        %v1431 = vld [vmem:[%s3 + $0x30] sm:$0xf]
        %v1432 = vld [vmem:[%s3 + $0x34] sm:$0xf]
        %v1433 = vld [vmem:[%s3 + $0x38] sm:$0xf]
        %v1434 = vld [vmem:[%s3 + $0x3c] sm:$0xf]
        %v1435 = vld [vmem:[%s4] sm:$0x1]
        %v1437 = vlaneseq
        %v1438 = vshrl.u32 %v1437, 7
        %v1439 = vsub.s32 0, %v1438
        %v1440 = vrot.slane %v1435, %v1439
        %v1458 = vunpack.c.l.b16 %v1419
        %v1459 = vunpack.c.l.b16 %v1420
        %v1460 = vunpack.c.l.b16 %v1421
        %v1461 = vunpack.c.l.b16 %v1422
        %v1462 = vunpack.c.l.b16 %v1423
        %v1463 = vunpack.c.l.b16 %v1424
        %v1464 = vunpack.c.l.b16 %v1425
        %v1465 = vunpack.c.l.b16 %v1426
        %v1466 = vunpack.c.l.b16 %v1427
        %v1467 = vunpack.c.l.b16 %v1428
        %v1468 = vunpack.c.l.b16 %v1429
        %v1469 = vunpack.c.l.b16 %v1430
        %v1470 = vunpack.c.l.b16 %v1431
        %v1471 = vunpack.c.l.b16 %v1432
        %v1472 = vunpack.c.l.b16 %v1433
        %v1473 = vunpack.c.l.b16 %v1434
        %v1474 = vpack.c.b16 %v1459, %v1458
        %v1475 = vpack.c.b16 %v1461, %v1460
        %v1476 = vpack.c.b16 %v1463, %v1462
        %v1477 = vpack.c.b16 %v1465, %v1464
        %v1478 = vpack.c.b16 %v1467, %v1466
        %v1479 = vpack.c.b16 %v1469, %v1468
        %v1480 = vpack.c.b16 %v1471, %v1470
        %v1481 = vpack.c.b16 %v1473, %v1472
        %1490 = vmatprep.subr.bf16.mxu0 0
        %1491 = vmatpush1.bf16.msra.mxu0 %v1474
        %1492 = vmatprep.subr.bf16.mxu0 0
        %1493 = vmatpush1.bf16.msra.mxu0 %v1475
        %1494 = vmatprep.subr.bf16.mxu0 0
        %1495 = vmatpush1.bf16.msra.mxu0 %v1476
        %1496 = vmatprep.subr.bf16.mxu0 0
        %1497 = vmatpush1.bf16.msra.mxu0 %v1477
        %1498 = vmatprep.subr.bf16.mxu0 0
        %1499 = vmatpush1.bf16.msra.mxu0 %v1478
        %1500 = vmatprep.subr.bf16.mxu0 0
        %1501 = vmatpush1.bf16.msra.mxu0 %v1479
        %1502 = vmatprep.subr.bf16.mxu0 0
        %1503 = vmatpush1.bf16.msra.mxu0 %v1480
        %1504 = vmatprep.subr.bf16.mxu0 0
        %1505 = vmatpush1.bf16.msra.mxu0 %v1481
        %1506 = vmatprep.subr.bf16.mxu0 0
        %1507 = vmatpush1.bf16.msra.mxu0 0
        %1508 = vmatprep.subr.bf16.mxu0 0
        %1509 = vmatpush1.bf16.msra.mxu0 0
        %1510 = vmatprep.subr.bf16.mxu0 0
        %1511 = vmatpush1.bf16.msra.mxu0 0
        %1512 = vmatprep.subr.bf16.mxu0 0
        %1513 = vmatpush1.bf16.msra.mxu0 0
        %1514 = vmatprep.subr.bf16.mxu0 0
        %1515 = vmatpush1.bf16.msra.mxu0 0
        %1516 = vmatprep.subr.bf16.mxu0 0
        %1517 = vmatpush1.bf16.msra.mxu0 0
        %1518 = vmatprep.subr.bf16.mxu0 0
        %1519 = vmatpush1.bf16.msra.mxu0 0
        %1520 = vmatprep.subr.bf16.mxu0 0
        %1521 = vmatpush1.bf16.msra.mxu0 0
        %1522 = vmatprep.mubr.bf16.mxu0 0
        %1523 = vmatmul.mubr.bf16.gmra.mrb[0].mxu0 %v1410
        %v1524 = vpop.f32.mrb[0].mxu0
        %v1525 = vadd.f32 %v1440, %v1524
        %v1526 = vpop.f32.mrb[0].mxu0
        %v1527 = vpop.f32.mrb[0].mxu0
        %v1528 = vpop.f32.mrb[0].mxu0
        %1529 = vdwg.mxu0
        %v1530 = vpack.c.bf16 %v1525, %v1525
        %v1531 = vld [vmem:[#allocation2] sm:$0xff]
        %vm1532 = vcmask 261120
        %v1534 = vsel %vm1532, %v1530, 0
        %v1537 = vsel %vm1532, %v1531, 0
        %1539 = vmatprep.subr.bf16.mxu0 0
        %1540 = vmatpush1.bf16.xpose.msra.mxu0 %v1537
        %1541 = vmatprep.subr.bf16.mxu0 0
        %1542 = vmatpush1.bf16.xpose.msra.mxu0 0
        %1543 = vmatprep.subr.bf16.mxu0 0
        %1544 = vmatpush1.bf16.xpose.msra.mxu0 0
        %1545 = vmatprep.subr.bf16.mxu0 0
        %1546 = vmatpush1.bf16.xpose.msra.mxu0 0
        %1547 = vmatprep.subr.bf16.mxu0 0
        %1548 = vmatpush1.bf16.xpose.msra.mxu0 0
        %1549 = vmatprep.subr.bf16.mxu0 0
        %1550 = vmatpush1.bf16.xpose.msra.mxu0 0
        %1551 = vmatprep.subr.bf16.mxu0 0
        %1552 = vmatpush1.bf16.xpose.msra.mxu0 0
        %1553 = vmatprep.subr.bf16.mxu0 0
        %1554 = vmatpush1.bf16.xpose.msra.mxu0 0
        %1555 = vmatprep.subr.bf16.mxu0 0
        %1556 = vmatpush1.bf16.xpose.msra.mxu0 0
        %1557 = vmatprep.subr.bf16.mxu0 0
        %1558 = vmatpush1.bf16.xpose.msra.mxu0 0
        %1559 = vmatprep.subr.bf16.mxu0 0
        %1560 = vmatpush1.bf16.xpose.msra.mxu0 0
        %1561 = vmatprep.subr.bf16.mxu0 0
        %1562 = vmatpush1.bf16.xpose.msra.mxu0 0
        %1563 = vmatprep.subr.bf16.mxu0 0
        %1564 = vmatpush1.bf16.xpose.msra.mxu0 0
        %1565 = vmatprep.subr.bf16.mxu0 0
        %1566 = vmatpush1.bf16.xpose.msra.mxu0 0
        %1567 = vmatprep.subr.bf16.mxu0 0
        %1568 = vmatpush1.bf16.xpose.msra.mxu0 0
        %1569 = vmatprep.subr.bf16.mxu0 0
        %1570 = vmatpush1.bf16.xpose.msra.mxu0 0
        %1571 = vmatprep.mubr.bf16.mxu0 0
        %1572 = vmatmul.mubr.bf16.gmra.mrb[0].mxu0 %v1534
        %v1573 = vpop.f32.mrb[0].mxu0
        %v1574 = vadd.f32 0.0, %v1573
        %v1575 = vpop.f32.mrb[0].mxu0
        %v1576 = vpop.f32.mrb[0].mxu0
        %v1577 = vpop.f32.mrb[0].mxu0
        %1578 = vdwg.mxu0
        %v1579 = vmul.f32 %v1574, 0.17677669
        %v1580 = vadd.f32 %v1579, %v1418
        %vm1581 = vcmask 130048
        %v1582 = vsel %vm1581, %v1580, -inf
        %1583 = vmax.xlane.f32.xlu0 %v1582
        %v1584 = vpop.xlane.xlu0 %1583
        %v1585 = vsub.f32 %v1580, %v1584
        %v1586 = vmul.f32 %v1585, 1.442695
        %v1587 = vpow.pop %v1586
        %v1588 = vsel %vm1581, %v1587, 0.0
        %1589 = vadd.xlane.f32.xlu0 %v1588
        %v1590 = vpop.xlane.xlu0 %1589
        %v1591 = vrcp.pop %v1590
        %v1592 = vmul.f32 %v1587, %v1591
        %v1593 = vpack.c.bf16 %v1592, %v1592
        %v1594 = vld [vmem:[#allocation3] sm:$0xff]
        %v1596 = vsel %vm1581, %v1593, 0
        %1598 = vmatprep.subr.bf16.mxu0 0
        %1599 = vmatpush1.bf16.msra.mxu0 %v1594
        %1600 = vmatprep.subr.bf16.mxu0 0
        %1601 = vmatpush1.bf16.msra.mxu0 0
        %1602 = vmatprep.subr.bf16.mxu0 0
        %1603 = vmatpush1.bf16.msra.mxu0 0
        %1604 = vmatprep.subr.bf16.mxu0 0
        %1605 = vmatpush1.bf16.msra.mxu0 0
        %1606 = vmatprep.subr.bf16.mxu0 0
        %1607 = vmatpush1.bf16.msra.mxu0 0
        %1608 = vmatprep.subr.bf16.mxu0 0
        %1609 = vmatpush1.bf16.msra.mxu0 0
        %1610 = vmatprep.subr.bf16.mxu0 0
        %1611 = vmatpush1.bf16.msra.mxu0 0
        %1612 = vmatprep.subr.bf16.mxu0 0
        %1613 = vmatpush1.bf16.msra.mxu0 0
        %1614 = vmatprep.subr.bf16.mxu0 0
        %1615 = vmatpush1.bf16.msra.mxu0 0
        %1616 = vmatprep.subr.bf16.mxu0 0
        %1617 = vmatpush1.bf16.msra.mxu0 0
        %1618 = vmatprep.subr.bf16.mxu0 0
        %1619 = vmatpush1.bf16.msra.mxu0 0
        %1620 = vmatprep.subr.bf16.mxu0 0
        %1621 = vmatpush1.bf16.msra.mxu0 0
        %1622 = vmatprep.subr.bf16.mxu0 0
        %1623 = vmatpush1.bf16.msra.mxu0 0
        %1624 = vmatprep.subr.bf16.mxu0 0
        %1625 = vmatpush1.bf16.msra.mxu0 0
        %1626 = vmatprep.subr.bf16.mxu0 0
        %1627 = vmatpush1.bf16.msra.mxu0 0
        %1628 = vmatprep.subr.bf16.mxu0 0
        %1629 = vmatpush1.bf16.msra.mxu0 0
        %1630 = vmatprep.mubr.bf16.mxu0 0
        %1631 = vmatmul.mubr.bf16.gmra.mrb[0].mxu0 %v1596
        %v1632 = vpop.f32.mrb[0].mxu0
        %v1633 = vadd.f32 0.0, %v1632
        %v1634 = vpop.f32.mrb[0].mxu0
        %v1635 = vpop.f32.mrb[0].mxu0
        %v1636 = vpop.f32.mrb[0].mxu0
        %1637 = vdwg.mxu0
        %v1638 = vpack.c.bf16 %v1633, %v1633
        %v1639 = vld [vmem:[%s9] sm:$0xf]
        %v1640 = vld [vmem:[%s9 + $0x4] sm:$0xf]
        %v1641 = vld [vmem:[%s9 + $0x8] sm:$0xf]
        %v1642 = vld [vmem:[%s9 + $0xc] sm:$0xf]
        %s1643 = scalar_lea.vmem %s3, 64
        %v1644 = vld [vmem:[%s1643] sm:$0xf]
        %v1645 = vld [vmem:[%s1643 + $0x4] sm:$0xf]
        %v1646 = vld [vmem:[%s1643 + $0x8] sm:$0xf]
        %v1647 = vld [vmem:[%s1643 + $0xc] sm:$0xf]
        %v1648 = vld [vmem:[%s1643 + $0x10] sm:$0xf]
        %v1649 = vld [vmem:[%s1643 + $0x14] sm:$0xf]
        %v1650 = vld [vmem:[%s1643 + $0x18] sm:$0xf]
        %v1651 = vld [vmem:[%s1643 + $0x1c] sm:$0xf]
        %v1652 = vld [vmem:[%s1643 + $0x20] sm:$0xf]
        %v1653 = vld [vmem:[%s1643 + $0x24] sm:$0xf]
        %v1654 = vld [vmem:[%s1643 + $0x28] sm:$0xf]
        %v1655 = vld [vmem:[%s1643 + $0x2c] sm:$0xf]
        %v1656 = vld [vmem:[%s1643 + $0x30] sm:$0xf]
        %v1657 = vld [vmem:[%s1643 + $0x34] sm:$0xf]
        %v1658 = vld [vmem:[%s1643 + $0x38] sm:$0xf]
        %v1659 = vld [vmem:[%s1643 + $0x3c] sm:$0xf]
        %s1660 = scalar_lea.vmem %s4, 1
        %v1661 = vld [vmem:[%s1660] sm:$0x1]
        %v1663 = vlaneseq
        %v1664 = vshrl.u32 %v1663, 7
        %v1665 = vsub.s32 0, %v1664
        %v1666 = vrot.slane %v1661, %v1665
        %v1684 = vunpack.c.l.b16 %v1644
        %v1685 = vunpack.c.l.b16 %v1645
        %v1686 = vunpack.c.l.b16 %v1646
        %v1687 = vunpack.c.l.b16 %v1647
        %v1688 = vunpack.c.l.b16 %v1648
        %v1689 = vunpack.c.l.b16 %v1649
        %v1690 = vunpack.c.l.b16 %v1650
        %v1691 = vunpack.c.l.b16 %v1651
        %v1692 = vunpack.c.l.b16 %v1652
        %v1693 = vunpack.c.l.b16 %v1653
        %v1694 = vunpack.c.l.b16 %v1654
        %v1695 = vunpack.c.l.b16 %v1655
        %v1696 = vunpack.c.l.b16 %v1656
        %v1697 = vunpack.c.l.b16 %v1657
        %v1698 = vunpack.c.l.b16 %v1658
        %v1699 = vunpack.c.l.b16 %v1659
        %v1700 = vpack.c.b16 %v1685, %v1684
        %v1701 = vpack.c.b16 %v1687, %v1686
        %v1702 = vpack.c.b16 %v1689, %v1688
        %v1703 = vpack.c.b16 %v1691, %v1690
        %v1704 = vpack.c.b16 %v1693, %v1692
        %v1705 = vpack.c.b16 %v1695, %v1694
        %v1706 = vpack.c.b16 %v1697, %v1696
        %v1707 = vpack.c.b16 %v1699, %v1698
        %1716 = vmatprep.subr.bf16.mxu0 0
        %1717 = vmatpush1.bf16.msra.mxu0 %v1700
        %1718 = vmatprep.subr.bf16.mxu0 0
        %1719 = vmatpush1.bf16.msra.mxu0 %v1701
        %1720 = vmatprep.subr.bf16.mxu0 0
        %1721 = vmatpush1.bf16.msra.mxu0 %v1702
        %1722 = vmatprep.subr.bf16.mxu0 0
        %1723 = vmatpush1.bf16.msra.mxu0 %v1703
        %1724 = vmatprep.subr.bf16.mxu0 0
        %1725 = vmatpush1.bf16.msra.mxu0 %v1704
        %1726 = vmatprep.subr.bf16.mxu0 0
        %1727 = vmatpush1.bf16.msra.mxu0 %v1705
        %1728 = vmatprep.subr.bf16.mxu0 0
        %1729 = vmatpush1.bf16.msra.mxu0 %v1706
        %1730 = vmatprep.subr.bf16.mxu0 0
        %1731 = vmatpush1.bf16.msra.mxu0 %v1707
        %1732 = vmatprep.subr.bf16.mxu0 0
        %1733 = vmatpush1.bf16.msra.mxu0 0
        %1734 = vmatprep.subr.bf16.mxu0 0
        %1735 = vmatpush1.bf16.msra.mxu0 0
        %1736 = vmatprep.subr.bf16.mxu0 0
        %1737 = vmatpush1.bf16.msra.mxu0 0
        %1738 = vmatprep.subr.bf16.mxu0 0
        %1739 = vmatpush1.bf16.msra.mxu0 0
        %1740 = vmatprep.subr.bf16.mxu0 0
        %1741 = vmatpush1.bf16.msra.mxu0 0
        %1742 = vmatprep.subr.bf16.mxu0 0
        %1743 = vmatpush1.bf16.msra.mxu0 0
        %1744 = vmatprep.subr.bf16.mxu0 0
        %1745 = vmatpush1.bf16.msra.mxu0 0
        %1746 = vmatprep.subr.bf16.mxu0 0
        %1747 = vmatpush1.bf16.msra.mxu0 0
        %1748 = vmatprep.mubr.bf16.mxu0 0
        %1749 = vmatmul.mubr.bf16.gmra.mrb[0].mxu0 %v1410
        %v1750 = vpop.f32.mrb[0].mxu0
        %v1751 = vadd.f32 %v1666, %v1750
        %v1752 = vpop.f32.mrb[0].mxu0
        %v1753 = vpop.f32.mrb[0].mxu0
        %v1754 = vpop.f32.mrb[0].mxu0
        %1755 = vdwg.mxu0
        %v1756 = vpack.c.bf16 %v1751, %v1751
        %s1757 = scalar_lea.vmem [#allocation2], 8
        %v1758 = vld [vmem:[%s1757] sm:$0xff]
        %v1760 = vsel %vm1532, %v1756, 0
        %v1763 = vsel %vm1532, %v1758, 0
        %1765 = vmatprep.subr.bf16.mxu0 0
        %1766 = vmatpush1.bf16.xpose.msra.mxu0 %v1763
        %1767 = vmatprep.subr.bf16.mxu0 0
        %1768 = vmatpush1.bf16.xpose.msra.mxu0 0
        %1769 = vmatprep.subr.bf16.mxu0 0
        %1770 = vmatpush1.bf16.xpose.msra.mxu0 0
        %1771 = vmatprep.subr.bf16.mxu0 0
        %1772 = vmatpush1.bf16.xpose.msra.mxu0 0
        %1773 = vmatprep.subr.bf16.mxu0 0
        %1774 = vmatpush1.bf16.xpose.msra.mxu0 0
        %1775 = vmatprep.subr.bf16.mxu0 0
        %1776 = vmatpush1.bf16.xpose.msra.mxu0 0
        %1777 = vmatprep.subr.bf16.mxu0 0
        %1778 = vmatpush1.bf16.xpose.msra.mxu0 0
        %1779 = vmatprep.subr.bf16.mxu0 0
        %1780 = vmatpush1.bf16.xpose.msra.mxu0 0
        %1781 = vmatprep.subr.bf16.mxu0 0
        %1782 = vmatpush1.bf16.xpose.msra.mxu0 0
        %1783 = vmatprep.subr.bf16.mxu0 0
        %1784 = vmatpush1.bf16.xpose.msra.mxu0 0
        %1785 = vmatprep.subr.bf16.mxu0 0
        %1786 = vmatpush1.bf16.xpose.msra.mxu0 0
        %1787 = vmatprep.subr.bf16.mxu0 0
        %1788 = vmatpush1.bf16.xpose.msra.mxu0 0
        %1789 = vmatprep.subr.bf16.mxu0 0
        %1790 = vmatpush1.bf16.xpose.msra.mxu0 0
        %1791 = vmatprep.subr.bf16.mxu0 0
        %1792 = vmatpush1.bf16.xpose.msra.mxu0 0
        %1793 = vmatprep.subr.bf16.mxu0 0
        %1794 = vmatpush1.bf16.xpose.msra.mxu0 0
        %1795 = vmatprep.subr.bf16.mxu0 0
        %1796 = vmatpush1.bf16.xpose.msra.mxu0 0
        %1797 = vmatprep.mubr.bf16.mxu0 0
        %1798 = vmatmul.mubr.bf16.gmra.mrb[0].mxu0 %v1760
        %v1799 = vpop.f32.mrb[0].mxu0
        %v1800 = vadd.f32 0.0, %v1799
        %v1801 = vpop.f32.mrb[0].mxu0
        %v1802 = vpop.f32.mrb[0].mxu0
        %v1803 = vpop.f32.mrb[0].mxu0
        %1804 = vdwg.mxu0
        %v1805 = vmul.f32 %v1800, 0.17677669
        %v1806 = vadd.f32 %v1805, %v1418
        %v1807 = vsel %vm1581, %v1806, -inf
        %1808 = vmax.xlane.f32.xlu0 %v1807
        %v1809 = vpop.xlane.xlu0 %1808
        %v1810 = vsub.f32 %v1806, %v1809
        %v1811 = vmul.f32 %v1810, 1.442695
        %v1812 = vpow.pop %v1811
        %v1813 = vsel %vm1581, %v1812, 0.0
        %1814 = vadd.xlane.f32.xlu0 %v1813
        %v1815 = vpop.xlane.xlu0 %1814
        %v1816 = vrcp.pop %v1815
        %v1817 = vmul.f32 %v1812, %v1816
        %v1818 = vpack.c.bf16 %v1817, %v1817
        %s1819 = scalar_lea.vmem [#allocation3], 8
        %v1820 = vld [vmem:[%s1819] sm:$0xff]
        %v1822 = vsel %vm1581, %v1818, 0
        %1824 = vmatprep.subr.bf16.mxu0 0
        %1825 = vmatpush1.bf16.msra.mxu0 %v1820
        %1826 = vmatprep.subr.bf16.mxu0 0
        %1827 = vmatpush1.bf16.msra.mxu0 0
        %1828 = vmatprep.subr.bf16.mxu0 0
        %1829 = vmatpush1.bf16.msra.mxu0 0
        %1830 = vmatprep.subr.bf16.mxu0 0
        %1831 = vmatpush1.bf16.msra.mxu0 0
        %1832 = vmatprep.subr.bf16.mxu0 0
        %1833 = vmatpush1.bf16.msra.mxu0 0
        %1834 = vmatprep.subr.bf16.mxu0 0
        %1835 = vmatpush1.bf16.msra.mxu0 0
        %1836 = vmatprep.subr.bf16.mxu0 0
        %1837 = vmatpush1.bf16.msra.mxu0 0
        %1838 = vmatprep.subr.bf16.mxu0 0
        %1839 = vmatpush1.bf16.msra.mxu0 0
        %1840 = vmatprep.subr.bf16.mxu0 0
        %1841 = vmatpush1.bf16.msra.mxu0 0
        %1842 = vmatprep.subr.bf16.mxu0 0
        %1843 = vmatpush1.bf16.msra.mxu0 0
        %1844 = vmatprep.subr.bf16.mxu0 0
        %1845 = vmatpush1.bf16.msra.mxu0 0
        %1846 = vmatprep.subr.bf16.mxu0 0
        %1847 = vmatpush1.bf16.msra.mxu0 0
        %1848 = vmatprep.subr.bf16.mxu0 0
        %1849 = vmatpush1.bf16.msra.mxu0 0
        %1850 = vmatprep.subr.bf16.mxu0 0
        %1851 = vmatpush1.bf16.msra.mxu0 0
        %1852 = vmatprep.subr.bf16.mxu0 0
        %1853 = vmatpush1.bf16.msra.mxu0 0
        %1854 = vmatprep.subr.bf16.mxu0 0
        %1855 = vmatpush1.bf16.msra.mxu0 0
        %1856 = vmatprep.mubr.bf16.mxu0 0
        %1857 = vmatmul.mubr.bf16.gmra.mrb[0].mxu0 %v1822
        %v1858 = vpop.f32.mrb[0].mxu0
        %v1859 = vadd.f32 0.0, %v1858
        %v1860 = vpop.f32.mrb[0].mxu0
        %v1861 = vpop.f32.mrb[0].mxu0
        %v1862 = vpop.f32.mrb[0].mxu0
        %1863 = vdwg.mxu0
        %v1864 = vpack.c.bf16 %v1859, %v1859
        %s1865 = scalar_lea.vmem %s9, 16
        %v1866 = vld [vmem:[%s1865] sm:$0xf]
        %v1867 = vld [vmem:[%s1865 + $0x4] sm:$0xf]
        %v1868 = vld [vmem:[%s1865 + $0x8] sm:$0xf]
        %v1869 = vld [vmem:[%s1865 + $0xc] sm:$0xf]
        %v1874 = vunpack.c.l.b16 %v1866
        %v1875 = vunpack.c.l.b16 %v1867
        %v1876 = vunpack.c.l.b16 %v1868
        %v1877 = vunpack.c.l.b16 %v1869
        %v1878 = vpack.c.b16 %v1875, %v1874
        %v1879 = vpack.c.b16 %v1877, %v1876
        %v1883 = vsel %vm1532, %v1864, 0
        %1885 = vmatprep.subr.bf16.mxu0 0
        %1886 = vmatpush1.bf16.msra.mxu0 %v1878
        %1887 = vmatprep.subr.bf16.mxu0 0
        %1888 = vmatpush1.bf16.msra.mxu0 %v1879
        %1889 = vmatprep.subr.bf16.mxu0 0
        %1890 = vmatpush1.bf16.msra.mxu0 0
        %1891 = vmatprep.subr.bf16.mxu0 0
        %1892 = vmatpush1.bf16.msra.mxu0 0
        %1893 = vmatprep.subr.bf16.mxu0 0
        %1894 = vmatpush1.bf16.msra.mxu0 0
        %1895 = vmatprep.subr.bf16.mxu0 0
        %1896 = vmatpush1.bf16.msra.mxu0 0
        %1897 = vmatprep.subr.bf16.mxu0 0
        %1898 = vmatpush1.bf16.msra.mxu0 0
        %1899 = vmatprep.subr.bf16.mxu0 0
        %1900 = vmatpush1.bf16.msra.mxu0 0
        %1901 = vmatprep.subr.bf16.mxu0 0
        %1902 = vmatpush1.bf16.msra.mxu0 0
        %1903 = vmatprep.subr.bf16.mxu0 0
        %1904 = vmatpush1.bf16.msra.mxu0 0
        %1905 = vmatprep.subr.bf16.mxu0 0
        %1906 = vmatpush1.bf16.msra.mxu0 0
        %1907 = vmatprep.subr.bf16.mxu0 0
        %1908 = vmatpush1.bf16.msra.mxu0 0
        %1909 = vmatprep.subr.bf16.mxu0 0
        %1910 = vmatpush1.bf16.msra.mxu0 0
        %1911 = vmatprep.subr.bf16.mxu0 0
        %1912 = vmatpush1.bf16.msra.mxu0 0
        %1913 = vmatprep.subr.bf16.mxu0 0
        %1914 = vmatpush1.bf16.msra.mxu0 0
        %1915 = vmatprep.subr.bf16.mxu0 0
        %1916 = vmatpush1.bf16.msra.mxu0 0
        %1917 = vmatprep.mubr.bf16.mxu0 0
        %1918 = vmatmul.mubr.bf16.gmra.mrb[0].mxu0 %v1883
        %v1919 = vpop.f32.mrb[0].mxu0
        %v1920 = vadd.f32 0.0, %v1919
        %v1921 = vpop.f32.mrb[0].mxu0
        %v1922 = vpop.f32.mrb[0].mxu0
        %v1923 = vpop.f32.mrb[0].mxu0
        %1924 = vdwg.mxu0
        %v1929 = vunpack.c.l.b16 %v1639
        %v1930 = vunpack.c.l.b16 %v1640
        %v1931 = vunpack.c.l.b16 %v1641
        %v1932 = vunpack.c.l.b16 %v1642
        %v1933 = vpack.c.b16 %v1930, %v1929
        %v1934 = vpack.c.b16 %v1932, %v1931
        %v1938 = vsel %vm1532, %v1638, 0
        %1940 = vmatprep.subr.bf16.mxu0 0
        %1941 = vmatpush1.bf16.msra.mxu0 %v1933
        %1942 = vmatprep.subr.bf16.mxu0 0
        %1943 = vmatpush1.bf16.msra.mxu0 %v1934
        %1944 = vmatprep.subr.bf16.mxu0 0
        %1945 = vmatpush1.bf16.msra.mxu0 0
        %1946 = vmatprep.subr.bf16.mxu0 0
        %1947 = vmatpush1.bf16.msra.mxu0 0
        %1948 = vmatprep.subr.bf16.mxu0 0
        %1949 = vmatpush1.bf16.msra.mxu0 0
        %1950 = vmatprep.subr.bf16.mxu0 0
        %1951 = vmatpush1.bf16.msra.mxu0 0
        %1952 = vmatprep.subr.bf16.mxu0 0
        %1953 = vmatpush1.bf16.msra.mxu0 0
        %1954 = vmatprep.subr.bf16.mxu0 0
        %1955 = vmatpush1.bf16.msra.mxu0 0
        %1956 = vmatprep.subr.bf16.mxu0 0
        %1957 = vmatpush1.bf16.msra.mxu0 0
        %1958 = vmatprep.subr.bf16.mxu0 0
        %1959 = vmatpush1.bf16.msra.mxu0 0
        %1960 = vmatprep.subr.bf16.mxu0 0
        %1961 = vmatpush1.bf16.msra.mxu0 0
        %1962 = vmatprep.subr.bf16.mxu0 0
        %1963 = vmatpush1.bf16.msra.mxu0 0
        %1964 = vmatprep.subr.bf16.mxu0 0
        %1965 = vmatpush1.bf16.msra.mxu0 0
        %1966 = vmatprep.subr.bf16.mxu0 0
        %1967 = vmatpush1.bf16.msra.mxu0 0
        %1968 = vmatprep.subr.bf16.mxu0 0
        %1969 = vmatpush1.bf16.msra.mxu0 0
        %1970 = vmatprep.subr.bf16.mxu0 0
        %1971 = vmatpush1.bf16.msra.mxu0 0
        %1972 = vmatprep.mubr.bf16.mxu0 0
        %1973 = vmatmul.mubr.bf16.gmra.mrb[0].mxu0 %v1938
        %v1974 = vpop.f32.mrb[0].mxu0
        %v1975 = vadd.f32 %v1920, %v1974
        %v1976 = vpop.f32.mrb[0].mxu0
        %v1977 = vpop.f32.mrb[0].mxu0
        %v1978 = vpop.f32.mrb[0].mxu0
        %1979 = vdwg.mxu0
        %s1980 = scalar_lea.vmem %s3, 128
        %v1981 = vld [vmem:[%s1980] sm:$0xf]
        %v1982 = vld [vmem:[%s1980 + $0x4] sm:$0xf]
        %v1983 = vld [vmem:[%s1980 + $0x8] sm:$0xf]
        %v1984 = vld [vmem:[%s1980 + $0xc] sm:$0xf]
        %v1985 = vld [vmem:[%s1980 + $0x10] sm:$0xf]
        %v1986 = vld [vmem:[%s1980 + $0x14] sm:$0xf]
        %v1987 = vld [vmem:[%s1980 + $0x18] sm:$0xf]
        %v1988 = vld [vmem:[%s1980 + $0x1c] sm:$0xf]
        %v1989 = vld [vmem:[%s1980 + $0x20] sm:$0xf]
        %v1990 = vld [vmem:[%s1980 + $0x24] sm:$0xf]
        %v1991 = vld [vmem:[%s1980 + $0x28] sm:$0xf]
        %v1992 = vld [vmem:[%s1980 + $0x2c] sm:$0xf]
        %v1993 = vld [vmem:[%s1980 + $0x30] sm:$0xf]
        %v1994 = vld [vmem:[%s1980 + $0x34] sm:$0xf]
        %v1995 = vld [vmem:[%s1980 + $0x38] sm:$0xf]
        %v1996 = vld [vmem:[%s1980 + $0x3c] sm:$0xf]
        %s1997 = scalar_lea.vmem %s4, 2
        %v1998 = vld [vmem:[%s1997] sm:$0x1]
        %v2000 = vlaneseq
        %v2001 = vshrl.u32 %v2000, 7
        %v2002 = vsub.s32 0, %v2001
        %v2003 = vrot.slane %v1998, %v2002
        %v2021 = vunpack.c.l.b16 %v1981
        %v2022 = vunpack.c.l.b16 %v1982
        %v2023 = vunpack.c.l.b16 %v1983
        %v2024 = vunpack.c.l.b16 %v1984
        %v2025 = vunpack.c.l.b16 %v1985
        %v2026 = vunpack.c.l.b16 %v1986
        %v2027 = vunpack.c.l.b16 %v1987
        %v2028 = vunpack.c.l.b16 %v1988
        %v2029 = vunpack.c.l.b16 %v1989
        %v2030 = vunpack.c.l.b16 %v1990
        %v2031 = vunpack.c.l.b16 %v1991
        %v2032 = vunpack.c.l.b16 %v1992
        %v2033 = vunpack.c.l.b16 %v1993
        %v2034 = vunpack.c.l.b16 %v1994
        %v2035 = vunpack.c.l.b16 %v1995
        %v2036 = vunpack.c.l.b16 %v1996
        %v2037 = vpack.c.b16 %v2022, %v2021
        %v2038 = vpack.c.b16 %v2024, %v2023
        %v2039 = vpack.c.b16 %v2026, %v2025
        %v2040 = vpack.c.b16 %v2028, %v2027
        %v2041 = vpack.c.b16 %v2030, %v2029
        %v2042 = vpack.c.b16 %v2032, %v2031
        %v2043 = vpack.c.b16 %v2034, %v2033
        %v2044 = vpack.c.b16 %v2036, %v2035
        %2053 = vmatprep.subr.bf16.mxu0 0
        %2054 = vmatpush1.bf16.msra.mxu0 %v2037
        %2055 = vmatprep.subr.bf16.mxu0 0
        %2056 = vmatpush1.bf16.msra.mxu0 %v2038
        %2057 = vmatprep.subr.bf16.mxu0 0
        %2058 = vmatpush1.bf16.msra.mxu0 %v2039
        %2059 = vmatprep.subr.bf16.mxu0 0
        %2060 = vmatpush1.bf16.msra.mxu0 %v2040
        %2061 = vmatprep.subr.bf16.mxu0 0
        %2062 = vmatpush1.bf16.msra.mxu0 %v2041
        %2063 = vmatprep.subr.bf16.mxu0 0
        %2064 = vmatpush1.bf16.msra.mxu0 %v2042
        %2065 = vmatprep.subr.bf16.mxu0 0
        %2066 = vmatpush1.bf16.msra.mxu0 %v2043
        %2067 = vmatprep.subr.bf16.mxu0 0
        %2068 = vmatpush1.bf16.msra.mxu0 %v2044
        %2069 = vmatprep.subr.bf16.mxu0 0
        %2070 = vmatpush1.bf16.msra.mxu0 0
        %2071 = vmatprep.subr.bf16.mxu0 0
        %2072 = vmatpush1.bf16.msra.mxu0 0
        %2073 = vmatprep.subr.bf16.mxu0 0
        %2074 = vmatpush1.bf16.msra.mxu0 0
        %2075 = vmatprep.subr.bf16.mxu0 0
        %2076 = vmatpush1.bf16.msra.mxu0 0
        %2077 = vmatprep.subr.bf16.mxu0 0
        %2078 = vmatpush1.bf16.msra.mxu0 0
        %2079 = vmatprep.subr.bf16.mxu0 0
        %2080 = vmatpush1.bf16.msra.mxu0 0
        %2081 = vmatprep.subr.bf16.mxu0 0
        %2082 = vmatpush1.bf16.msra.mxu0 0
        %2083 = vmatprep.subr.bf16.mxu0 0
        %2084 = vmatpush1.bf16.msra.mxu0 0
        %2085 = vmatprep.mubr.bf16.mxu0 0
        %2086 = vmatmul.mubr.bf16.gmra.mrb[0].mxu0 %v1410
        %v2087 = vpop.f32.mrb[0].mxu0
        %v2088 = vadd.f32 %v2003, %v2087
        %v2089 = vpop.f32.mrb[0].mxu0
        %v2090 = vpop.f32.mrb[0].mxu0
        %v2091 = vpop.f32.mrb[0].mxu0
        %2092 = vdwg.mxu0
        %v2093 = vpack.c.bf16 %v2088, %v2088
        %s2094 = scalar_lea.vmem [#allocation2], 16
        %v2095 = vld [vmem:[%s2094] sm:$0xff]
        %v2097 = vsel %vm1532, %v2093, 0
        %v2100 = vsel %vm1532, %v2095, 0
        %2102 = vmatprep.subr.bf16.mxu0 0
        %2103 = vmatpush1.bf16.xpose.msra.mxu0 %v2100
        %2104 = vmatprep.subr.bf16.mxu0 0
        %2105 = vmatpush1.bf16.xpose.msra.mxu0 0
        %2106 = vmatprep.subr.bf16.mxu0 0
        %2107 = vmatpush1.bf16.xpose.msra.mxu0 0
        %2108 = vmatprep.subr.bf16.mxu0 0
        %2109 = vmatpush1.bf16.xpose.msra.mxu0 0
        %2110 = vmatprep.subr.bf16.mxu0 0
        %2111 = vmatpush1.bf16.xpose.msra.mxu0 0
        %2112 = vmatprep.subr.bf16.mxu0 0
        %2113 = vmatpush1.bf16.xpose.msra.mxu0 0
        %2114 = vmatprep.subr.bf16.mxu0 0
        %2115 = vmatpush1.bf16.xpose.msra.mxu0 0
        %2116 = vmatprep.subr.bf16.mxu0 0
        %2117 = vmatpush1.bf16.xpose.msra.mxu0 0
        %2118 = vmatprep.subr.bf16.mxu0 0
        %2119 = vmatpush1.bf16.xpose.msra.mxu0 0
        %2120 = vmatprep.subr.bf16.mxu0 0
        %2121 = vmatpush1.bf16.xpose.msra.mxu0 0
        %2122 = vmatprep.subr.bf16.mxu0 0
        %2123 = vmatpush1.bf16.xpose.msra.mxu0 0
        %2124 = vmatprep.subr.bf16.mxu0 0
        %2125 = vmatpush1.bf16.xpose.msra.mxu0 0
        %2126 = vmatprep.subr.bf16.mxu0 0
        %2127 = vmatpush1.bf16.xpose.msra.mxu0 0
        %2128 = vmatprep.subr.bf16.mxu0 0
        %2129 = vmatpush1.bf16.xpose.msra.mxu0 0
        %2130 = vmatprep.subr.bf16.mxu0 0
        %2131 = vmatpush1.bf16.xpose.msra.mxu0 0
        %2132 = vmatprep.subr.bf16.mxu0 0
        %2133 = vmatpush1.bf16.xpose.msra.mxu0 0
        %2134 = vmatprep.mubr.bf16.mxu0 0
        %2135 = vmatmul.mubr.bf16.gmra.mrb[0].mxu0 %v2097
        %v2136 = vpop.f32.mrb[0].mxu0
        %v2137 = vadd.f32 0.0, %v2136
        %v2138 = vpop.f32.mrb[0].mxu0
        %v2139 = vpop.f32.mrb[0].mxu0
        %v2140 = vpop.f32.mrb[0].mxu0
        %2141 = vdwg.mxu0
        %v2142 = vmul.f32 %v2137, 0.17677669
        %v2143 = vadd.f32 %v2142, %v1418
        %v2144 = vsel %vm1581, %v2143, -inf
        %2145 = vmax.xlane.f32.xlu0 %v2144
        %v2146 = vpop.xlane.xlu0 %2145
        %v2147 = vsub.f32 %v2143, %v2146
        %v2148 = vmul.f32 %v2147, 1.442695
        %v2149 = vpow.pop %v2148
        %v2150 = vsel %vm1581, %v2149, 0.0
        %2151 = vadd.xlane.f32.xlu0 %v2150
        %v2152 = vpop.xlane.xlu0 %2151
        %v2153 = vrcp.pop %v2152
        %v2154 = vmul.f32 %v2149, %v2153
        %v2155 = vpack.c.bf16 %v2154, %v2154
        %s2156 = scalar_lea.vmem [#allocation3], 16
        %v2157 = vld [vmem:[%s2156] sm:$0xff]
        %v2159 = vsel %vm1581, %v2155, 0
        %2161 = vmatprep.subr.bf16.mxu0 0
        %2162 = vmatpush1.bf16.msra.mxu0 %v2157
        %2163 = vmatprep.subr.bf16.mxu0 0
        %2164 = vmatpush1.bf16.msra.mxu0 0
        %2165 = vmatprep.subr.bf16.mxu0 0
        %2166 = vmatpush1.bf16.msra.mxu0 0
        %2167 = vmatprep.subr.bf16.mxu0 0
        %2168 = vmatpush1.bf16.msra.mxu0 0
        %2169 = vmatprep.subr.bf16.mxu0 0
        %2170 = vmatpush1.bf16.msra.mxu0 0
        %2171 = vmatprep.subr.bf16.mxu0 0
        %2172 = vmatpush1.bf16.msra.mxu0 0
        %2173 = vmatprep.subr.bf16.mxu0 0
        %2174 = vmatpush1.bf16.msra.mxu0 0
        %2175 = vmatprep.subr.bf16.mxu0 0
        %2176 = vmatpush1.bf16.msra.mxu0 0
        %2177 = vmatprep.subr.bf16.mxu0 0
        %2178 = vmatpush1.bf16.msra.mxu0 0
        %2179 = vmatprep.subr.bf16.mxu0 0
        %2180 = vmatpush1.bf16.msra.mxu0 0
        %2181 = vmatprep.subr.bf16.mxu0 0
        %2182 = vmatpush1.bf16.msra.mxu0 0
        %2183 = vmatprep.subr.bf16.mxu0 0
        %2184 = vmatpush1.bf16.msra.mxu0 0
        %2185 = vmatprep.subr.bf16.mxu0 0
        %2186 = vmatpush1.bf16.msra.mxu0 0
        %2187 = vmatprep.subr.bf16.mxu0 0
        %2188 = vmatpush1.bf16.msra.mxu0 0
        %2189 = vmatprep.subr.bf16.mxu0 0
        %2190 = vmatpush1.bf16.msra.mxu0 0
        %2191 = vmatprep.subr.bf16.mxu0 0
        %2192 = vmatpush1.bf16.msra.mxu0 0
        %2193 = vmatprep.mubr.bf16.mxu0 0
        %2194 = vmatmul.mubr.bf16.gmra.mrb[0].mxu0 %v2159
        %v2195 = vpop.f32.mrb[0].mxu0
        %v2196 = vadd.f32 0.0, %v2195
        %v2197 = vpop.f32.mrb[0].mxu0
        %v2198 = vpop.f32.mrb[0].mxu0
        %v2199 = vpop.f32.mrb[0].mxu0
        %2200 = vdwg.mxu0
        %v2201 = vpack.c.bf16 %v2196, %v2196
        %s2202 = scalar_lea.vmem %s9, 32
        %v2203 = vld [vmem:[%s2202] sm:$0xf]
        %v2204 = vld [vmem:[%s2202 + $0x4] sm:$0xf]
        %v2205 = vld [vmem:[%s2202 + $0x8] sm:$0xf]
        %v2206 = vld [vmem:[%s2202 + $0xc] sm:$0xf]
        %v2211 = vunpack.c.l.b16 %v2203
        %v2212 = vunpack.c.l.b16 %v2204
        %v2213 = vunpack.c.l.b16 %v2205
        %v2214 = vunpack.c.l.b16 %v2206
        %v2215 = vpack.c.b16 %v2212, %v2211
        %v2216 = vpack.c.b16 %v2214, %v2213
        %v2220 = vsel %vm1532, %v2201, 0
        %2222 = vmatprep.subr.bf16.mxu0 0
        %2223 = vmatpush1.bf16.msra.mxu0 %v2215
        %2224 = vmatprep.subr.bf16.mxu0 0
        %2225 = vmatpush1.bf16.msra.mxu0 %v2216
        %2226 = vmatprep.subr.bf16.mxu0 0
        %2227 = vmatpush1.bf16.msra.mxu0 0
        %2228 = vmatprep.subr.bf16.mxu0 0
        %2229 = vmatpush1.bf16.msra.mxu0 0
        %2230 = vmatprep.subr.bf16.mxu0 0
        %2231 = vmatpush1.bf16.msra.mxu0 0
        %2232 = vmatprep.subr.bf16.mxu0 0
        %2233 = vmatpush1.bf16.msra.mxu0 0
        %2234 = vmatprep.subr.bf16.mxu0 0
        %2235 = vmatpush1.bf16.msra.mxu0 0
        %2236 = vmatprep.subr.bf16.mxu0 0
        %2237 = vmatpush1.bf16.msra.mxu0 0
        %2238 = vmatprep.subr.bf16.mxu0 0
        %2239 = vmatpush1.bf16.msra.mxu0 0
        %2240 = vmatprep.subr.bf16.mxu0 0
        %2241 = vmatpush1.bf16.msra.mxu0 0
        %2242 = vmatprep.subr.bf16.mxu0 0
        %2243 = vmatpush1.bf16.msra.mxu0 0
        %2244 = vmatprep.subr.bf16.mxu0 0
        %2245 = vmatpush1.bf16.msra.mxu0 0
        %2246 = vmatprep.subr.bf16.mxu0 0
        %2247 = vmatpush1.bf16.msra.mxu0 0
        %2248 = vmatprep.subr.bf16.mxu0 0
        %2249 = vmatpush1.bf16.msra.mxu0 0
        %2250 = vmatprep.subr.bf16.mxu0 0
        %2251 = vmatpush1.bf16.msra.mxu0 0
        %2252 = vmatprep.subr.bf16.mxu0 0
        %2253 = vmatpush1.bf16.msra.mxu0 0
        %2254 = vmatprep.mubr.bf16.mxu0 0
        %2255 = vmatmul.mubr.bf16.gmra.mrb[0].mxu0 %v2220
        %v2256 = vpop.f32.mrb[0].mxu0
        %v2257 = vadd.f32 0.0, %v2256
        %v2258 = vpop.f32.mrb[0].mxu0
        %v2259 = vpop.f32.mrb[0].mxu0
        %v2260 = vpop.f32.mrb[0].mxu0
        %2261 = vdwg.mxu0
        %v2262 = vadd.f32 %v1975, %v2257
        %s2263 = scalar_lea.vmem %s3, 192
        %v2264 = vld [vmem:[%s2263] sm:$0xf]
        %v2265 = vld [vmem:[%s2263 + $0x4] sm:$0xf]
        %v2266 = vld [vmem:[%s2263 + $0x8] sm:$0xf]
        %v2267 = vld [vmem:[%s2263 + $0xc] sm:$0xf]
        %v2268 = vld [vmem:[%s2263 + $0x10] sm:$0xf]
        %v2269 = vld [vmem:[%s2263 + $0x14] sm:$0xf]
        %v2270 = vld [vmem:[%s2263 + $0x18] sm:$0xf]
        %v2271 = vld [vmem:[%s2263 + $0x1c] sm:$0xf]
        %v2272 = vld [vmem:[%s2263 + $0x20] sm:$0xf]
        %v2273 = vld [vmem:[%s2263 + $0x24] sm:$0xf]
        %v2274 = vld [vmem:[%s2263 + $0x28] sm:$0xf]
        %v2275 = vld [vmem:[%s2263 + $0x2c] sm:$0xf]
        %v2276 = vld [vmem:[%s2263 + $0x30] sm:$0xf]
        %v2277 = vld [vmem:[%s2263 + $0x34] sm:$0xf]
        %v2278 = vld [vmem:[%s2263 + $0x38] sm:$0xf]
        %v2279 = vld [vmem:[%s2263 + $0x3c] sm:$0xf]
        %s2280 = scalar_lea.vmem %s4, 3
        %v2281 = vld [vmem:[%s2280] sm:$0x1]
        %v2283 = vlaneseq
        %v2284 = vshrl.u32 %v2283, 7
        %v2285 = vsub.s32 0, %v2284
        %v2286 = vrot.slane %v2281, %v2285
        %v2304 = vunpack.c.l.b16 %v2264
        %v2305 = vunpack.c.l.b16 %v2265
        %v2306 = vunpack.c.l.b16 %v2266
        %v2307 = vunpack.c.l.b16 %v2267
        %v2308 = vunpack.c.l.b16 %v2268
        %v2309 = vunpack.c.l.b16 %v2269
        %v2310 = vunpack.c.l.b16 %v2270
        %v2311 = vunpack.c.l.b16 %v2271
        %v2312 = vunpack.c.l.b16 %v2272
        %v2313 = vunpack.c.l.b16 %v2273
        %v2314 = vunpack.c.l.b16 %v2274
        %v2315 = vunpack.c.l.b16 %v2275
        %v2316 = vunpack.c.l.b16 %v2276
        %v2317 = vunpack.c.l.b16 %v2277
        %v2318 = vunpack.c.l.b16 %v2278
        %v2319 = vunpack.c.l.b16 %v2279
        %v2320 = vpack.c.b16 %v2305, %v2304
        %v2321 = vpack.c.b16 %v2307, %v2306
        %v2322 = vpack.c.b16 %v2309, %v2308
        %v2323 = vpack.c.b16 %v2311, %v2310
        %v2324 = vpack.c.b16 %v2313, %v2312
        %v2325 = vpack.c.b16 %v2315, %v2314
        %v2326 = vpack.c.b16 %v2317, %v2316
        %v2327 = vpack.c.b16 %v2319, %v2318
        %2336 = vmatprep.subr.bf16.mxu0 0
        %2337 = vmatpush1.bf16.msra.mxu0 %v2320
        %2338 = vmatprep.subr.bf16.mxu0 0
        %2339 = vmatpush1.bf16.msra.mxu0 %v2321
        %2340 = vmatprep.subr.bf16.mxu0 0
        %2341 = vmatpush1.bf16.msra.mxu0 %v2322
        %2342 = vmatprep.subr.bf16.mxu0 0
        %2343 = vmatpush1.bf16.msra.mxu0 %v2323
        %2344 = vmatprep.subr.bf16.mxu0 0
        %2345 = vmatpush1.bf16.msra.mxu0 %v2324
        %2346 = vmatprep.subr.bf16.mxu0 0
        %2347 = vmatpush1.bf16.msra.mxu0 %v2325
        %2348 = vmatprep.subr.bf16.mxu0 0
        %2349 = vmatpush1.bf16.msra.mxu0 %v2326
        %2350 = vmatprep.subr.bf16.mxu0 0
        %2351 = vmatpush1.bf16.msra.mxu0 %v2327
        %2352 = vmatprep.subr.bf16.mxu0 0
        %2353 = vmatpush1.bf16.msra.mxu0 0
        %2354 = vmatprep.subr.bf16.mxu0 0
        %2355 = vmatpush1.bf16.msra.mxu0 0
        %2356 = vmatprep.subr.bf16.mxu0 0
        %2357 = vmatpush1.bf16.msra.mxu0 0
        %2358 = vmatprep.subr.bf16.mxu0 0
        %2359 = vmatpush1.bf16.msra.mxu0 0
        %2360 = vmatprep.subr.bf16.mxu0 0
        %2361 = vmatpush1.bf16.msra.mxu0 0
        %2362 = vmatprep.subr.bf16.mxu0 0
        %2363 = vmatpush1.bf16.msra.mxu0 0
        %2364 = vmatprep.subr.bf16.mxu0 0
        %2365 = vmatpush1.bf16.msra.mxu0 0
        %2366 = vmatprep.subr.bf16.mxu0 0
        %2367 = vmatpush1.bf16.msra.mxu0 0
        %2368 = vmatprep.mubr.bf16.mxu0 0
        %2369 = vmatmul.mubr.bf16.gmra.mrb[0].mxu0 %v1410
        %v2370 = vpop.f32.mrb[0].mxu0
        %v2371 = vadd.f32 %v2286, %v2370
        %v2372 = vpop.f32.mrb[0].mxu0
        %v2373 = vpop.f32.mrb[0].mxu0
        %v2374 = vpop.f32.mrb[0].mxu0
        %2375 = vdwg.mxu0
        %v2376 = vpack.c.bf16 %v2371, %v2371
        %s2377 = scalar_lea.vmem [#allocation2], 24
        %v2378 = vld [vmem:[%s2377] sm:$0xff]
        %v2380 = vsel %vm1532, %v2376, 0
        %v2383 = vsel %vm1532, %v2378, 0
        %2385 = vmatprep.subr.bf16.mxu0 0
        %2386 = vmatpush1.bf16.xpose.msra.mxu0 %v2383
        %2387 = vmatprep.subr.bf16.mxu0 0
        %2388 = vmatpush1.bf16.xpose.msra.mxu0 0
        %2389 = vmatprep.subr.bf16.mxu0 0
        %2390 = vmatpush1.bf16.xpose.msra.mxu0 0
        %2391 = vmatprep.subr.bf16.mxu0 0
        %2392 = vmatpush1.bf16.xpose.msra.mxu0 0
        %2393 = vmatprep.subr.bf16.mxu0 0
        %2394 = vmatpush1.bf16.xpose.msra.mxu0 0
        %2395 = vmatprep.subr.bf16.mxu0 0
        %2396 = vmatpush1.bf16.xpose.msra.mxu0 0
        %2397 = vmatprep.subr.bf16.mxu0 0
        %2398 = vmatpush1.bf16.xpose.msra.mxu0 0
        %2399 = vmatprep.subr.bf16.mxu0 0
        %2400 = vmatpush1.bf16.xpose.msra.mxu0 0
        %2401 = vmatprep.subr.bf16.mxu0 0
        %2402 = vmatpush1.bf16.xpose.msra.mxu0 0
        %2403 = vmatprep.subr.bf16.mxu0 0
        %2404 = vmatpush1.bf16.xpose.msra.mxu0 0
        %2405 = vmatprep.subr.bf16.mxu0 0
        %2406 = vmatpush1.bf16.xpose.msra.mxu0 0
        %2407 = vmatprep.subr.bf16.mxu0 0
        %2408 = vmatpush1.bf16.xpose.msra.mxu0 0
        %2409 = vmatprep.subr.bf16.mxu0 0
        %2410 = vmatpush1.bf16.xpose.msra.mxu0 0
        %2411 = vmatprep.subr.bf16.mxu0 0
        %2412 = vmatpush1.bf16.xpose.msra.mxu0 0
        %2413 = vmatprep.subr.bf16.mxu0 0
        %2414 = vmatpush1.bf16.xpose.msra.mxu0 0
        %2415 = vmatprep.subr.bf16.mxu0 0
        %2416 = vmatpush1.bf16.xpose.msra.mxu0 0
        %2417 = vmatprep.mubr.bf16.mxu0 0
        %2418 = vmatmul.mubr.bf16.gmra.mrb[0].mxu0 %v2380
        %v2419 = vpop.f32.mrb[0].mxu0
        %v2420 = vadd.f32 0.0, %v2419
        %v2421 = vpop.f32.mrb[0].mxu0
        %v2422 = vpop.f32.mrb[0].mxu0
        %v2423 = vpop.f32.mrb[0].mxu0
        %2424 = vdwg.mxu0
        %v2425 = vmul.f32 %v2420, 0.17677669
        %v2426 = vadd.f32 %v2425, %v1418
        %v2427 = vsel %vm1581, %v2426, -inf
        %2428 = vmax.xlane.f32.xlu0 %v2427
        %v2429 = vpop.xlane.xlu0 %2428
        %v2430 = vsub.f32 %v2426, %v2429
        %v2431 = vmul.f32 %v2430, 1.442695
        %v2432 = vpow.pop %v2431
        %v2433 = vsel %vm1581, %v2432, 0.0
        %2434 = vadd.xlane.f32.xlu0 %v2433
        %v2435 = vpop.xlane.xlu0 %2434
        %v2436 = vrcp.pop %v2435
        %v2437 = vmul.f32 %v2432, %v2436
        %v2438 = vpack.c.bf16 %v2437, %v2437
        %s2439 = scalar_lea.vmem [#allocation3], 24
        %v2440 = vld [vmem:[%s2439] sm:$0xff]
        %v2442 = vsel %vm1581, %v2438, 0
        %2444 = vmatprep.subr.bf16.mxu0 0
        %2445 = vmatpush1.bf16.msra.mxu0 %v2440
        %2446 = vmatprep.subr.bf16.mxu0 0
        %2447 = vmatpush1.bf16.msra.mxu0 0
        %2448 = vmatprep.subr.bf16.mxu0 0
        %2449 = vmatpush1.bf16.msra.mxu0 0
        %2450 = vmatprep.subr.bf16.mxu0 0
        %2451 = vmatpush1.bf16.msra.mxu0 0
        %2452 = vmatprep.subr.bf16.mxu0 0
        %2453 = vmatpush1.bf16.msra.mxu0 0
        %2454 = vmatprep.subr.bf16.mxu0 0
        %2455 = vmatpush1.bf16.msra.mxu0 0
        %2456 = vmatprep.subr.bf16.mxu0 0
        %2457 = vmatpush1.bf16.msra.mxu0 0
        %2458 = vmatprep.subr.bf16.mxu0 0
        %2459 = vmatpush1.bf16.msra.mxu0 0
        %2460 = vmatprep.subr.bf16.mxu0 0
        %2461 = vmatpush1.bf16.msra.mxu0 0
        %2462 = vmatprep.subr.bf16.mxu0 0
        %2463 = vmatpush1.bf16.msra.mxu0 0
        %2464 = vmatprep.subr.bf16.mxu0 0
        %2465 = vmatpush1.bf16.msra.mxu0 0
        %2466 = vmatprep.subr.bf16.mxu0 0
        %2467 = vmatpush1.bf16.msra.mxu0 0
        %2468 = vmatprep.subr.bf16.mxu0 0
        %2469 = vmatpush1.bf16.msra.mxu0 0
        %2470 = vmatprep.subr.bf16.mxu0 0
        %2471 = vmatpush1.bf16.msra.mxu0 0
        %2472 = vmatprep.subr.bf16.mxu0 0
        %2473 = vmatpush1.bf16.msra.mxu0 0
        %2474 = vmatprep.subr.bf16.mxu0 0
        %2475 = vmatpush1.bf16.msra.mxu0 0
        %2476 = vmatprep.mubr.bf16.mxu0 0
        %2477 = vmatmul.mubr.bf16.gmra.mrb[0].mxu0 %v2442
        %v2478 = vpop.f32.mrb[0].mxu0
        %v2479 = vadd.f32 0.0, %v2478
        %v2480 = vpop.f32.mrb[0].mxu0
        %v2481 = vpop.f32.mrb[0].mxu0
        %v2482 = vpop.f32.mrb[0].mxu0
        %2483 = vdwg.mxu0
        %v2484 = vpack.c.bf16 %v2479, %v2479
        %s2485 = scalar_lea.vmem %s9, 48
        %v2486 = vld [vmem:[%s2485] sm:$0xf]
        %v2487 = vld [vmem:[%s2485 + $0x4] sm:$0xf]
        %v2488 = vld [vmem:[%s2485 + $0x8] sm:$0xf]
        %v2489 = vld [vmem:[%s2485 + $0xc] sm:$0xf]
        %v2494 = vunpack.c.l.b16 %v2486
        %v2495 = vunpack.c.l.b16 %v2487
        %v2496 = vunpack.c.l.b16 %v2488
        %v2497 = vunpack.c.l.b16 %v2489
        %v2498 = vpack.c.b16 %v2495, %v2494
        %v2499 = vpack.c.b16 %v2497, %v2496
        %v2503 = vsel %vm1532, %v2484, 0
        %2505 = vmatprep.subr.bf16.mxu0 0
        %2506 = vmatpush1.bf16.msra.mxu0 %v2498
        %2507 = vmatprep.subr.bf16.mxu0 0
        %2508 = vmatpush1.bf16.msra.mxu0 %v2499
        %2509 = vmatprep.subr.bf16.mxu0 0
        %2510 = vmatpush1.bf16.msra.mxu0 0
        %2511 = vmatprep.subr.bf16.mxu0 0
        %2512 = vmatpush1.bf16.msra.mxu0 0
        %2513 = vmatprep.subr.bf16.mxu0 0
        %2514 = vmatpush1.bf16.msra.mxu0 0
        %2515 = vmatprep.subr.bf16.mxu0 0
        %2516 = vmatpush1.bf16.msra.mxu0 0
        %2517 = vmatprep.subr.bf16.mxu0 0
        %2518 = vmatpush1.bf16.msra.mxu0 0
        %2519 = vmatprep.subr.bf16.mxu0 0
        %2520 = vmatpush1.bf16.msra.mxu0 0
        %2521 = vmatprep.subr.bf16.mxu0 0
        %2522 = vmatpush1.bf16.msra.mxu0 0
        %2523 = vmatprep.subr.bf16.mxu0 0
        %2524 = vmatpush1.bf16.msra.mxu0 0
        %2525 = vmatprep.subr.bf16.mxu0 0
        %2526 = vmatpush1.bf16.msra.mxu0 0
        %2527 = vmatprep.subr.bf16.mxu0 0
        %2528 = vmatpush1.bf16.msra.mxu0 0
        %2529 = vmatprep.subr.bf16.mxu0 0
        %2530 = vmatpush1.bf16.msra.mxu0 0
        %2531 = vmatprep.subr.bf16.mxu0 0
        %2532 = vmatpush1.bf16.msra.mxu0 0
        %2533 = vmatprep.subr.bf16.mxu0 0
        %2534 = vmatpush1.bf16.msra.mxu0 0
        %2535 = vmatprep.subr.bf16.mxu0 0
        %2536 = vmatpush1.bf16.msra.mxu0 0
        %2537 = vmatprep.mubr.bf16.mxu0 0
        %2538 = vmatmul.mubr.bf16.gmra.mrb[0].mxu0 %v2503
        %v2539 = vpop.f32.mrb[0].mxu0
        %v2540 = vadd.f32 0.0, %v2539
        %v2541 = vpop.f32.mrb[0].mxu0
        %v2542 = vpop.f32.mrb[0].mxu0
        %v2543 = vpop.f32.mrb[0].mxu0
        %2544 = vdwg.mxu0
        %v2545 = vadd.f32 %v2262, %v2540
        %v2546 = vld [vmem:[%s10] sm:$0x1]
        %v2548 = vlaneseq
        %v2549 = vshrl.u32 %v2548, 7
        %v2550 = vsub.s32 0, %v2549
        %v2551 = vrot.slane %v2546, %v2550
        %v2553 = vadd.f32 %v2545, %v2551
        %v2554 = vadd.f32 %v2553, %v1381
        %2555 = vst [vmem:[%s393] sm:$0xff] %v2554
        %s2556 = sand.u32 %s283, 1
        %s2557 = scalar_lea.sflag [#allocation5], %s2556
        %s2558 = sand.u32 %s283, 1
        %s2559 = smul.addr %s2558, 8
        %s2560 = scalar_lea.vmem [#allocation4], %s2559
        // Predicated region
        $region69: #{tpu_custom_call.1} parent=63 // pred_check
          %p2561 = pneg %p293
        $region70: #{tpu_custom_call.1} parent=63 // pred_check_branch
          %2563 = sbr.rel (%p2561) target = $region72
        $region71: #{tpu_custom_call.1} parent=63 // pred_region
          %s2565 = ssub.s32 128, 128
          %2566 = vsyncadd %s2557, %s2565
          %s2567 = smul.addr %s29, 2
          %s2568 = sadd.s32 %s30, %s2567
          %s2569 = smul.addr %s2568, 128
          %s2570 = scalar_lea.hbm %s11, %s2569
          %s2572 = sshll.u32 %s2560, 4
          %s2573 = int_to_ptr.vmem [resolvable:$true] %s2572
          %2575 = dma.vmem_to_hbm [thread:$0]  %s2573, 128, %s2570, %s2557
        $region72: #{tpu_custom_call.1} parent=63 // pred_fallthru
          _
      $region64: #{tpu_custom_call.1} parent=5 // pred_fallthru
        _
      %p2576 = scmp.le.s32.totalorder 2, %s20
      // Predicated region
      $region73: #{tpu_custom_call.1} parent=5 // pred_check
        %p2577 = pneg %p2576
      $region74: #{tpu_custom_call.1} parent=5 // pred_check_branch
        %2579 = sbr.rel (%p2577) target = $region76
      $region75: #{tpu_custom_call.1} parent=5 // pred_region
        %s2580 = ssub.s32 %s20, 2
        // Predicated region
        $region77: #{tpu_custom_call.1} parent=75 // pred_check
          %p2581 = pneg %p299
        $region78: #{tpu_custom_call.1} parent=75 // pred_check_branch
          %2583 = sbr.rel (%p2581) target = $region80
        $region79: #{tpu_custom_call.1} parent=75 // pred_region
          %s2584 = sand.u32 %s284, 1
          %s2585 = scalar_lea.sflag [#allocation5], %s2584
          %s2586 = sand.u32 %s284, 1
          %s2587 = smul.addr %s2586, 8
          %s2588 = scalar_lea.vmem [#allocation4], %s2587
          %2589 = dma.done %s2585, 128
        $region80: #{tpu_custom_call.1} parent=75 // pred_fallthru
          _
      $region76: #{tpu_custom_call.1} parent=5 // pred_fallthru
        _
    $region6: #{tpu_custom_call.1} parent=1 // loop_footer
      %s24 = sadd.s32 1, %s20
    $region7: #{tpu_custom_call.1} parent=1 // loop_footer_branch
      %19 = sbr.rel target = $region3
    $region8: #{tpu_custom_call.1} parent=1 // loop_exit
      _
    %2590 = vsyncpa [#allocation5], 1
    %s2591 = scalar_lea.sflag [#allocation5], 1
    %2592 = vsyncpa %s2591, 1

</llo_original>
